<compile_context>
chip_gen: v6e
topology: v6e:2x2x1
jax: 0.10.0
libtpu: 0.0.40
codegen_flags: <defaults>
</compile_context>

<pallas_src>
import functools

import jax
import jax.numpy as jnp
from jax.experimental import pallas as pl
from jax.experimental.pallas import tpu as pltpu


# ----------------------------------------------------------------------------
# Fused GcnEncoder kernel: all encoder cells in one pallas_call, grid=(B,)
# ----------------------------------------------------------------------------

def _encoder_kernel(hid_ref, txin_ref, mb_ref, wdl_ref, slab_ref, skip_ref,
                    *, N, T, D, hops, num_blocks, slab_rows):
    """All GcnEncoderCells for one batch element; everything stays in VMEM.

    Token layout: rows = (n, t) -> R = N*T rows, cols = dmodel channels.
    Per-cell slab row layout (all offsets are multiples of 8 sublanes):
        [0, (hops+1)*D)           gcn 1x1 projection weight (split per hop)
        [+0, 2D)                  DmodelLinear weight (split hidden/txin halves)
        [+0, 2D)                  gate weight with eval-BN folded in (split)
        [+0, R)                   folded DLinear+Dmodel additive bias (R, D)
        [+0, 8)                   gcn bias (row 0)
        [+0, 8)                   gate bias with eval-BN folded in (row 0)
    """
    f32 = jnp.float32
    R = N * T
    o_dmw = (hops + 1) * D
    o_gatew = o_dmw + 2 * D
    o_vb = o_gatew + 2 * D
    o_gcnb = o_vb + R
    o_gateb = o_gcnb + 8

    mb = mb_ref[...]                       # (R, R)   node mixing kron(A^T, I_T)
    txin = txin_ref[...]                   # (R, D)
    hidden = hid_ref[...]                  # (R, D)
    skip = hidden                          # skip starts at x -> final skip = sum_i hidden_i + x

    for blk in range(num_blocks):          # static unroll: weights stay VMEM-resident
        base = blk * slab_rows
        wbase = blk * R

        # ---- GCN: hop chaining + split-weight accumulation (no lane concat).
        gcn = jnp.dot(hidden, slab_ref[base:base + D, :],
                      preferred_element_type=f32)
        h = hidden
        for k in range(hops):
            h = jnp.dot(mb, h, preferred_element_type=f32)
            gcn = gcn + jnp.dot(
                h, slab_ref[base + (k + 1) * D:base + (k + 2) * D, :],
                preferred_element_type=f32)
        gcn = gcn + slab_ref[base + o_gcnb:base + o_gcnb + 1, :]

        # ---- DLinear: series_decomp + Seasonal/Trend Linear folded into one
        # time-mixing matrix wdl; DmodelLinear split into hidden/txin halves;
        # all biases folded into one (R, D) additive term.
        wdl = wdl_ref[wbase:wbase + R, :]                     # (R, R)
        dlh = jnp.dot(wdl, hidden, preferred_element_type=f32)
        dlt = jnp.dot(wdl, txin, preferred_element_type=f32)
        value = (jnp.dot(dlh, slab_ref[base + o_dmw:base + o_dmw + D, :],
                         preferred_element_type=f32)
                 + jnp.dot(dlt, slab_ref[base + o_dmw + D:base + o_dmw + 2 * D, :],
                           preferred_element_type=f32)
                 + slab_ref[base + o_vb:base + o_vb + R, :])

        # ---- gate Linear (eval-BN pre-folded) + sigmoid gating + residual.
        g = (jnp.dot(gcn, slab_ref[base + o_gatew:base + o_gatew + D, :],
                     preferred_element_type=f32)
             + jnp.dot(value, slab_ref[base + o_gatew + D:base + o_gatew + 2 * D, :],
                       preferred_element_type=f32)
             + slab_ref[base + o_gateb:base + o_gateb + 1, :])
        z = jax.nn.sigmoid(g)
        hidden = z * gcn + (1.0 - z) * value + hidden
        skip = skip + hidden

    skip_ref[...] = skip


# ----------------------------------------------------------------------------
# Wrapper-side algebraic folding of one GcnEncoderCell's parameters
# ----------------------------------------------------------------------------

def _moving_average_matrix(T):
    """T x T matrix of the kernel_size=3, replicate-padded moving average."""
    i = jnp.arange(T)[:, None]
    j = jnp.arange(T)[None, :]
    m = (jnp.abs(i - j) <= 1).astype(jnp.float32) / 3.0
    m = m.at[0, 0].add(1.0 / 3.0)
    m = m.at[T - 1, T - 1].add(1.0 / 3.0)
    return m


def _pack_cell(p, N, T, D, hops):
    """Fold one cell into (wdl (R,R), slab (slab_rows, D)) — exact algebra."""
    f32 = jnp.float32
    R = N * T

    # DLinear: Ws@(x - MA@x) + Wt@(MA@x) == (Ws + (Wt - Ws)@MA) @ x.
    dlp = p["dlinear"]
    ma = _moving_average_matrix(T)
    wtime = dlp["seasonal_w"] + (dlp["trend_w"] - dlp["seasonal_w"]) @ ma     # (T, T)
    wdl = jnp.kron(jnp.eye(N, dtype=f32), wtime).astype(f32)                  # (R, R)
    bdl = jnp.tile(dlp["seasonal_b"] + dlp["trend_b"], N)                     # (R,)

    # Fold the (R,1) time bias through DmodelLinear + add its bias -> (R, D).
    dmw = dlp["dmodel_w"].astype(f32)                                         # (2D, D)
    value_bias = bdl[:, None] * jnp.sum(dmw, axis=0)[None, :] + dlp["dmodel_b"][None, :]

    # Eval-mode BatchNorm2d folded into the gate Linear.
    bn = p["bn"]
    bns = bn["gamma"] * jax.lax.rsqrt(bn["var"] + 1e-5)
    bnh = bn["beta"] - bn["mean"] * bns
    gatew = p["gate_w"].astype(f32) * bns[None, :]                            # (2D, D)
    gateb = p["gate_b"] * bns + bnh                                           # (D,)

    pad8 = lambda v: jnp.pad(v.reshape(1, D).astype(f32), ((0, 7), (0, 0)))
    slab = jnp.concatenate([
        p["gcn"]["gcn_w"].astype(f32),       # ((hops+1)*D, D)
        dmw,                                 # (2D, D)
        gatew,                               # (2D, D)
        value_bias.astype(f32),              # (R, D)
        pad8(p["gcn"]["gcn_b"]),             # (8, D)   row 0 used
        pad8(gateb),                         # (8, D)   row 0 used
    ], axis=0)
    return wdl, slab


# ----------------------------------------------------------------------------
# GcnEncoder forward (plain-JAX glue only for embeddings / folding)
# ----------------------------------------------------------------------------

def gcn_encoder_forward(params, vx, tx, ty, space_embed, *, hops):
    """GcnEncoder.forward.

    vx: [B, N, Tin] flow values; tx / ty: [B, N, Tin/Tout] int time indices;
    space_embed: [N, dmodel].  Returns (skip + x, timeEmbed(ty)).
    """
    enc = params["enc"]
    D = enc["time_embed"].shape[-1]
    B, N, T = vx.shape
    R = N * T
    f32 = jnp.float32
    assert D % 8 == 0 and R % 8 == 0, "sublane alignment of the weight slab"

    # Adaptive adjacency shared by every cell, expressed as the token-space
    # row-mixing matrix kron(A^T, I_T): one GCN hop == one left matmul.
    A = jax.nn.softmax(
        jax.nn.relu(params["shared"]["m1"] @ params["shared"]["m2"]), axis=-1)
    mb = jnp.kron(A.T, jnp.eye(T, dtype=A.dtype)).astype(f32)                 # (R, R)

    blocks = enc["blocks"]
    packed = [_pack_cell(p, N, T, D, hops) for p in blocks]
    wdl_stack = jnp.concatenate([w for w, _ in packed], axis=0)               # (nb*R, R)
    slab_stack = jnp.concatenate([s for _, s in packed], axis=0)              # (nb*slab_rows, D)
    num_blocks = len(blocks)
    slab_rows = slab_stack.shape[0] // num_blocks

    # xFull (Linear(1 -> dmodel)) as a broadcast FMA; embeddings are gathers.
    x = vx[..., None] * enc["xfull_w"].reshape(1, 1, 1, D) + enc["xfull_b"]
    tXin = jnp.take(enc["time_embed"], tx, axis=0) + space_embed[None, :, None, :]
    tye = jnp.take(enc["time_embed"], ty, axis=0)

    kernel = functools.partial(_encoder_kernel, N=N, T=T, D=D, hops=hops,
                               num_blocks=num_blocks, slab_rows=slab_rows)
    batched = lambda b: (b, 0)
    const = lambda b: (0, 0)

    skip = pl.pallas_call(
        kernel,
        grid=(B,),
        in_specs=[
            pl.BlockSpec((R, D), batched),                    # hidden0 = xFull(x)
            pl.BlockSpec((R, D), batched),                    # tXin
            pl.BlockSpec((R, R), const),                      # mb (node mixing)
            pl.BlockSpec((num_blocks * R, R), const),         # stacked folded DLinear time matrices
            pl.BlockSpec((num_blocks * slab_rows, D), const), # stacked per-cell weight slab
        ],
        out_specs=pl.BlockSpec((R, D), batched),
        out_shape=jax.ShapeDtypeStruct((B * R, D), f32),
        compiler_params=pltpu.CompilerParams(
            dimension_semantics=("parallel",)),               # batch shards across TCs on v7x
    )(
        x.reshape(B * R, D).astype(f32),
        tXin.reshape(B * R, D).astype(f32),
        mb, wdl_stack, slab_stack,
    )
    return skip.reshape(B, N, T, D), tye


# ----------------------------------------------------------------------------
# Pure-JAX reference of the same reconstruction (correctness cross-check)
# ----------------------------------------------------------------------------

def _reference_forward(params, vx, tx, ty, space_embed, hops):
    enc = params["enc"]
    D = enc["time_embed"].shape[-1]
    B, N, T = vx.shape
    A = jax.nn.softmax(
        jax.nn.relu(params["shared"]["m1"] @ params["shared"]["m2"]), axis=-1)

    x = vx[..., None] * enc["xfull_w"].reshape(1, 1, 1, D) + enc["xfull_b"]
    tXin = jnp.take(enc["time_embed"], tx, axis=0) + space_embed[None, :, None, :]
    tye = jnp.take(enc["time_embed"], ty, axis=0)

    def cell(p, hidden):
        h = hidden
        hs = [h]
        for _ in range(hops):
            h = jnp.einsum('bntd,nm->bmtd', h, A)
            hs.append(h)
        gcn = jnp.concatenate(hs, axis=-1) @ p["gcn"]["gcn_w"] + p["gcn"]["gcn_b"]

        val = jnp.concatenate([hidden, tXin], axis=-1).reshape(B * N, T, 2 * D)
        vp = jnp.concatenate([val[:, :1], val, val[:, -1:]], axis=1)
        trend = (vp[:, :-2] + vp[:, 1:-1] + vp[:, 2:]) / 3.0
        seasonal = val - trend
        dl = p["dlinear"]
        s_out = jnp.einsum('ts,gsc->gtc', dl["seasonal_w"], seasonal) + dl["seasonal_b"][None, :, None]
        t_out = jnp.einsum('ts,gsc->gtc', dl["trend_w"], trend) + dl["trend_b"][None, :, None]
        value = (s_out + t_out).reshape(B, N, T, 2 * D) @ dl["dmodel_w"] + dl["dmodel_b"]

        g = jnp.concatenate([gcn, value], axis=-1) @ p["gate_w"] + p["gate_b"]
        bn = p["bn"]
        g = (g - bn["mean"]) * jax.lax.rsqrt(bn["var"] + 1e-5) * bn["gamma"] + bn["beta"]
        z = jax.nn.sigmoid(g)
        return z * gcn + (1.0 - z) * value + hidden

    hidden = x
    skip = jnp.zeros_like(x)
    for blk in enc["blocks"]:
        hidden = cell(blk, hidden)
        skip = skip + hidden
    return skip + x, tye


# ----------------------------------------------------------------------------
# Deterministic synthetic parameters (shapes per the module)
# ----------------------------------------------------------------------------

def init_params(key, *, num_embedding, N, dmodel, Tin, hops, encoder_blocks):
    keys = iter(jax.random.split(key, 128))

    def nrm(shape, scale=0.1):
        return jax.random.normal(next(keys), shape, jnp.float32) * scale

    def cell_params(T):
        return dict(
            dlinear=dict(
                seasonal_w=nrm((T, T)), seasonal_b=nrm((T,)),
                trend_w=nrm((T, T)), trend_b=nrm((T,)),
                dmodel_w=nrm((2 * dmodel, dmodel)), dmodel_b=nrm((dmodel,)),
            ),
            gate_w=nrm((2 * dmodel, dmodel)), gate_b=nrm((dmodel,)),
            # BatchNorm2d(dmodel) in eval mode with default running stats.
            bn=dict(gamma=jnp.ones((dmodel,), jnp.float32),
                    beta=jnp.zeros((dmodel,), jnp.float32),
                    mean=jnp.zeros((dmodel,), jnp.float32),
                    var=jnp.ones((dmodel,), jnp.float32)),
            gcn=dict(gcn_w=nrm(((hops + 1) * dmodel, dmodel)),
                     gcn_b=nrm((dmodel,))),
        )

    shared = dict(m1=nrm((N, 10)), m2=nrm((10, N)))   # trainMatrix1 / trainMatrix2
    enc = dict(
        xfull_w=nrm((1, dmodel)), xfull_b=nrm((dmodel,)),
        time_embed=nrm((num_embedding, dmodel)),
        blocks=[cell_params(Tin) for _ in range(encoder_blocks)],
    )
    return dict(shared=shared, enc=enc)


# ----------------------------------------------------------------------------
# Driver
# ----------------------------------------------------------------------------

if __name__ == "__main__":
    B, N, Tin, Tout, dmodel = 2, 8, 8, 4, 32
    hops, encoder_blocks, num_embedding = 2, 2, 24

    key = jax.random.PRNGKey(0)
    kp, kv, kt1, kt2, ks = jax.random.split(key, 5)

    params = init_params(kp, num_embedding=num_embedding, N=N, dmodel=dmodel,
                         Tin=Tin, hops=hops, encoder_blocks=encoder_blocks)

    vx = jax.random.normal(kv, (B, N, Tin), jnp.float32)                 # flow values
    tx = jax.random.randint(kt1, (B, N, Tin), 0, num_embedding, jnp.int32)
    ty = jax.random.randint(kt2, (B, N, Tout), 0, num_embedding, jnp.int32)
    spatial_embed = jax.random.normal(ks, (N, dmodel), jnp.float32)

    fwd = jax.jit(functools.partial(gcn_encoder_forward, hops=hops))
    enc_out, ty_embed = fwd(params, vx, tx, ty, spatial_embed)
    enc_out = jax.block_until_ready(enc_out)
    ty_embed = jax.block_until_ready(ty_embed)

    assert enc_out.shape == (B, N, Tin, dmodel), enc_out.shape
    assert ty_embed.shape == (B, N, Tout, dmodel), ty_embed.shape
    assert enc_out.dtype == jnp.float32
    assert bool(jnp.all(jnp.isfinite(enc_out)))
    assert bool(jnp.all(jnp.isfinite(ty_embed)))

    # Cross-check the fused kernel against the plain-JAX reference.  The
    # tolerance covers TPU default-precision f32 matmul passes (bf16 MXU
    # passes) differing in summation order from the algebraically folded path.
    ref_out, ref_ty = _reference_forward(params, vx, tx, ty, spatial_embed, hops)
    max_err = float(jnp.max(jnp.abs(enc_out - ref_out)))
    assert bool(jnp.allclose(enc_out, ref_out, rtol=2e-2, atol=2e-2)), max_err
    assert bool(jnp.allclose(ty_embed, ref_ty, rtol=1e-5, atol=1e-5))

    print("KERNEL_OK")
</pallas_src>

<mosaic_0001>
module attributes {stable_mosaic.version = 11 : i64} {
  func.func @_encoder_kernel(%arg0: i32, %arg1: memref<64x32xf32, #tpu.memory_space<vmem>>, %arg2: memref<64x32xf32, #tpu.memory_space<vmem>>, %arg3: memref<64x64xf32, #tpu.memory_space<vmem>>, %arg4: memref<128x64xf32, #tpu.memory_space<vmem>>, %arg5: memref<608x32xf32, #tpu.memory_space<vmem>>, %arg6: memref<64x32xf32, #tpu.memory_space<vmem>>) attributes {dimension_semantics = [#tpu.dimension_semantics<parallel>], iteration_bounds = array<i64: 2>, scalar_prefetch = 0 : i64, scratch_operands = 0 : i64, tpu.core_type = #tpu.core_type<tc>, window_params = [{transform_indices = @transform_0, window_bounds = array<i64: 64, 32>}, {transform_indices = @transform_1, window_bounds = array<i64: 64, 32>}, {pipeline_mode = #tpu.pipeline_mode<synchronous>, transform_indices = @transform_2, window_bounds = array<i64: 64, 64>}, {pipeline_mode = #tpu.pipeline_mode<synchronous>, transform_indices = @transform_3, window_bounds = array<i64: 128, 64>}, {pipeline_mode = #tpu.pipeline_mode<synchronous>, transform_indices = @transform_4, window_bounds = array<i64: 608, 32>}, {transform_indices = @transform_5, window_bounds = array<i64: 64, 32>}]} {
    %c0 = arith.constant 0 : index
    %c0_0 = arith.constant 0 : index
    %0 = vector.load %arg3[%c0, %c0_0] : memref<64x64xf32, #tpu.memory_space<vmem>>, vector<64x64xf32>
    %c0_1 = arith.constant 0 : index
    %c0_2 = arith.constant 0 : index
    %1 = vector.load %arg2[%c0_1, %c0_2] : memref<64x32xf32, #tpu.memory_space<vmem>>, vector<64x32xf32>
    %c0_3 = arith.constant 0 : index
    %c0_4 = arith.constant 0 : index
    %2 = vector.load %arg1[%c0_3, %c0_4] : memref<64x32xf32, #tpu.memory_space<vmem>>, vector<64x32xf32>
    %c0_5 = arith.constant 0 : index
    %c0_6 = arith.constant 0 : index
    %3 = vector.load %arg5[%c0_5, %c0_6] : memref<608x32xf32, #tpu.memory_space<vmem>>, vector<32x32xf32>
    %cst = arith.constant dense<0.000000e+00> : vector<64x32xf32>
    %4 = tpu.matmul %2, %3, %cst {dimension_numbers = #tpu.dot_dimension_numbers<[1], [0], [0], [1], [0, 0, 1, 1], [], []>} : vector<64x32xf32>, vector<32x32xf32>, vector<64x32xf32> -> vector<64x32xf32>
    %cst_7 = arith.constant dense<0.000000e+00> : vector<64x32xf32>
    %5 = tpu.matmul %0, %2, %cst_7 {dimension_numbers = #tpu.dot_dimension_numbers<[1], [0], [0], [1], [0, 0, 1, 1], [], []>} : vector<64x64xf32>, vector<64x32xf32>, vector<64x32xf32> -> vector<64x32xf32>
    %c32 = arith.constant 32 : index
    %c0_8 = arith.constant 0 : index
    %6 = vector.load %arg5[%c32, %c0_8] : memref<608x32xf32, #tpu.memory_space<vmem>>, vector<32x32xf32>
    %cst_9 = arith.constant dense<0.000000e+00> : vector<64x32xf32>
    %7 = tpu.matmul %5, %6, %cst_9 {dimension_numbers = #tpu.dot_dimension_numbers<[1], [0], [0], [1], [0, 0, 1, 1], [], []>} : vector<64x32xf32>, vector<32x32xf32>, vector<64x32xf32> -> vector<64x32xf32>
    %8 = arith.addf %4, %7 : vector<64x32xf32>
    %cst_10 = arith.constant dense<0.000000e+00> : vector<64x32xf32>
    %9 = tpu.matmul %0, %5, %cst_10 {dimension_numbers = #tpu.dot_dimension_numbers<[1], [0], [0], [1], [0, 0, 1, 1], [], []>} : vector<64x64xf32>, vector<64x32xf32>, vector<64x32xf32> -> vector<64x32xf32>
    %c64 = arith.constant 64 : index
    %c0_11 = arith.constant 0 : index
    %10 = vector.load %arg5[%c64, %c0_11] : memref<608x32xf32, #tpu.memory_space<vmem>>, vector<32x32xf32>
    %cst_12 = arith.constant dense<0.000000e+00> : vector<64x32xf32>
    %11 = tpu.matmul %9, %10, %cst_12 {dimension_numbers = #tpu.dot_dimension_numbers<[1], [0], [0], [1], [0, 0, 1, 1], [], []>} : vector<64x32xf32>, vector<32x32xf32>, vector<64x32xf32> -> vector<64x32xf32>
    %12 = arith.addf %8, %11 : vector<64x32xf32>
    %c288 = arith.constant 288 : index
    %c0_13 = arith.constant 0 : index
    %13 = vector.load %arg5[%c288, %c0_13] : memref<608x32xf32, #tpu.memory_space<vmem>>, vector<1x32xf32>
    %14 = vector.broadcast %13 : vector<1x32xf32> to vector<64x32xf32>
    %15 = arith.addf %12, %14 : vector<64x32xf32>
    %c0_14 = arith.constant 0 : index
    %c0_15 = arith.constant 0 : index
    %16 = vector.load %arg4[%c0_14, %c0_15] : memref<128x64xf32, #tpu.memory_space<vmem>>, vector<64x64xf32>
    %cst_16 = arith.constant dense<0.000000e+00> : vector<64x32xf32>
    %17 = tpu.matmul %16, %2, %cst_16 {dimension_numbers = #tpu.dot_dimension_numbers<[1], [0], [0], [1], [0, 0, 1, 1], [], []>} : vector<64x64xf32>, vector<64x32xf32>, vector<64x32xf32> -> vector<64x32xf32>
    %cst_17 = arith.constant dense<0.000000e+00> : vector<64x32xf32>
    %18 = tpu.matmul %16, %1, %cst_17 {dimension_numbers = #tpu.dot_dimension_numbers<[1], [0], [0], [1], [0, 0, 1, 1], [], []>} : vector<64x64xf32>, vector<64x32xf32>, vector<64x32xf32> -> vector<64x32xf32>
    %c96 = arith.constant 96 : index
    %c0_18 = arith.constant 0 : index
    %19 = vector.load %arg5[%c96, %c0_18] : memref<608x32xf32, #tpu.memory_space<vmem>>, vector<32x32xf32>
    %cst_19 = arith.constant dense<0.000000e+00> : vector<64x32xf32>
    %20 = tpu.matmul %17, %19, %cst_19 {dimension_numbers = #tpu.dot_dimension_numbers<[1], [0], [0], [1], [0, 0, 1, 1], [], []>} : vector<64x32xf32>, vector<32x32xf32>, vector<64x32xf32> -> vector<64x32xf32>
    %c128 = arith.constant 128 : index
    %c0_20 = arith.constant 0 : index
    %21 = vector.load %arg5[%c128, %c0_20] : memref<608x32xf32, #tpu.memory_space<vmem>>, vector<32x32xf32>
    %cst_21 = arith.constant dense<0.000000e+00> : vector<64x32xf32>
    %22 = tpu.matmul %18, %21, %cst_21 {dimension_numbers = #tpu.dot_dimension_numbers<[1], [0], [0], [1], [0, 0, 1, 1], [], []>} : vector<64x32xf32>, vector<32x32xf32>, vector<64x32xf32> -> vector<64x32xf32>
    %23 = arith.addf %20, %22 : vector<64x32xf32>
    %c224 = arith.constant 224 : index
    %c0_22 = arith.constant 0 : index
    %24 = vector.load %arg5[%c224, %c0_22] : memref<608x32xf32, #tpu.memory_space<vmem>>, vector<64x32xf32>
    %25 = arith.addf %23, %24 : vector<64x32xf32>
    %c160 = arith.constant 160 : index
    %c0_23 = arith.constant 0 : index
    %26 = vector.load %arg5[%c160, %c0_23] : memref<608x32xf32, #tpu.memory_space<vmem>>, vector<32x32xf32>
    %cst_24 = arith.constant dense<0.000000e+00> : vector<64x32xf32>
    %27 = tpu.matmul %15, %26, %cst_24 {dimension_numbers = #tpu.dot_dimension_numbers<[1], [0], [0], [1], [0, 0, 1, 1], [], []>} : vector<64x32xf32>, vector<32x32xf32>, vector<64x32xf32> -> vector<64x32xf32>
    %c192 = arith.constant 192 : index
    %c0_25 = arith.constant 0 : index
    %28 = vector.load %arg5[%c192, %c0_25] : memref<608x32xf32, #tpu.memory_space<vmem>>, vector<32x32xf32>
    %cst_26 = arith.constant dense<0.000000e+00> : vector<64x32xf32>
    %29 = tpu.matmul %25, %28, %cst_26 {dimension_numbers = #tpu.dot_dimension_numbers<[1], [0], [0], [1], [0, 0, 1, 1], [], []>} : vector<64x32xf32>, vector<32x32xf32>, vector<64x32xf32> -> vector<64x32xf32>
    %30 = arith.addf %27, %29 : vector<64x32xf32>
    %c296 = arith.constant 296 : index
    %c0_27 = arith.constant 0 : index
    %31 = vector.load %arg5[%c296, %c0_27] : memref<608x32xf32, #tpu.memory_space<vmem>>, vector<1x32xf32>
    %32 = vector.broadcast %31 : vector<1x32xf32> to vector<64x32xf32>
    %33 = arith.addf %30, %32 : vector<64x32xf32>
    %34 = arith.negf %33 : vector<64x32xf32>
    %35 = math.exp %34 : vector<64x32xf32>
    %cst_28 = arith.constant 1.000000e+00 : f32
    %36 = vector.broadcast %cst_28 : f32 to vector<64x32xf32>
    %37 = arith.addf %36, %35 : vector<64x32xf32>
    %38 = arith.divf %36, %37 : vector<64x32xf32>
    %39 = arith.mulf %38, %15 : vector<64x32xf32>
    %cst_29 = arith.constant 1.000000e+00 : f32
    %40 = vector.broadcast %cst_29 : f32 to vector<64x32xf32>
    %41 = arith.subf %40, %38 : vector<64x32xf32>
    %42 = arith.mulf %41, %25 : vector<64x32xf32>
    %43 = arith.addf %39, %42 : vector<64x32xf32>
    %44 = arith.addf %43, %2 : vector<64x32xf32>
    %45 = arith.addf %2, %44 : vector<64x32xf32>
    %c304 = arith.constant 304 : index
    %c0_30 = arith.constant 0 : index
    %46 = vector.load %arg5[%c304, %c0_30] : memref<608x32xf32, #tpu.memory_space<vmem>>, vector<32x32xf32>
    %cst_31 = arith.constant dense<0.000000e+00> : vector<64x32xf32>
    %47 = tpu.matmul %44, %46, %cst_31 {dimension_numbers = #tpu.dot_dimension_numbers<[1], [0], [0], [1], [0, 0, 1, 1], [], []>} : vector<64x32xf32>, vector<32x32xf32>, vector<64x32xf32> -> vector<64x32xf32>
    %cst_32 = arith.constant dense<0.000000e+00> : vector<64x32xf32>
    %48 = tpu.matmul %0, %44, %cst_32 {dimension_numbers = #tpu.dot_dimension_numbers<[1], [0], [0], [1], [0, 0, 1, 1], [], []>} : vector<64x64xf32>, vector<64x32xf32>, vector<64x32xf32> -> vector<64x32xf32>
    %c336 = arith.constant 336 : index
    %c0_33 = arith.constant 0 : index
    %49 = vector.load %arg5[%c336, %c0_33] : memref<608x32xf32, #tpu.memory_space<vmem>>, vector<32x32xf32>
    %cst_34 = arith.constant dense<0.000000e+00> : vector<64x32xf32>
    %50 = tpu.matmul %48, %49, %cst_34 {dimension_numbers = #tpu.dot_dimension_numbers<[1], [0], [0], [1], [0, 0, 1, 1], [], []>} : vector<64x32xf32>, vector<32x32xf32>, vector<64x32xf32> -> vector<64x32xf32>
    %51 = arith.addf %47, %50 : vector<64x32xf32>
    %cst_35 = arith.constant dense<0.000000e+00> : vector<64x32xf32>
    %52 = tpu.matmul %0, %48, %cst_35 {dimension_numbers = #tpu.dot_dimension_numbers<[1], [0], [0], [1], [0, 0, 1, 1], [], []>} : vector<64x64xf32>, vector<64x32xf32>, vector<64x32xf32> -> vector<64x32xf32>
    %c368 = arith.constant 368 : index
    %c0_36 = arith.constant 0 : index
    %53 = vector.load %arg5[%c368, %c0_36] : memref<608x32xf32, #tpu.memory_space<vmem>>, vector<32x32xf32>
    %cst_37 = arith.constant dense<0.000000e+00> : vector<64x32xf32>
    %54 = tpu.matmul %52, %53, %cst_37 {dimension_numbers = #tpu.dot_dimension_numbers<[1], [0], [0], [1], [0, 0, 1, 1], [], []>} : vector<64x32xf32>, vector<32x32xf32>, vector<64x32xf32> -> vector<64x32xf32>
    %55 = arith.addf %51, %54 : vector<64x32xf32>
    %c592 = arith.constant 592 : index
    %c0_38 = arith.constant 0 : index
    %56 = vector.load %arg5[%c592, %c0_38] : memref<608x32xf32, #tpu.memory_space<vmem>>, vector<1x32xf32>
    %57 = vector.broadcast %56 : vector<1x32xf32> to vector<64x32xf32>
    %58 = arith.addf %55, %57 : vector<64x32xf32>
    %c64_39 = arith.constant 64 : index
    %c0_40 = arith.constant 0 : index
    %59 = vector.load %arg4[%c64_39, %c0_40] : memref<128x64xf32, #tpu.memory_space<vmem>>, vector<64x64xf32>
    %cst_41 = arith.constant dense<0.000000e+00> : vector<64x32xf32>
    %60 = tpu.matmul %59, %44, %cst_41 {dimension_numbers = #tpu.dot_dimension_numbers<[1], [0], [0], [1], [0, 0, 1, 1], [], []>} : vector<64x64xf32>, vector<64x32xf32>, vector<64x32xf32> -> vector<64x32xf32>
    %cst_42 = arith.constant dense<0.000000e+00> : vector<64x32xf32>
    %61 = tpu.matmul %59, %1, %cst_42 {dimension_numbers = #tpu.dot_dimension_numbers<[1], [0], [0], [1], [0, 0, 1, 1], [], []>} : vector<64x64xf32>, vector<64x32xf32>, vector<64x32xf32> -> vector<64x32xf32>
    %c400 = arith.constant 400 : index
    %c0_43 = arith.constant 0 : index
    %62 = vector.load %arg5[%c400, %c0_43] : memref<608x32xf32, #tpu.memory_space<vmem>>, vector<32x32xf32>
    %cst_44 = arith.constant dense<0.000000e+00> : vector<64x32xf32>
    %63 = tpu.matmul %60, %62, %cst_44 {dimension_numbers = #tpu.dot_dimension_numbers<[1], [0], [0], [1], [0, 0, 1, 1], [], []>} : vector<64x32xf32>, vector<32x32xf32>, vector<64x32xf32> -> vector<64x32xf32>
    %c432 = arith.constant 432 : index
    %c0_45 = arith.constant 0 : index
    %64 = vector.load %arg5[%c432, %c0_45] : memref<608x32xf32, #tpu.memory_space<vmem>>, vector<32x32xf32>
    %cst_46 = arith.constant dense<0.000000e+00> : vector<64x32xf32>
    %65 = tpu.matmul %61, %64, %cst_46 {dimension_numbers = #tpu.dot_dimension_numbers<[1], [0], [0], [1], [0, 0, 1, 1], [], []>} : vector<64x32xf32>, vector<32x32xf32>, vector<64x32xf32> -> vector<64x32xf32>
    %66 = arith.addf %63, %65 : vector<64x32xf32>
    %c528 = arith.constant 528 : index
    %c0_47 = arith.constant 0 : index
    %67 = vector.load %arg5[%c528, %c0_47] : memref<608x32xf32, #tpu.memory_space<vmem>>, vector<64x32xf32>
    %68 = arith.addf %66, %67 : vector<64x32xf32>
    %c464 = arith.constant 464 : index
    %c0_48 = arith.constant 0 : index
    %69 = vector.load %arg5[%c464, %c0_48] : memref<608x32xf32, #tpu.memory_space<vmem>>, vector<32x32xf32>
    %cst_49 = arith.constant dense<0.000000e+00> : vector<64x32xf32>
    %70 = tpu.matmul %58, %69, %cst_49 {dimension_numbers = #tpu.dot_dimension_numbers<[1], [0], [0], [1], [0, 0, 1, 1], [], []>} : vector<64x32xf32>, vector<32x32xf32>, vector<64x32xf32> -> vector<64x32xf32>
    %c496 = arith.constant 496 : index
    %c0_50 = arith.constant 0 : index
    %71 = vector.load %arg5[%c496, %c0_50] : memref<608x32xf32, #tpu.memory_space<vmem>>, vector<32x32xf32>
    %cst_51 = arith.constant dense<0.000000e+00> : vector<64x32xf32>
    %72 = tpu.matmul %68, %71, %cst_51 {dimension_numbers = #tpu.dot_dimension_numbers<[1], [0], [0], [1], [0, 0, 1, 1], [], []>} : vector<64x32xf32>, vector<32x32xf32>, vector<64x32xf32> -> vector<64x32xf32>
    %73 = arith.addf %70, %72 : vector<64x32xf32>
    %c600 = arith.constant 600 : index
    %c0_52 = arith.constant 0 : index
    %74 = vector.load %arg5[%c600, %c0_52] : memref<608x32xf32, #tpu.memory_space<vmem>>, vector<1x32xf32>
    %75 = vector.broadcast %74 : vector<1x32xf32> to vector<64x32xf32>
    %76 = arith.addf %73, %75 : vector<64x32xf32>
    %77 = arith.negf %76 : vector<64x32xf32>
    %78 = math.exp %77 : vector<64x32xf32>
    %cst_53 = arith.constant 1.000000e+00 : f32
    %79 = vector.broadcast %cst_53 : f32 to vector<64x32xf32>
    %80 = arith.addf %79, %78 : vector<64x32xf32>
    %81 = arith.divf %79, %80 : vector<64x32xf32>
    %82 = arith.mulf %81, %58 : vector<64x32xf32>
    %cst_54 = arith.constant 1.000000e+00 : f32
    %83 = vector.broadcast %cst_54 : f32 to vector<64x32xf32>
    %84 = arith.subf %83, %81 : vector<64x32xf32>
    %85 = arith.mulf %84, %68 : vector<64x32xf32>
    %86 = arith.addf %82, %85 : vector<64x32xf32>
    %87 = arith.addf %86, %44 : vector<64x32xf32>
    %88 = arith.addf %45, %87 : vector<64x32xf32>
    %c0_55 = arith.constant 0 : index
    %c0_56 = arith.constant 0 : index
    %89 = vector.load %arg6[%c0_55, %c0_56] : memref<64x32xf32, #tpu.memory_space<vmem>>, vector<64x32xf32>
    tpu.vector_store %arg6[%c0_55, %c0_56], %88 {strides = array<i32>} : memref<64x32xf32, #tpu.memory_space<vmem>>, vector<64x32xf32>,
    return
  }
  func.func @transform_0(%arg0: i32) -> (i32, i32) {
    %c0_i32 = arith.constant 0 : i32
    %c0_i32_0 = arith.constant 0 : i32
    return %arg0, %c0_i32 : i32, i32
  }
  func.func @transform_1(%arg0: i32) -> (i32, i32) {
    %c0_i32 = arith.constant 0 : i32
    %c0_i32_0 = arith.constant 0 : i32
    return %arg0, %c0_i32 : i32, i32
  }
  func.func @transform_2(%arg0: i32) -> (i32, i32) {
    %c0_i32 = arith.constant 0 : i32
    %c0_i32_0 = arith.constant 0 : i32
    %c0_i32_1 = arith.constant 0 : i32
    return %c0_i32, %c0_i32_0 : i32, i32
  }
  func.func @transform_3(%arg0: i32) -> (i32, i32) {
    %c0_i32 = arith.constant 0 : i32
    %c0_i32_0 = arith.constant 0 : i32
    %c0_i32_1 = arith.constant 0 : i32
    return %c0_i32, %c0_i32_0 : i32, i32
  }
  func.func @transform_4(%arg0: i32) -> (i32, i32) {
    %c0_i32 = arith.constant 0 : i32
    %c0_i32_0 = arith.constant 0 : i32
    %c0_i32_1 = arith.constant 0 : i32
    return %c0_i32, %c0_i32_0 : i32, i32
  }
  func.func @transform_5(%arg0: i32) -> (i32, i32) {
    %c0_i32 = arith.constant 0 : i32
    %c0_i32_0 = arith.constant 0 : i32
    return %arg0, %c0_i32 : i32, i32
  }
}

</mosaic_0001>

<llo_original>
// kernel: tile.13
$region0: #{tile.13}
  #allocation0 [shape = 's32[1]{0}', space=sflag, size = 0x4, scoped, tag = 'scoped memory for tile.13']
  %s0 = inlined_call_operand.vmem [shape: f32[8], index: 0, kind: input, shape index: {}]
  %s1 = inlined_call_operand.vmem [shape: f32[8,8], index: 1, kind: output, shape index: {}]
  // Predicated region
  $region2: #{tile.13} parent=0 // pred_check
    _
  $region3: #{tile.13} parent=0 // pred_check_branch
    %3 = sbr.rel (0) target = $region5
  $region4: #{tile.13} parent=0 // pred_region
    _
  $region5: #{tile.13} parent=0 // pred_fallthru
    _
  %v4 = vld [vmem:[%s0] ss:$0 sm:$0xff]
  %5 = vst [vmem:[%s1] sm:$0xff] %v4

// kernel: mul.50
$region0: #{mul.50}
  %s0 = inlined_call_operand.vmem [shape: f32[8,8], index: 0, kind: input, shape index: {}]
  %s1 = inlined_call_operand.vmem [shape: f32[64], index: 1, kind: output, shape index: {}]
  $region1: #{mul.50} parent=0
    #allocation0 [shape = 'u8[4096]{0}', space=vmem, size = 0x1000, scoped, tag = 'scoped mem for output reshape']
    %v2 = vld [vmem:[%s0] sm:$0x1]
    %vm3 = vcmask 64512
    %4 = vst.msk [vmem:[#allocation0] sm:$0x1] %vm3, %v2
    %s5 = scalar_lea.vmem %s0, 7
    %v6 = vld [vmem:[%s5] sm:$0x1]
    %7 = vrot.lane.b32.xlu0 %v6, 56
    %v8 = vpop.permute.xlu0 %7
    %vm9 = vcmask 523712
    %10 = vst.msk [vmem:[#allocation0] sm:$0x1] %vm9, %v8
    %s11 = scalar_lea.vmem %s0, 6
    %v12 = vld [vmem:[%s11] sm:$0x1]
    %13 = vrot.lane.b32.xlu0 %v12, 48
    %v14 = vpop.permute.xlu0 %13
    %vm15 = vcmask 458112
    %16 = vst.msk [vmem:[#allocation0] sm:$0x1] %vm15, %v14
    %s17 = scalar_lea.vmem %s0, 5
    %v18 = vld [vmem:[%s17] sm:$0x1]
    %19 = vrot.lane.b32.xlu0 %v18, 40
    %v20 = vpop.permute.xlu0 %19
    %vm21 = vcmask 392512
    %22 = vst.msk [vmem:[#allocation0] sm:$0x1] %vm21, %v20
    %s23 = scalar_lea.vmem %s0, 4
    %v24 = vld [vmem:[%s23] sm:$0x1]
    %25 = vrot.lane.b32.xlu0 %v24, 32
    %v26 = vpop.permute.xlu0 %25
    %vm27 = vcmask 326912
    %28 = vst.msk [vmem:[#allocation0] sm:$0x1] %vm27, %v26
    %s29 = scalar_lea.vmem %s0, 3
    %v30 = vld [vmem:[%s29] sm:$0x1]
    %31 = vrot.lane.b32.xlu0 %v30, 24
    %v32 = vpop.permute.xlu0 %31
    %vm33 = vcmask 261312
    %34 = vst.msk [vmem:[#allocation0] sm:$0x1] %vm33, %v32
    %s35 = scalar_lea.vmem %s0, 2
    %v36 = vld [vmem:[%s35] sm:$0x1]
    %37 = vrot.lane.b32.xlu0 %v36, 16
    %v38 = vpop.permute.xlu0 %37
    %vm39 = vcmask 195712
    %40 = vst.msk [vmem:[#allocation0] sm:$0x1] %vm39, %v38
    %s41 = scalar_lea.vmem %s0, 1
    %v42 = vld [vmem:[%s41] sm:$0x1]
    %43 = vrot.lane.b32.xlu0 %v42, 8
    %v44 = vpop.permute.xlu0 %43
    %vm45 = vcmask 130112
    %46 = vst.msk [vmem:[#allocation0] sm:$0x1] %vm45, %v44
    %s48 = sshll.u32 1, 1
    %s49 = ssub.s32 %s48, 1
    %v51 = vld [vmem:[#allocation0] sm:%s49]
    %s52 = sshll.u32 1, 1
    %s53 = ssub.s32 %s52, 1
    %54 = vst [vmem:[%s1] sm:%s53] %v51

// kernel: gcn_encoder_forward.1
$region0: #{gcn_encoder_forward.1}
  #allocation0 [shape = 'u32[]', space=smem, size = 0x4, offset = 0x4, fixed_abs, tag = 'smem constant byte address 0x4 - core index']
  #allocation1 [shape = 'u32[144,128]{1,0:T(1,128)}', space=vmem, size = 0x12000, scoped, tag = 'internal scratch']
  %s0 = inlined_call_operand.vmem [shape: f32[128,32], index: 0, kind: input, shape index: {}]
  %s1 = inlined_call_operand.vmem [shape: f32[128,32], index: 1, kind: input, shape index: {}]
  %s2 = inlined_call_operand.vmem [shape: f32[64,64], index: 2, kind: input, shape index: {}]
  %s3 = inlined_call_operand.vmem [shape: f32[128,64], index: 3, kind: input, shape index: {}]
  %s4 = inlined_call_operand.vmem [shape: f32[608,32], index: 4, kind: input, shape index: {}]
  %s5 = inlined_call_operand.hbm [shape: f32[128,32], index: 5, kind: output, shape index: {}]
  %s6 = sld [smem:[#allocation0]]
  $region53: #{gcn_encoder_forward.1} parent=0
    _
  %s8 = ssub.s32 1, %s6
  %s9 = scalar_select 0, %s8, %s6
  $region1: #{gcn_encoder_forward.1} parent=0
    #allocation2 [shape = 'u8[65536]{0}', space=vmem, size = 0x10000, scoped, tag = 'output window, operand 0']
    #allocation3 [shape = 's32[2]{0}', space=sflag, size = 0x8, scoped, tag = 'scoped memory for gcn_encoder_forward.1']
    %10 = vsyncpa [#allocation3], 0
    %s11 = scalar_lea.sflag [#allocation3], 1
    %12 = vsyncpa %s11, 0
    loop: start=0, step=1, limit=4
    $region2: #{gcn_encoder_forward.1} parent=1 // loop_pre_header
      _
    $region3: #{gcn_encoder_forward.1} parent=1 // loop_header
      %s14 = sphi 0, %s18
      %p15 = scmp.ge.s32.totalorder %s14, 4
      %s24 = sphi 0, %s26
      %s27 = sphi 0, %s24
      %s28 = sphi 0, %s27
      %s44 = sphi 0, %s28
      %s50 = sphi 0, %s52
      %s53 = sphi 0, %s50
      %s54 = sphi 0, %s53
      %s70 = sphi 0, %s54
      %s74 = sphi 0, %s74
      %s76 = sphi 0, %s74
      %s77 = sphi 0, %s76
      %s91 = sphi 0, %s77
      %s95 = sphi 0, %s95
      %s97 = sphi 0, %s95
      %s98 = sphi 0, %s97
      %s112 = sphi 0, %s98
      %s116 = sphi 0, %s116
      %s118 = sphi 0, %s116
      %s119 = sphi 0, %s118
      %s133 = sphi 0, %s119
      %s139 = sphi 0, %s141
      %s142 = sphi 0, %s139
      %s143 = sphi 0, %s142
      %s159 = sphi 0, %s143
    $region4: #{gcn_encoder_forward.1} parent=1 // loop_header_branch
      %17 = sbr.rel (%p15) target = $region8
    $region5: #{gcn_encoder_forward.1} parent=1 // loop_body
      %s19 = ssub.s32 %s14, 1
      %s20 = ssub.s32 %s14, 2
      %s21 = sadd.s32 %s14, 1
      %s22 = ssub.s32 %s14, %s21
      %p23 = scmp.eq.s32.totalorder %s22, 0
      %s25 = sadd.s32 %s24, 1
      %s26 = scalar_select %p23, %s24, %s25
      %p29 = pneg %p23
      %p30 = scmp.eq.s32.totalorder %s14, 1
      %p31 = por %p29, %p30
      %p32 = scmp.ne.s32.totalorder %s24, %s27
      %p33 = scmp.eq.s32.totalorder %s14, 0
      %p34 = por %p32, %p33
      %p35 = scmp.ne.s32.totalorder %s24, %s27
      %p36 = scmp.eq.s32.totalorder %s19, 1
      %p37 = por %p35, %p36
      %p38 = scmp.ne.s32.totalorder %s27, %s28
      %p39 = scmp.eq.s32.totalorder %s19, 0
      %p40 = por %p38, %p39
      %p41 = scmp.ne.s32.totalorder %s27, %s28
      %p42 = scmp.eq.s32.totalorder %s20, 1
      %p43 = por %p41, %p42
      %p45 = scmp.ne.s32.totalorder %s28, %s44
      %p46 = scmp.eq.s32.totalorder %s20, 0
      %p47 = por %p45, %p46
      %s48 = ssub.s32 %s14, %s21
      %p49 = scmp.eq.s32.totalorder %s48, 0
      %s51 = sadd.s32 %s50, 1
      %s52 = scalar_select %p49, %s50, %s51
      %p55 = pneg %p49
      %p56 = scmp.eq.s32.totalorder %s14, 1
      %p57 = por %p55, %p56
      %p58 = scmp.ne.s32.totalorder %s50, %s53
      %p59 = scmp.eq.s32.totalorder %s14, 0
      %p60 = por %p58, %p59
      %p61 = scmp.ne.s32.totalorder %s50, %s53
      %p62 = scmp.eq.s32.totalorder %s19, 1
      %p63 = por %p61, %p62
      %p64 = scmp.ne.s32.totalorder %s53, %s54
      %p65 = scmp.eq.s32.totalorder %s19, 0
      %p66 = por %p64, %p65
      %p67 = scmp.ne.s32.totalorder %s53, %s54
      %p68 = scmp.eq.s32.totalorder %s20, 1
      %p69 = por %p67, %p68
      %p71 = scmp.ne.s32.totalorder %s54, %s70
      %p72 = scmp.eq.s32.totalorder %s20, 0
      %p73 = por %p71, %p72
      %s75 = sadd.s32 %s74, 1
      %p78 = scmp.eq.s32.totalorder %s14, 1
      %p79 = scmp.ne.s32.totalorder %s74, %s76
      %p80 = scmp.eq.s32.totalorder %s14, 0
      %p81 = por %p79, %p80
      %p82 = scmp.ne.s32.totalorder %s74, %s76
      %p83 = scmp.eq.s32.totalorder %s19, 1
      %p84 = por %p82, %p83
      %p85 = scmp.ne.s32.totalorder %s76, %s77
      %p86 = scmp.eq.s32.totalorder %s19, 0
      %p87 = por %p85, %p86
      %p88 = scmp.ne.s32.totalorder %s76, %s77
      %p89 = scmp.eq.s32.totalorder %s20, 1
      %p90 = por %p88, %p89
      %p92 = scmp.ne.s32.totalorder %s77, %s91
      %p93 = scmp.eq.s32.totalorder %s20, 0
      %p94 = por %p92, %p93
      %s96 = sadd.s32 %s95, 1
      %p99 = scmp.eq.s32.totalorder %s14, 1
      %p100 = scmp.ne.s32.totalorder %s95, %s97
      %p101 = scmp.eq.s32.totalorder %s14, 0
      %p102 = por %p100, %p101
      %p103 = scmp.ne.s32.totalorder %s95, %s97
      %p104 = scmp.eq.s32.totalorder %s19, 1
      %p105 = por %p103, %p104
      %p106 = scmp.ne.s32.totalorder %s97, %s98
      %p107 = scmp.eq.s32.totalorder %s19, 0
      %p108 = por %p106, %p107
      %p109 = scmp.ne.s32.totalorder %s97, %s98
      %p110 = scmp.eq.s32.totalorder %s20, 1
      %p111 = por %p109, %p110
      %p113 = scmp.ne.s32.totalorder %s98, %s112
      %p114 = scmp.eq.s32.totalorder %s20, 0
      %p115 = por %p113, %p114
      %s117 = sadd.s32 %s116, 1
      %p120 = scmp.eq.s32.totalorder %s14, 1
      %p121 = scmp.ne.s32.totalorder %s116, %s118
      %p122 = scmp.eq.s32.totalorder %s14, 0
      %p123 = por %p121, %p122
      %p124 = scmp.ne.s32.totalorder %s116, %s118
      %p125 = scmp.eq.s32.totalorder %s19, 1
      %p126 = por %p124, %p125
      %p127 = scmp.ne.s32.totalorder %s118, %s119
      %p128 = scmp.eq.s32.totalorder %s19, 0
      %p129 = por %p127, %p128
      %p130 = scmp.ne.s32.totalorder %s118, %s119
      %p131 = scmp.eq.s32.totalorder %s20, 1
      %p132 = por %p130, %p131
      %p134 = scmp.ne.s32.totalorder %s119, %s133
      %p135 = scmp.eq.s32.totalorder %s20, 0
      %p136 = por %p134, %p135
      %s137 = ssub.s32 %s14, %s21
      %p138 = scmp.eq.s32.totalorder %s137, 0
      %s140 = sadd.s32 %s139, 1
      %s141 = scalar_select %p138, %s139, %s140
      %p144 = pneg %p138
      %p145 = scmp.eq.s32.totalorder %s14, 1
      %p146 = por %p144, %p145
      %p147 = scmp.ne.s32.totalorder %s139, %s142
      %p148 = scmp.eq.s32.totalorder %s14, 0
      %p149 = por %p147, %p148
      %p150 = scmp.ne.s32.totalorder %s139, %s142
      %p151 = scmp.eq.s32.totalorder %s19, 1
      %p152 = por %p150, %p151
      %p153 = scmp.ne.s32.totalorder %s142, %s143
      %p154 = scmp.eq.s32.totalorder %s19, 0
      %p155 = por %p153, %p154
      %p156 = scmp.ne.s32.totalorder %s142, %s143
      %p157 = scmp.eq.s32.totalorder %s20, 1
      %p158 = por %p156, %p157
      %p160 = scmp.ne.s32.totalorder %s143, %s159
      %p161 = scmp.eq.s32.totalorder %s20, 0
      %p162 = por %p160, %p161
      %p163 = scmp.le.s32.totalorder 1, %s14
      %p164 = scmp.lt.s32.totalorder %s14, 3
      %p165 = pnand %p163, %p164
      %p166 = pneg %p165
      // Predicated region
      $region9: #{gcn_encoder_forward.1} parent=5 // pred_check
        _
      $region10: #{gcn_encoder_forward.1} parent=5 // pred_check_branch
        %168 = sbr.rel (%p165) target = $region12
      $region11: #{gcn_encoder_forward.1} parent=5 // pred_region
        %s169 = ssub.s32 %s14, 1
        // Predicated region
        $region13: #{gcn_encoder_forward.1} parent=11 // pred_check
          %p170 = pneg %p87
        $region14: #{gcn_encoder_forward.1} parent=11 // pred_check_branch
          %172 = sbr.rel (%p170) target = $region16
        $region15: #{gcn_encoder_forward.1} parent=11 // pred_region
          _
        $region16: #{gcn_encoder_forward.1} parent=11 // pred_fallthru
          _
        // Predicated region
        $region17: #{gcn_encoder_forward.1} parent=11 // pred_check
          %p173 = pneg %p108
        $region18: #{gcn_encoder_forward.1} parent=11 // pred_check_branch
          %175 = sbr.rel (%p173) target = $region20
        $region19: #{gcn_encoder_forward.1} parent=11 // pred_region
          _
        $region20: #{gcn_encoder_forward.1} parent=11 // pred_fallthru
          _
        // Predicated region
        $region21: #{gcn_encoder_forward.1} parent=11 // pred_check
          %p176 = pneg %p129
        $region22: #{gcn_encoder_forward.1} parent=11 // pred_check_branch
          %178 = sbr.rel (%p176) target = $region24
        $region23: #{gcn_encoder_forward.1} parent=11 // pred_region
          _
        $region24: #{gcn_encoder_forward.1} parent=11 // pred_fallthru
          _
      $region12: #{gcn_encoder_forward.1} parent=5 // pred_fallthru
        _
      %p179 = scmp.lt.s32.totalorder %s14, 2
      // Predicated region
      $region25: #{gcn_encoder_forward.1} parent=5 // pred_check
        %p180 = pneg %p179
      $region26: #{gcn_encoder_forward.1} parent=5 // pred_check_branch
        %182 = sbr.rel (%p180) target = $region28
      $region27: #{gcn_encoder_forward.1} parent=5 // pred_region
        // Predicated region
        $region29: #{gcn_encoder_forward.1} parent=27 // pred_check
          %p183 = pneg %p34
        $region30: #{gcn_encoder_forward.1} parent=27 // pred_check_branch
          %185 = sbr.rel (%p183) target = $region32
        $region31: #{gcn_encoder_forward.1} parent=27 // pred_region
          %s186 = smul.u32 8, %s14
          %p187 = scmp.lt.s32.totalorder %s186, 15
          %s188 = scalar_select %p187, %s186, 15
          %s189 = smul.addr %s188, 8
          %s190 = scalar_lea.vmem %s0, %s189
          %s191 = smul.u32 8, %s14
        $region32: #{gcn_encoder_forward.1} parent=27 // pred_fallthru
          _
        // Predicated region
        $region33: #{gcn_encoder_forward.1} parent=27 // pred_check
          %p192 = pneg %p60
        $region34: #{gcn_encoder_forward.1} parent=27 // pred_check_branch
          %194 = sbr.rel (%p192) target = $region36
        $region35: #{gcn_encoder_forward.1} parent=27 // pred_region
          %s195 = smul.u32 8, %s14
          %p196 = scmp.lt.s32.totalorder %s195, 15
          %s197 = scalar_select %p196, %s195, 15
          %s198 = smul.addr %s197, 8
          %s199 = scalar_lea.vmem %s1, %s198
          %s200 = smul.u32 8, %s14
        $region36: #{gcn_encoder_forward.1} parent=27 // pred_fallthru
          _
      $region28: #{gcn_encoder_forward.1} parent=5 // pred_fallthru
        _
      %p201 = scmp.le.s32.totalorder 1, %s14
      %p202 = scmp.lt.s32.totalorder %s14, 3
      %p203 = pnand %p201, %p202
      %p204 = pneg %p203
      // Predicated region
      $region37: #{gcn_encoder_forward.1} parent=5 // pred_check
        _
      $region38: #{gcn_encoder_forward.1} parent=5 // pred_check_branch
        %206 = sbr.rel (%p203) target = $region40
      $region39: #{gcn_encoder_forward.1} parent=5 // pred_region
        %s207 = ssub.s32 %s14, 1
        %s208 = smul.u32 8, %s19
        %p209 = scmp.lt.s32.totalorder %s208, 15
        %s210 = scalar_select %p209, %s208, 15
        %s211 = smul.addr %s210, 8
        %s212 = scalar_lea.vmem %s0, %s211
        %p213 = pneg %p40
        %p214 = pneg %p37
        %s215 = smul.u32 8, %s19
        %p216 = scmp.lt.s32.totalorder %s215, 15
        %s217 = scalar_select %p216, %s215, 15
        %s218 = smul.addr %s217, 8
        %s219 = scalar_lea.vmem %s1, %s218
        %p220 = pneg %p66
        %p221 = pneg %p63
        %p222 = pneg %p87
        %p223 = pneg %p84
        %p224 = pneg %p108
        %p225 = pneg %p105
        %p226 = pneg %p129
        %p227 = pneg %p126
        %p228 = pneg %p155
        %p229 = pneg %p152
        %s230 = sand.u32 %s142, 1
        %s231 = scalar_lea.sflag [#allocation3], %s230
        %s232 = sand.u32 %s142, 1
        %s233 = smul.addr %s232, 64
        %s234 = scalar_lea.vmem [#allocation2], %s233
        %s235 = smul.u32 8, %s19
        %p236 = scmp.lt.s32.totalorder %s235, 15
        %s237 = scalar_select %p236, %s235, 15
        %s238 = smul.addr %s237, 8
        %s239 = scalar_lea.vmem %s0, %s238
        %s240 = smul.u32 8, %s19
        %s241 = smul.u32 8, %s19
        %p242 = scmp.lt.s32.totalorder %s241, 15
        %s243 = scalar_select %p242, %s241, 15
        %s244 = smul.addr %s243, 8
        %s245 = scalar_lea.vmem %s1, %s244
        %s246 = smul.u32 8, %s19
        %s247 = smul.u32 8, %s19
        %v248 = vld [vmem:[%s2] sm:$0xff]
        %v249 = vld [vmem:[%s2 + $0x8] sm:$0xff]
        %v250 = vld [vmem:[%s2 + $0x10] sm:$0xff]
        %v251 = vld [vmem:[%s2 + $0x18] sm:$0xff]
        %v252 = vld [vmem:[%s2 + $0x20] sm:$0xff]
        %v253 = vld [vmem:[%s2 + $0x28] sm:$0xff]
        %v254 = vld [vmem:[%s2 + $0x30] sm:$0xff]
        %v255 = vld [vmem:[%s2 + $0x38] sm:$0xff]
        %v256 = vld [vmem:[%s245] sm:$0xff]
        %v257 = vld [vmem:[%s245 + $0x8] sm:$0xff]
        %v258 = vld [vmem:[%s245 + $0x10] sm:$0xff]
        %v259 = vld [vmem:[%s245 + $0x18] sm:$0xff]
        %v260 = vld [vmem:[%s245 + $0x20] sm:$0xff]
        %v261 = vld [vmem:[%s245 + $0x28] sm:$0xff]
        %v262 = vld [vmem:[%s245 + $0x30] sm:$0xff]
        %v263 = vld [vmem:[%s245 + $0x38] sm:$0xff]
        %v264 = vld [vmem:[%s239] sm:$0xff]
        %v265 = vld [vmem:[%s239 + $0x8] sm:$0xff]
        %v266 = vld [vmem:[%s239 + $0x10] sm:$0xff]
        %v267 = vld [vmem:[%s239 + $0x18] sm:$0xff]
        %v268 = vld [vmem:[%s239 + $0x20] sm:$0xff]
        %v269 = vld [vmem:[%s239 + $0x28] sm:$0xff]
        %v270 = vld [vmem:[%s239 + $0x30] sm:$0xff]
        %v271 = vld [vmem:[%s239 + $0x38] sm:$0xff]
        %v272 = vld [vmem:[%s4] sm:$0xff]
        %v273 = vld [vmem:[%s4 + $0x8] sm:$0xff]
        %v274 = vld [vmem:[%s4 + $0x10] sm:$0xff]
        %v275 = vld [vmem:[%s4 + $0x18] sm:$0xff]
        %vm276 = vcmask 523264
        %v278 = vsel %vm276, %v248, 0
        %v281 = vsel %vm276, %v249, 0
        %v284 = vsel %vm276, %v250, 0
        %v287 = vsel %vm276, %v251, 0
        %v290 = vsel %vm276, %v252, 0
        %v293 = vsel %vm276, %v253, 0
        %v296 = vsel %vm276, %v254, 0
        %v299 = vsel %vm276, %v255, 0
        %301 = vmatprep.subr.mxu0 0.0
        %302 = vmatpush1.msra.mxu0 0.0
        %303 = vmatprep.subr.mxu0 0.0
        %304 = vmatpush1.msra.mxu0 0.0
        %305 = vmatprep.subr.mxu0 0.0
        %306 = vmatpush1.msra.mxu0 0.0
        %307 = vmatprep.subr.mxu0 0.0
        %308 = vmatpush1.msra.mxu0 0.0
        %309 = vmatprep.subr.mxu0 0.0
        %310 = vmatpush1.msra.mxu0 0.0
        %311 = vmatprep.subr.mxu0 0.0
        %312 = vmatpush1.msra.mxu0 0.0
        %313 = vmatprep.subr.mxu0 0.0
        %314 = vmatpush1.msra.mxu0 0.0
        %315 = vmatprep.subr.mxu0 0.0
        %316 = vmatpush1.msra.mxu0 0.0
        %317 = vmatprep.subr.mxu0 0.0
        %318 = vmatpush1.msra.mxu0 %v271
        %319 = vmatprep.subr.mxu0 0.0
        %320 = vmatpush1.msra.mxu0 %v270
        %321 = vmatprep.subr.mxu0 0.0
        %322 = vmatpush1.msra.mxu0 %v269
        %323 = vmatprep.subr.mxu0 0.0
        %324 = vmatpush1.msra.mxu0 %v268
        %325 = vmatprep.subr.mxu0 0.0
        %326 = vmatpush1.msra.mxu0 %v267
        %327 = vmatprep.subr.mxu0 0.0
        %328 = vmatpush1.msra.mxu0 %v266
        %329 = vmatprep.subr.mxu0 0.0
        %330 = vmatpush1.msra.mxu0 %v265
        %331 = vmatprep.subr.mxu0 0.0
        %332 = vmatpush1.msra.mxu0 %v264
        %333 = vmatprep.subr.mxu0 0.0
        %334 = vmatpush2.msra.mxu0 0.0
        %335 = vmatprep.subr.mxu0 0.0
        %336 = vmatpush2.msra.mxu0 0.0
        %337 = vmatprep.subr.mxu0 0.0
        %338 = vmatpush2.msra.mxu0 0.0
        %339 = vmatprep.subr.mxu0 0.0
        %340 = vmatpush2.msra.mxu0 0.0
        %341 = vmatprep.subr.mxu0 0.0
        %342 = vmatpush2.msra.mxu0 0.0
        %343 = vmatprep.subr.mxu0 0.0
        %344 = vmatpush2.msra.mxu0 0.0
        %345 = vmatprep.subr.mxu0 0.0
        %346 = vmatpush2.msra.mxu0 0.0
        %347 = vmatprep.subr.mxu0 0.0
        %348 = vmatpush2.msra.mxu0 0.0
        %349 = vmatprep.subr.mxu0 0.0
        %350 = vmatpush2.msra.mxu0 0.0
        %351 = vmatprep.subr.mxu0 0.0
        %352 = vmatpush2.msra.mxu0 0.0
        %353 = vmatprep.subr.mxu0 0.0
        %354 = vmatpush2.msra.mxu0 0.0
        %355 = vmatprep.subr.mxu0 0.0
        %356 = vmatpush2.msra.mxu0 0.0
        %357 = vmatprep.subr.mxu0 0.0
        %358 = vmatpush2.msra.mxu0 0.0
        %359 = vmatprep.subr.mxu0 0.0
        %360 = vmatpush2.msra.mxu0 0.0
        %361 = vmatprep.subr.mxu0 0.0
        %362 = vmatpush2.msra.mxu0 0.0
        %363 = vmatprep.subr.mxu0 0.0
        %364 = vmatpush2.msra.mxu0 0.0
        %365 = vmatprep.mubr.f32.mxu0 0.0
        %366 = vmatmul.mubr.f32.gmra.mxu0 %v278
        %v367 = vpop.f32.mrf.mxu0
        %v368 = vadd.f32 0.0, %v367
        %v369 = vpop.f32.mrf.mxu0
        %370 = vmatprep.mubr.f32.mxu0 0.0
        %371 = vmatmul.mubr.f32.gmra.mxu0 %v281
        %v372 = vpop.f32.mrf.mxu0
        %v373 = vadd.f32 0.0, %v372
        %v374 = vpop.f32.mrf.mxu0
        %375 = vmatprep.mubr.f32.mxu0 0.0
        %376 = vmatmul.mubr.f32.gmra.mxu0 %v284
        %v377 = vpop.f32.mrf.mxu0
        %v378 = vadd.f32 0.0, %v377
        %v379 = vpop.f32.mrf.mxu0
        %380 = vmatprep.mubr.f32.mxu0 0.0
        %381 = vmatmul.mubr.f32.gmra.mxu0 %v287
        %v382 = vpop.f32.mrf.mxu0
        %v383 = vadd.f32 0.0, %v382
        %v384 = vpop.f32.mrf.mxu0
        %385 = vmatprep.mubr.f32.mxu0 0.0
        %386 = vmatmul.mubr.f32.gmra.mxu0 %v290
        %v387 = vpop.f32.mrf.mxu0
        %v388 = vadd.f32 0.0, %v387
        %v389 = vpop.f32.mrf.mxu0
        %390 = vmatprep.mubr.f32.mxu0 0.0
        %391 = vmatmul.mubr.f32.gmra.mxu0 %v293
        %v392 = vpop.f32.mrf.mxu0
        %v393 = vadd.f32 0.0, %v392
        %v394 = vpop.f32.mrf.mxu0
        %395 = vmatprep.mubr.f32.mxu0 0.0
        %396 = vmatmul.mubr.f32.gmra.mxu0 %v296
        %v397 = vpop.f32.mrf.mxu0
        %v398 = vadd.f32 0.0, %v397
        %v399 = vpop.f32.mrf.mxu0
        %400 = vmatprep.mubr.f32.mxu0 0.0
        %401 = vmatmul.mubr.f32.gmra.mxu0 %v299
        %v402 = vpop.f32.mrf.mxu0
        %v403 = vadd.f32 0.0, %v402
        %v404 = vpop.f32.mrf.mxu0
        %405 = vdwg.mxu0
        %v406 = vld [vmem:[%s4 + $0x20] sm:$0xff]
        %v407 = vld [vmem:[%s4 + $0x28] sm:$0xff]
        %v408 = vld [vmem:[%s4 + $0x30] sm:$0xff]
        %v409 = vld [vmem:[%s4 + $0x38] sm:$0xff]
        %vm410 = vcmask 261120
        %v412 = vsel %vm410, %v368, 0
        %v415 = vsel %vm410, %v373, 0
        %v418 = vsel %vm410, %v378, 0
        %v421 = vsel %vm410, %v383, 0
        %v424 = vsel %vm410, %v388, 0
        %v427 = vsel %vm410, %v393, 0
        %v430 = vsel %vm410, %v398, 0
        %v433 = vsel %vm410, %v403, 0
        %435 = vmatprep.subr.mxu0 0.0
        %436 = vmatpush1.msra.mxu0 0.0
        %437 = vmatprep.subr.mxu0 0.0
        %438 = vmatpush1.msra.mxu0 0.0
        %439 = vmatprep.subr.mxu0 0.0
        %440 = vmatpush1.msra.mxu0 0.0
        %441 = vmatprep.subr.mxu0 0.0
        %442 = vmatpush1.msra.mxu0 0.0
        %443 = vmatprep.subr.mxu0 0.0
        %444 = vmatpush1.msra.mxu0 0.0
        %445 = vmatprep.subr.mxu0 0.0
        %446 = vmatpush1.msra.mxu0 0.0
        %447 = vmatprep.subr.mxu0 0.0
        %448 = vmatpush1.msra.mxu0 0.0
        %449 = vmatprep.subr.mxu0 0.0
        %450 = vmatpush1.msra.mxu0 0.0
        %451 = vmatprep.subr.mxu0 0.0
        %452 = vmatpush1.msra.mxu0 0.0
        %453 = vmatprep.subr.mxu0 0.0
        %454 = vmatpush1.msra.mxu0 0.0
        %455 = vmatprep.subr.mxu0 0.0
        %456 = vmatpush1.msra.mxu0 0.0
        %457 = vmatprep.subr.mxu0 0.0
        %458 = vmatpush1.msra.mxu0 0.0
        %459 = vmatprep.subr.mxu0 0.0
        %460 = vmatpush1.msra.mxu0 %v409
        %461 = vmatprep.subr.mxu0 0.0
        %462 = vmatpush1.msra.mxu0 %v408
        %463 = vmatprep.subr.mxu0 0.0
        %464 = vmatpush1.msra.mxu0 %v407
        %465 = vmatprep.subr.mxu0 0.0
        %466 = vmatpush1.msra.mxu0 %v406
        %467 = vmatprep.subr.mxu0 0.0
        %468 = vmatpush2.msra.mxu0 0.0
        %469 = vmatprep.subr.mxu0 0.0
        %470 = vmatpush2.msra.mxu0 0.0
        %471 = vmatprep.subr.mxu0 0.0
        %472 = vmatpush2.msra.mxu0 0.0
        %473 = vmatprep.subr.mxu0 0.0
        %474 = vmatpush2.msra.mxu0 0.0
        %475 = vmatprep.subr.mxu0 0.0
        %476 = vmatpush2.msra.mxu0 0.0
        %477 = vmatprep.subr.mxu0 0.0
        %478 = vmatpush2.msra.mxu0 0.0
        %479 = vmatprep.subr.mxu0 0.0
        %480 = vmatpush2.msra.mxu0 0.0
        %481 = vmatprep.subr.mxu0 0.0
        %482 = vmatpush2.msra.mxu0 0.0
        %483 = vmatprep.subr.mxu0 0.0
        %484 = vmatpush2.msra.mxu0 0.0
        %485 = vmatprep.subr.mxu0 0.0
        %486 = vmatpush2.msra.mxu0 0.0
        %487 = vmatprep.subr.mxu0 0.0
        %488 = vmatpush2.msra.mxu0 0.0
        %489 = vmatprep.subr.mxu0 0.0
        %490 = vmatpush2.msra.mxu0 0.0
        %491 = vmatprep.subr.mxu0 0.0
        %492 = vmatpush2.msra.mxu0 0.0
        %493 = vmatprep.subr.mxu0 0.0
        %494 = vmatpush2.msra.mxu0 0.0
        %495 = vmatprep.subr.mxu0 0.0
        %496 = vmatpush2.msra.mxu0 0.0
        %497 = vmatprep.subr.mxu0 0.0
        %498 = vmatpush2.msra.mxu0 0.0
        %499 = vmatprep.mubr.f32.mxu0 0.0
        %500 = vmatmul.mubr.f32.gmra.mxu0 %v412
        %v501 = vpop.f32.mrf.mxu0
        %v502 = vadd.f32 0.0, %v501
        %v503 = vpop.f32.mrf.mxu0
        %504 = vmatprep.mubr.f32.mxu0 0.0
        %505 = vmatmul.mubr.f32.gmra.mxu0 %v415
        %v506 = vpop.f32.mrf.mxu0
        %v507 = vadd.f32 0.0, %v506
        %v508 = vpop.f32.mrf.mxu0
        %509 = vmatprep.mubr.f32.mxu0 0.0
        %510 = vmatmul.mubr.f32.gmra.mxu0 %v418
        %v511 = vpop.f32.mrf.mxu0
        %v512 = vadd.f32 0.0, %v511
        %v513 = vpop.f32.mrf.mxu0
        %514 = vmatprep.mubr.f32.mxu0 0.0
        %515 = vmatmul.mubr.f32.gmra.mxu0 %v421
        %v516 = vpop.f32.mrf.mxu0
        %v517 = vadd.f32 0.0, %v516
        %v518 = vpop.f32.mrf.mxu0
        %519 = vmatprep.mubr.f32.mxu0 0.0
        %520 = vmatmul.mubr.f32.gmra.mxu0 %v424
        %v521 = vpop.f32.mrf.mxu0
        %v522 = vadd.f32 0.0, %v521
        %v523 = vpop.f32.mrf.mxu0
        %524 = vmatprep.mubr.f32.mxu0 0.0
        %525 = vmatmul.mubr.f32.gmra.mxu0 %v427
        %v526 = vpop.f32.mrf.mxu0
        %v527 = vadd.f32 0.0, %v526
        %v528 = vpop.f32.mrf.mxu0
        %529 = vmatprep.mubr.f32.mxu0 0.0
        %530 = vmatmul.mubr.f32.gmra.mxu0 %v430
        %v531 = vpop.f32.mrf.mxu0
        %v532 = vadd.f32 0.0, %v531
        %v533 = vpop.f32.mrf.mxu0
        %534 = vmatprep.mubr.f32.mxu0 0.0
        %535 = vmatmul.mubr.f32.gmra.mxu0 %v433
        %v536 = vpop.f32.mrf.mxu0
        %v537 = vadd.f32 0.0, %v536
        %v538 = vpop.f32.mrf.mxu0
        %539 = vdwg.mxu0
        %v541 = vsel %vm410, %v264, 0
        %v544 = vsel %vm410, %v265, 0
        %v547 = vsel %vm410, %v266, 0
        %v550 = vsel %vm410, %v267, 0
        %v553 = vsel %vm410, %v268, 0
        %v556 = vsel %vm410, %v269, 0
        %v559 = vsel %vm410, %v270, 0
        %v562 = vsel %vm410, %v271, 0
        %564 = vmatprep.subr.mxu0 0.0
        %565 = vmatpush1.msra.mxu0 0.0
        %566 = vmatprep.subr.mxu0 0.0
        %567 = vmatpush1.msra.mxu0 0.0
        %568 = vmatprep.subr.mxu0 0.0
        %569 = vmatpush1.msra.mxu0 0.0
        %570 = vmatprep.subr.mxu0 0.0
        %571 = vmatpush1.msra.mxu0 0.0
        %572 = vmatprep.subr.mxu0 0.0
        %573 = vmatpush1.msra.mxu0 0.0
        %574 = vmatprep.subr.mxu0 0.0
        %575 = vmatpush1.msra.mxu0 0.0
        %576 = vmatprep.subr.mxu0 0.0
        %577 = vmatpush1.msra.mxu0 0.0
        %578 = vmatprep.subr.mxu0 0.0
        %579 = vmatpush1.msra.mxu0 0.0
        %580 = vmatprep.subr.mxu0 0.0
        %581 = vmatpush1.msra.mxu0 0.0
        %582 = vmatprep.subr.mxu0 0.0
        %583 = vmatpush1.msra.mxu0 0.0
        %584 = vmatprep.subr.mxu0 0.0
        %585 = vmatpush1.msra.mxu0 0.0
        %586 = vmatprep.subr.mxu0 0.0
        %587 = vmatpush1.msra.mxu0 0.0
        %588 = vmatprep.subr.mxu0 0.0
        %589 = vmatpush1.msra.mxu0 %v275
        %590 = vmatprep.subr.mxu0 0.0
        %591 = vmatpush1.msra.mxu0 %v274
        %592 = vmatprep.subr.mxu0 0.0
        %593 = vmatpush1.msra.mxu0 %v273
        %594 = vmatprep.subr.mxu0 0.0
        %595 = vmatpush1.msra.mxu0 %v272
        %596 = vmatprep.subr.mxu0 0.0
        %597 = vmatpush2.msra.mxu0 0.0
        %598 = vmatprep.subr.mxu0 0.0
        %599 = vmatpush2.msra.mxu0 0.0
        %600 = vmatprep.subr.mxu0 0.0
        %601 = vmatpush2.msra.mxu0 0.0
        %602 = vmatprep.subr.mxu0 0.0
        %603 = vmatpush2.msra.mxu0 0.0
        %604 = vmatprep.subr.mxu0 0.0
        %605 = vmatpush2.msra.mxu0 0.0
        %606 = vmatprep.subr.mxu0 0.0
        %607 = vmatpush2.msra.mxu0 0.0
        %608 = vmatprep.subr.mxu0 0.0
        %609 = vmatpush2.msra.mxu0 0.0
        %610 = vmatprep.subr.mxu0 0.0
        %611 = vmatpush2.msra.mxu0 0.0
        %612 = vmatprep.subr.mxu0 0.0
        %613 = vmatpush2.msra.mxu0 0.0
        %614 = vmatprep.subr.mxu0 0.0
        %615 = vmatpush2.msra.mxu0 0.0
        %616 = vmatprep.subr.mxu0 0.0
        %617 = vmatpush2.msra.mxu0 0.0
        %618 = vmatprep.subr.mxu0 0.0
        %619 = vmatpush2.msra.mxu0 0.0
        %620 = vmatprep.subr.mxu0 0.0
        %621 = vmatpush2.msra.mxu0 0.0
        %622 = vmatprep.subr.mxu0 0.0
        %623 = vmatpush2.msra.mxu0 0.0
        %624 = vmatprep.subr.mxu0 0.0
        %625 = vmatpush2.msra.mxu0 0.0
        %626 = vmatprep.subr.mxu0 0.0
        %627 = vmatpush2.msra.mxu0 0.0
        %628 = vmatprep.mubr.f32.mxu0 0.0
        %629 = vmatmul.mubr.f32.gmra.mxu0 %v541
        %v630 = vpop.f32.mrf.mxu0
        %v631 = vadd.f32 %v502, %v630
        %v632 = vpop.f32.mrf.mxu0
        %633 = vmatprep.mubr.f32.mxu0 0.0
        %634 = vmatmul.mubr.f32.gmra.mxu0 %v544
        %v635 = vpop.f32.mrf.mxu0
        %v636 = vadd.f32 %v507, %v635
        %v637 = vpop.f32.mrf.mxu0
        %638 = vmatprep.mubr.f32.mxu0 0.0
        %639 = vmatmul.mubr.f32.gmra.mxu0 %v547
        %v640 = vpop.f32.mrf.mxu0
        %v641 = vadd.f32 %v512, %v640
        %v642 = vpop.f32.mrf.mxu0
        %643 = vmatprep.mubr.f32.mxu0 0.0
        %644 = vmatmul.mubr.f32.gmra.mxu0 %v550
        %v645 = vpop.f32.mrf.mxu0
        %v646 = vadd.f32 %v517, %v645
        %v647 = vpop.f32.mrf.mxu0
        %648 = vmatprep.mubr.f32.mxu0 0.0
        %649 = vmatmul.mubr.f32.gmra.mxu0 %v553
        %v650 = vpop.f32.mrf.mxu0
        %v651 = vadd.f32 %v522, %v650
        %v652 = vpop.f32.mrf.mxu0
        %653 = vmatprep.mubr.f32.mxu0 0.0
        %654 = vmatmul.mubr.f32.gmra.mxu0 %v556
        %v655 = vpop.f32.mrf.mxu0
        %v656 = vadd.f32 %v527, %v655
        %v657 = vpop.f32.mrf.mxu0
        %658 = vmatprep.mubr.f32.mxu0 0.0
        %659 = vmatmul.mubr.f32.gmra.mxu0 %v559
        %v660 = vpop.f32.mrf.mxu0
        %v661 = vadd.f32 %v532, %v660
        %v662 = vpop.f32.mrf.mxu0
        %663 = vmatprep.mubr.f32.mxu0 0.0
        %664 = vmatmul.mubr.f32.gmra.mxu0 %v562
        %v665 = vpop.f32.mrf.mxu0
        %v666 = vadd.f32 %v537, %v665
        %v667 = vpop.f32.mrf.mxu0
        %668 = vdwg.mxu0
        %669 = vmatprep.subr.mxu0 0.0
        %670 = vmatpush1.msra.mxu0 0.0
        %671 = vmatprep.subr.mxu0 0.0
        %672 = vmatpush1.msra.mxu0 0.0
        %673 = vmatprep.subr.mxu0 0.0
        %674 = vmatpush1.msra.mxu0 0.0
        %675 = vmatprep.subr.mxu0 0.0
        %676 = vmatpush1.msra.mxu0 0.0
        %677 = vmatprep.subr.mxu0 0.0
        %678 = vmatpush1.msra.mxu0 0.0
        %679 = vmatprep.subr.mxu0 0.0
        %680 = vmatpush1.msra.mxu0 0.0
        %681 = vmatprep.subr.mxu0 0.0
        %682 = vmatpush1.msra.mxu0 0.0
        %683 = vmatprep.subr.mxu0 0.0
        %684 = vmatpush1.msra.mxu0 0.0
        %685 = vmatprep.subr.mxu0 0.0
        %686 = vmatpush1.msra.mxu0 %v403
        %687 = vmatprep.subr.mxu0 0.0
        %688 = vmatpush1.msra.mxu0 %v398
        %689 = vmatprep.subr.mxu0 0.0
        %690 = vmatpush1.msra.mxu0 %v393
        %691 = vmatprep.subr.mxu0 0.0
        %692 = vmatpush1.msra.mxu0 %v388
        %693 = vmatprep.subr.mxu0 0.0
        %694 = vmatpush1.msra.mxu0 %v383
        %695 = vmatprep.subr.mxu0 0.0
        %696 = vmatpush1.msra.mxu0 %v378
        %697 = vmatprep.subr.mxu0 0.0
        %698 = vmatpush1.msra.mxu0 %v373
        %699 = vmatprep.subr.mxu0 0.0
        %700 = vmatpush1.msra.mxu0 %v368
        %701 = vmatprep.subr.mxu0 0.0
        %702 = vmatpush2.msra.mxu0 0.0
        %703 = vmatprep.subr.mxu0 0.0
        %704 = vmatpush2.msra.mxu0 0.0
        %705 = vmatprep.subr.mxu0 0.0
        %706 = vmatpush2.msra.mxu0 0.0
        %707 = vmatprep.subr.mxu0 0.0
        %708 = vmatpush2.msra.mxu0 0.0
        %709 = vmatprep.subr.mxu0 0.0
        %710 = vmatpush2.msra.mxu0 0.0
        %711 = vmatprep.subr.mxu0 0.0
        %712 = vmatpush2.msra.mxu0 0.0
        %713 = vmatprep.subr.mxu0 0.0
        %714 = vmatpush2.msra.mxu0 0.0
        %715 = vmatprep.subr.mxu0 0.0
        %716 = vmatpush2.msra.mxu0 0.0
        %717 = vmatprep.subr.mxu0 0.0
        %718 = vmatpush2.msra.mxu0 0.0
        %719 = vmatprep.subr.mxu0 0.0
        %720 = vmatpush2.msra.mxu0 0.0
        %721 = vmatprep.subr.mxu0 0.0
        %722 = vmatpush2.msra.mxu0 0.0
        %723 = vmatprep.subr.mxu0 0.0
        %724 = vmatpush2.msra.mxu0 0.0
        %725 = vmatprep.subr.mxu0 0.0
        %726 = vmatpush2.msra.mxu0 0.0
        %727 = vmatprep.subr.mxu0 0.0
        %728 = vmatpush2.msra.mxu0 0.0
        %729 = vmatprep.subr.mxu0 0.0
        %730 = vmatpush2.msra.mxu0 0.0
        %731 = vmatprep.subr.mxu0 0.0
        %732 = vmatpush2.msra.mxu0 0.0
        %733 = vmatprep.mubr.f32.mxu0 0.0
        %734 = vmatmul.mubr.f32.gmra.mxu0 %v278
        %v735 = vpop.f32.mrf.mxu0
        %v736 = vadd.f32 0.0, %v735
        %v737 = vpop.f32.mrf.mxu0
        %738 = vmatprep.mubr.f32.mxu0 0.0
        %739 = vmatmul.mubr.f32.gmra.mxu0 %v281
        %v740 = vpop.f32.mrf.mxu0
        %v741 = vadd.f32 0.0, %v740
        %v742 = vpop.f32.mrf.mxu0
        %743 = vmatprep.mubr.f32.mxu0 0.0
        %744 = vmatmul.mubr.f32.gmra.mxu0 %v284
        %v745 = vpop.f32.mrf.mxu0
        %v746 = vadd.f32 0.0, %v745
        %v747 = vpop.f32.mrf.mxu0
        %748 = vmatprep.mubr.f32.mxu0 0.0
        %749 = vmatmul.mubr.f32.gmra.mxu0 %v287
        %v750 = vpop.f32.mrf.mxu0
        %v751 = vadd.f32 0.0, %v750
        %v752 = vpop.f32.mrf.mxu0
        %753 = vmatprep.mubr.f32.mxu0 0.0
        %754 = vmatmul.mubr.f32.gmra.mxu0 %v290
        %v755 = vpop.f32.mrf.mxu0
        %v756 = vadd.f32 0.0, %v755
        %v757 = vpop.f32.mrf.mxu0
        %758 = vmatprep.mubr.f32.mxu0 0.0
        %759 = vmatmul.mubr.f32.gmra.mxu0 %v293
        %v760 = vpop.f32.mrf.mxu0
        %v761 = vadd.f32 0.0, %v760
        %v762 = vpop.f32.mrf.mxu0
        %763 = vmatprep.mubr.f32.mxu0 0.0
        %764 = vmatmul.mubr.f32.gmra.mxu0 %v296
        %v765 = vpop.f32.mrf.mxu0
        %v766 = vadd.f32 0.0, %v765
        %v767 = vpop.f32.mrf.mxu0
        %768 = vmatprep.mubr.f32.mxu0 0.0
        %769 = vmatmul.mubr.f32.gmra.mxu0 %v299
        %v770 = vpop.f32.mrf.mxu0
        %v771 = vadd.f32 0.0, %v770
        %v772 = vpop.f32.mrf.mxu0
        %773 = vdwg.mxu0
        %v774 = vld [vmem:[%s4 + $0x40] sm:$0xff]
        %v775 = vld [vmem:[%s4 + $0x48] sm:$0xff]
        %v776 = vld [vmem:[%s4 + $0x50] sm:$0xff]
        %v777 = vld [vmem:[%s4 + $0x58] sm:$0xff]
        %v779 = vsel %vm410, %v736, 0
        %v782 = vsel %vm410, %v741, 0
        %v785 = vsel %vm410, %v746, 0
        %v788 = vsel %vm410, %v751, 0
        %v791 = vsel %vm410, %v756, 0
        %v794 = vsel %vm410, %v761, 0
        %v797 = vsel %vm410, %v766, 0
        %v800 = vsel %vm410, %v771, 0
        %802 = vmatprep.subr.mxu0 0.0
        %803 = vmatpush1.msra.mxu0 0.0
        %804 = vmatprep.subr.mxu0 0.0
        %805 = vmatpush1.msra.mxu0 0.0
        %806 = vmatprep.subr.mxu0 0.0
        %807 = vmatpush1.msra.mxu0 0.0
        %808 = vmatprep.subr.mxu0 0.0
        %809 = vmatpush1.msra.mxu0 0.0
        %810 = vmatprep.subr.mxu0 0.0
        %811 = vmatpush1.msra.mxu0 0.0
        %812 = vmatprep.subr.mxu0 0.0
        %813 = vmatpush1.msra.mxu0 0.0
        %814 = vmatprep.subr.mxu0 0.0
        %815 = vmatpush1.msra.mxu0 0.0
        %816 = vmatprep.subr.mxu0 0.0
        %817 = vmatpush1.msra.mxu0 0.0
        %818 = vmatprep.subr.mxu0 0.0
        %819 = vmatpush1.msra.mxu0 0.0
        %820 = vmatprep.subr.mxu0 0.0
        %821 = vmatpush1.msra.mxu0 0.0
        %822 = vmatprep.subr.mxu0 0.0
        %823 = vmatpush1.msra.mxu0 0.0
        %824 = vmatprep.subr.mxu0 0.0
        %825 = vmatpush1.msra.mxu0 0.0
        %826 = vmatprep.subr.mxu0 0.0
        %827 = vmatpush1.msra.mxu0 %v777
        %828 = vmatprep.subr.mxu0 0.0
        %829 = vmatpush1.msra.mxu0 %v776
        %830 = vmatprep.subr.mxu0 0.0
        %831 = vmatpush1.msra.mxu0 %v775
        %832 = vmatprep.subr.mxu0 0.0
        %833 = vmatpush1.msra.mxu0 %v774
        %834 = vmatprep.subr.mxu0 0.0
        %835 = vmatpush2.msra.mxu0 0.0
        %836 = vmatprep.subr.mxu0 0.0
        %837 = vmatpush2.msra.mxu0 0.0
        %838 = vmatprep.subr.mxu0 0.0
        %839 = vmatpush2.msra.mxu0 0.0
        %840 = vmatprep.subr.mxu0 0.0
        %841 = vmatpush2.msra.mxu0 0.0
        %842 = vmatprep.subr.mxu0 0.0
        %843 = vmatpush2.msra.mxu0 0.0
        %844 = vmatprep.subr.mxu0 0.0
        %845 = vmatpush2.msra.mxu0 0.0
        %846 = vmatprep.subr.mxu0 0.0
        %847 = vmatpush2.msra.mxu0 0.0
        %848 = vmatprep.subr.mxu0 0.0
        %849 = vmatpush2.msra.mxu0 0.0
        %850 = vmatprep.subr.mxu0 0.0
        %851 = vmatpush2.msra.mxu0 0.0
        %852 = vmatprep.subr.mxu0 0.0
        %853 = vmatpush2.msra.mxu0 0.0
        %854 = vmatprep.subr.mxu0 0.0
        %855 = vmatpush2.msra.mxu0 0.0
        %856 = vmatprep.subr.mxu0 0.0
        %857 = vmatpush2.msra.mxu0 0.0
        %858 = vmatprep.subr.mxu0 0.0
        %859 = vmatpush2.msra.mxu0 0.0
        %860 = vmatprep.subr.mxu0 0.0
        %861 = vmatpush2.msra.mxu0 0.0
        %862 = vmatprep.subr.mxu0 0.0
        %863 = vmatpush2.msra.mxu0 0.0
        %864 = vmatprep.subr.mxu0 0.0
        %865 = vmatpush2.msra.mxu0 0.0
        %866 = vmatprep.mubr.f32.mxu0 0.0
        %867 = vmatmul.mubr.f32.gmra.mxu0 %v779
        %v868 = vpop.f32.mrf.mxu0
        %v869 = vadd.f32 0.0, %v868
        %v870 = vpop.f32.mrf.mxu0
        %871 = vmatprep.mubr.f32.mxu0 0.0
        %872 = vmatmul.mubr.f32.gmra.mxu0 %v782
        %v873 = vpop.f32.mrf.mxu0
        %v874 = vadd.f32 0.0, %v873
        %v875 = vpop.f32.mrf.mxu0
        %876 = vmatprep.mubr.f32.mxu0 0.0
        %877 = vmatmul.mubr.f32.gmra.mxu0 %v785
        %v878 = vpop.f32.mrf.mxu0
        %v879 = vadd.f32 0.0, %v878
        %v880 = vpop.f32.mrf.mxu0
        %881 = vmatprep.mubr.f32.mxu0 0.0
        %882 = vmatmul.mubr.f32.gmra.mxu0 %v788
        %v883 = vpop.f32.mrf.mxu0
        %v884 = vadd.f32 0.0, %v883
        %v885 = vpop.f32.mrf.mxu0
        %886 = vmatprep.mubr.f32.mxu0 0.0
        %887 = vmatmul.mubr.f32.gmra.mxu0 %v791
        %v888 = vpop.f32.mrf.mxu0
        %v889 = vadd.f32 0.0, %v888
        %v890 = vpop.f32.mrf.mxu0
        %891 = vmatprep.mubr.f32.mxu0 0.0
        %892 = vmatmul.mubr.f32.gmra.mxu0 %v794
        %v893 = vpop.f32.mrf.mxu0
        %v894 = vadd.f32 0.0, %v893
        %v895 = vpop.f32.mrf.mxu0
        %896 = vmatprep.mubr.f32.mxu0 0.0
        %897 = vmatmul.mubr.f32.gmra.mxu0 %v797
        %v898 = vpop.f32.mrf.mxu0
        %v899 = vadd.f32 0.0, %v898
        %v900 = vpop.f32.mrf.mxu0
        %901 = vmatprep.mubr.f32.mxu0 0.0
        %902 = vmatmul.mubr.f32.gmra.mxu0 %v800
        %v903 = vpop.f32.mrf.mxu0
        %v904 = vadd.f32 0.0, %v903
        %v905 = vpop.f32.mrf.mxu0
        %906 = vdwg.mxu0
        %v907 = vadd.f32 %v631, %v869
        %v908 = vadd.f32 %v636, %v874
        %v909 = vadd.f32 %v641, %v879
        %v910 = vadd.f32 %v646, %v884
        %v911 = vadd.f32 %v651, %v889
        %v912 = vadd.f32 %v656, %v894
        %v913 = vadd.f32 %v661, %v899
        %v914 = vadd.f32 %v666, %v904
        %v915 = vld [vmem:[%s4 + $0x120] sm:$0x1]
        %v916 = vlaneseq
        %v917 = vshrl.u32 %v916, 7
        %v918 = vsub.s32 0, %v917
        %v919 = vrot.slane %v915, %v918
        %v920 = vadd.f32 %v907, %v919
        %v921 = vadd.f32 %v908, %v919
        %v922 = vadd.f32 %v909, %v919
        %v923 = vadd.f32 %v910, %v919
        %v924 = vadd.f32 %v911, %v919
        %v925 = vadd.f32 %v912, %v919
        %v926 = vadd.f32 %v913, %v919
        %v927 = vadd.f32 %v914, %v919
        %v928 = vld [vmem:[%s3] sm:$0xff]
        %v929 = vld [vmem:[%s3 + $0x8] sm:$0xff]
        %v930 = vld [vmem:[%s3 + $0x10] sm:$0xff]
        %v931 = vld [vmem:[%s3 + $0x18] sm:$0xff]
        %v932 = vld [vmem:[%s3 + $0x20] sm:$0xff]
        %v933 = vld [vmem:[%s3 + $0x28] sm:$0xff]
        %v934 = vld [vmem:[%s3 + $0x30] sm:$0xff]
        %v935 = vld [vmem:[%s3 + $0x38] sm:$0xff]
        %v937 = vsel %vm276, %v928, 0
        %v940 = vsel %vm276, %v929, 0
        %v943 = vsel %vm276, %v930, 0
        %v946 = vsel %vm276, %v931, 0
        %v949 = vsel %vm276, %v932, 0
        %v952 = vsel %vm276, %v933, 0
        %v955 = vsel %vm276, %v934, 0
        %v958 = vsel %vm276, %v935, 0
        %960 = vmatprep.subr.mxu0 0.0
        %961 = vmatpush1.msra.mxu0 0.0
        %962 = vmatprep.subr.mxu0 0.0
        %963 = vmatpush1.msra.mxu0 0.0
        %964 = vmatprep.subr.mxu0 0.0
        %965 = vmatpush1.msra.mxu0 0.0
        %966 = vmatprep.subr.mxu0 0.0
        %967 = vmatpush1.msra.mxu0 0.0
        %968 = vmatprep.subr.mxu0 0.0
        %969 = vmatpush1.msra.mxu0 0.0
        %970 = vmatprep.subr.mxu0 0.0
        %971 = vmatpush1.msra.mxu0 0.0
        %972 = vmatprep.subr.mxu0 0.0
        %973 = vmatpush1.msra.mxu0 0.0
        %974 = vmatprep.subr.mxu0 0.0
        %975 = vmatpush1.msra.mxu0 0.0
        %976 = vmatprep.subr.mxu0 0.0
        %977 = vmatpush1.msra.mxu0 %v271
        %978 = vmatprep.subr.mxu0 0.0
        %979 = vmatpush1.msra.mxu0 %v270
        %980 = vmatprep.subr.mxu0 0.0
        %981 = vmatpush1.msra.mxu0 %v269
        %982 = vmatprep.subr.mxu0 0.0
        %983 = vmatpush1.msra.mxu0 %v268
        %984 = vmatprep.subr.mxu0 0.0
        %985 = vmatpush1.msra.mxu0 %v267
        %986 = vmatprep.subr.mxu0 0.0
        %987 = vmatpush1.msra.mxu0 %v266
        %988 = vmatprep.subr.mxu0 0.0
        %989 = vmatpush1.msra.mxu0 %v265
        %990 = vmatprep.subr.mxu0 0.0
        %991 = vmatpush1.msra.mxu0 %v264
        %992 = vmatprep.subr.mxu0 0.0
        %993 = vmatpush2.msra.mxu0 0.0
        %994 = vmatprep.subr.mxu0 0.0
        %995 = vmatpush2.msra.mxu0 0.0
        %996 = vmatprep.subr.mxu0 0.0
        %997 = vmatpush2.msra.mxu0 0.0
        %998 = vmatprep.subr.mxu0 0.0
        %999 = vmatpush2.msra.mxu0 0.0
        %1000 = vmatprep.subr.mxu0 0.0
        %1001 = vmatpush2.msra.mxu0 0.0
        %1002 = vmatprep.subr.mxu0 0.0
        %1003 = vmatpush2.msra.mxu0 0.0
        %1004 = vmatprep.subr.mxu0 0.0
        %1005 = vmatpush2.msra.mxu0 0.0
        %1006 = vmatprep.subr.mxu0 0.0
        %1007 = vmatpush2.msra.mxu0 0.0
        %1008 = vmatprep.subr.mxu0 0.0
        %1009 = vmatpush2.msra.mxu0 0.0
        %1010 = vmatprep.subr.mxu0 0.0
        %1011 = vmatpush2.msra.mxu0 0.0
        %1012 = vmatprep.subr.mxu0 0.0
        %1013 = vmatpush2.msra.mxu0 0.0
        %1014 = vmatprep.subr.mxu0 0.0
        %1015 = vmatpush2.msra.mxu0 0.0
        %1016 = vmatprep.subr.mxu0 0.0
        %1017 = vmatpush2.msra.mxu0 0.0
        %1018 = vmatprep.subr.mxu0 0.0
        %1019 = vmatpush2.msra.mxu0 0.0
        %1020 = vmatprep.subr.mxu0 0.0
        %1021 = vmatpush2.msra.mxu0 0.0
        %1022 = vmatprep.subr.mxu0 0.0
        %1023 = vmatpush2.msra.mxu0 0.0
        %1024 = vmatprep.mubr.f32.mxu0 0.0
        %1025 = vmatmul.mubr.f32.gmra.mxu0 %v937
        %v1026 = vpop.f32.mrf.mxu0
        %v1027 = vadd.f32 0.0, %v1026
        %v1028 = vpop.f32.mrf.mxu0
        %1029 = vmatprep.mubr.f32.mxu0 0.0
        %1030 = vmatmul.mubr.f32.gmra.mxu0 %v940
        %v1031 = vpop.f32.mrf.mxu0
        %v1032 = vadd.f32 0.0, %v1031
        %v1033 = vpop.f32.mrf.mxu0
        %1034 = vmatprep.mubr.f32.mxu0 0.0
        %1035 = vmatmul.mubr.f32.gmra.mxu0 %v943
        %v1036 = vpop.f32.mrf.mxu0
        %v1037 = vadd.f32 0.0, %v1036
        %v1038 = vpop.f32.mrf.mxu0
        %1039 = vmatprep.mubr.f32.mxu0 0.0
        %1040 = vmatmul.mubr.f32.gmra.mxu0 %v946
        %v1041 = vpop.f32.mrf.mxu0
        %v1042 = vadd.f32 0.0, %v1041
        %v1043 = vpop.f32.mrf.mxu0
        %1044 = vmatprep.mubr.f32.mxu0 0.0
        %1045 = vmatmul.mubr.f32.gmra.mxu0 %v949
        %v1046 = vpop.f32.mrf.mxu0
        %v1047 = vadd.f32 0.0, %v1046
        %v1048 = vpop.f32.mrf.mxu0
        %1049 = vmatprep.mubr.f32.mxu0 0.0
        %1050 = vmatmul.mubr.f32.gmra.mxu0 %v952
        %v1051 = vpop.f32.mrf.mxu0
        %v1052 = vadd.f32 0.0, %v1051
        %v1053 = vpop.f32.mrf.mxu0
        %1054 = vmatprep.mubr.f32.mxu0 0.0
        %1055 = vmatmul.mubr.f32.gmra.mxu0 %v955
        %v1056 = vpop.f32.mrf.mxu0
        %v1057 = vadd.f32 0.0, %v1056
        %v1058 = vpop.f32.mrf.mxu0
        %1059 = vmatprep.mubr.f32.mxu0 0.0
        %1060 = vmatmul.mubr.f32.gmra.mxu0 %v958
        %v1061 = vpop.f32.mrf.mxu0
        %v1062 = vadd.f32 0.0, %v1061
        %v1063 = vpop.f32.mrf.mxu0
        %1064 = vdwg.mxu0
        %1065 = vmatprep.subr.mxu0 0.0
        %1066 = vmatpush1.msra.mxu0 0.0
        %1067 = vmatprep.subr.mxu0 0.0
        %1068 = vmatpush1.msra.mxu0 0.0
        %1069 = vmatprep.subr.mxu0 0.0
        %1070 = vmatpush1.msra.mxu0 0.0
        %1071 = vmatprep.subr.mxu0 0.0
        %1072 = vmatpush1.msra.mxu0 0.0
        %1073 = vmatprep.subr.mxu0 0.0
        %1074 = vmatpush1.msra.mxu0 0.0
        %1075 = vmatprep.subr.mxu0 0.0
        %1076 = vmatpush1.msra.mxu0 0.0
        %1077 = vmatprep.subr.mxu0 0.0
        %1078 = vmatpush1.msra.mxu0 0.0
        %1079 = vmatprep.subr.mxu0 0.0
        %1080 = vmatpush1.msra.mxu0 0.0
        %1081 = vmatprep.subr.mxu0 0.0
        %1082 = vmatpush1.msra.mxu0 %v263
        %1083 = vmatprep.subr.mxu0 0.0
        %1084 = vmatpush1.msra.mxu0 %v262
        %1085 = vmatprep.subr.mxu0 0.0
        %1086 = vmatpush1.msra.mxu0 %v261
        %1087 = vmatprep.subr.mxu0 0.0
        %1088 = vmatpush1.msra.mxu0 %v260
        %1089 = vmatprep.subr.mxu0 0.0
        %1090 = vmatpush1.msra.mxu0 %v259
        %1091 = vmatprep.subr.mxu0 0.0
        %1092 = vmatpush1.msra.mxu0 %v258
        %1093 = vmatprep.subr.mxu0 0.0
        %1094 = vmatpush1.msra.mxu0 %v257
        %1095 = vmatprep.subr.mxu0 0.0
        %1096 = vmatpush1.msra.mxu0 %v256
        %1097 = vmatprep.subr.mxu0 0.0
        %1098 = vmatpush2.msra.mxu0 0.0
        %1099 = vmatprep.subr.mxu0 0.0
        %1100 = vmatpush2.msra.mxu0 0.0
        %1101 = vmatprep.subr.mxu0 0.0
        %1102 = vmatpush2.msra.mxu0 0.0
        %1103 = vmatprep.subr.mxu0 0.0
        %1104 = vmatpush2.msra.mxu0 0.0
        %1105 = vmatprep.subr.mxu0 0.0
        %1106 = vmatpush2.msra.mxu0 0.0
        %1107 = vmatprep.subr.mxu0 0.0
        %1108 = vmatpush2.msra.mxu0 0.0
        %1109 = vmatprep.subr.mxu0 0.0
        %1110 = vmatpush2.msra.mxu0 0.0
        %1111 = vmatprep.subr.mxu0 0.0
        %1112 = vmatpush2.msra.mxu0 0.0
        %1113 = vmatprep.subr.mxu0 0.0
        %1114 = vmatpush2.msra.mxu0 0.0
        %1115 = vmatprep.subr.mxu0 0.0
        %1116 = vmatpush2.msra.mxu0 0.0
        %1117 = vmatprep.subr.mxu0 0.0
        %1118 = vmatpush2.msra.mxu0 0.0
        %1119 = vmatprep.subr.mxu0 0.0
        %1120 = vmatpush2.msra.mxu0 0.0
        %1121 = vmatprep.subr.mxu0 0.0
        %1122 = vmatpush2.msra.mxu0 0.0
        %1123 = vmatprep.subr.mxu0 0.0
        %1124 = vmatpush2.msra.mxu0 0.0
        %1125 = vmatprep.subr.mxu0 0.0
        %1126 = vmatpush2.msra.mxu0 0.0
        %1127 = vmatprep.subr.mxu0 0.0
        %1128 = vmatpush2.msra.mxu0 0.0
        %1129 = vmatprep.mubr.f32.mxu0 0.0
        %1130 = vmatmul.mubr.f32.gmra.mxu0 %v937
        %v1131 = vpop.f32.mrf.mxu0
        %v1132 = vadd.f32 0.0, %v1131
        %v1133 = vpop.f32.mrf.mxu0
        %1134 = vmatprep.mubr.f32.mxu0 0.0
        %1135 = vmatmul.mubr.f32.gmra.mxu0 %v940
        %v1136 = vpop.f32.mrf.mxu0
        %v1137 = vadd.f32 0.0, %v1136
        %v1138 = vpop.f32.mrf.mxu0
        %1139 = vmatprep.mubr.f32.mxu0 0.0
        %1140 = vmatmul.mubr.f32.gmra.mxu0 %v943
        %v1141 = vpop.f32.mrf.mxu0
        %v1142 = vadd.f32 0.0, %v1141
        %v1143 = vpop.f32.mrf.mxu0
        %1144 = vmatprep.mubr.f32.mxu0 0.0
        %1145 = vmatmul.mubr.f32.gmra.mxu0 %v946
        %v1146 = vpop.f32.mrf.mxu0
        %v1147 = vadd.f32 0.0, %v1146
        %v1148 = vpop.f32.mrf.mxu0
        %1149 = vmatprep.mubr.f32.mxu0 0.0
        %1150 = vmatmul.mubr.f32.gmra.mxu0 %v949
        %v1151 = vpop.f32.mrf.mxu0
        %v1152 = vadd.f32 0.0, %v1151
        %v1153 = vpop.f32.mrf.mxu0
        %1154 = vmatprep.mubr.f32.mxu0 0.0
        %1155 = vmatmul.mubr.f32.gmra.mxu0 %v952
        %v1156 = vpop.f32.mrf.mxu0
        %v1157 = vadd.f32 0.0, %v1156
        %v1158 = vpop.f32.mrf.mxu0
        %1159 = vmatprep.mubr.f32.mxu0 0.0
        %1160 = vmatmul.mubr.f32.gmra.mxu0 %v955
        %v1161 = vpop.f32.mrf.mxu0
        %v1162 = vadd.f32 0.0, %v1161
        %v1163 = vpop.f32.mrf.mxu0
        %1164 = vmatprep.mubr.f32.mxu0 0.0
        %1165 = vmatmul.mubr.f32.gmra.mxu0 %v958
        %v1166 = vpop.f32.mrf.mxu0
        %v1167 = vadd.f32 0.0, %v1166
        %v1168 = vpop.f32.mrf.mxu0
        %1169 = vdwg.mxu0
        %v1170 = vld [vmem:[%s4 + $0x60] sm:$0xff]
        %v1171 = vld [vmem:[%s4 + $0x68] sm:$0xff]
        %v1172 = vld [vmem:[%s4 + $0x70] sm:$0xff]
        %v1173 = vld [vmem:[%s4 + $0x78] sm:$0xff]
        %v1174 = vld [vmem:[%s4 + $0x80] sm:$0xff]
        %v1175 = vld [vmem:[%s4 + $0x88] sm:$0xff]
        %v1176 = vld [vmem:[%s4 + $0x90] sm:$0xff]
        %v1177 = vld [vmem:[%s4 + $0x98] sm:$0xff]
        %v1179 = vsel %vm410, %v1132, 0
        %v1182 = vsel %vm410, %v1137, 0
        %v1185 = vsel %vm410, %v1142, 0
        %v1188 = vsel %vm410, %v1147, 0
        %v1191 = vsel %vm410, %v1152, 0
        %v1194 = vsel %vm410, %v1157, 0
        %v1197 = vsel %vm410, %v1162, 0
        %v1200 = vsel %vm410, %v1167, 0
        %1202 = vmatprep.subr.mxu0 0.0
        %1203 = vmatpush1.msra.mxu0 0.0
        %1204 = vmatprep.subr.mxu0 0.0
        %1205 = vmatpush1.msra.mxu0 0.0
        %1206 = vmatprep.subr.mxu0 0.0
        %1207 = vmatpush1.msra.mxu0 0.0
        %1208 = vmatprep.subr.mxu0 0.0
        %1209 = vmatpush1.msra.mxu0 0.0
        %1210 = vmatprep.subr.mxu0 0.0
        %1211 = vmatpush1.msra.mxu0 0.0
        %1212 = vmatprep.subr.mxu0 0.0
        %1213 = vmatpush1.msra.mxu0 0.0
        %1214 = vmatprep.subr.mxu0 0.0
        %1215 = vmatpush1.msra.mxu0 0.0
        %1216 = vmatprep.subr.mxu0 0.0
        %1217 = vmatpush1.msra.mxu0 0.0
        %1218 = vmatprep.subr.mxu0 0.0
        %1219 = vmatpush1.msra.mxu0 0.0
        %1220 = vmatprep.subr.mxu0 0.0
        %1221 = vmatpush1.msra.mxu0 0.0
        %1222 = vmatprep.subr.mxu0 0.0
        %1223 = vmatpush1.msra.mxu0 0.0
        %1224 = vmatprep.subr.mxu0 0.0
        %1225 = vmatpush1.msra.mxu0 0.0
        %1226 = vmatprep.subr.mxu0 0.0
        %1227 = vmatpush1.msra.mxu0 %v1177
        %1228 = vmatprep.subr.mxu0 0.0
        %1229 = vmatpush1.msra.mxu0 %v1176
        %1230 = vmatprep.subr.mxu0 0.0
        %1231 = vmatpush1.msra.mxu0 %v1175
        %1232 = vmatprep.subr.mxu0 0.0
        %1233 = vmatpush1.msra.mxu0 %v1174
        %1234 = vmatprep.subr.mxu0 0.0
        %1235 = vmatpush2.msra.mxu0 0.0
        %1236 = vmatprep.subr.mxu0 0.0
        %1237 = vmatpush2.msra.mxu0 0.0
        %1238 = vmatprep.subr.mxu0 0.0
        %1239 = vmatpush2.msra.mxu0 0.0
        %1240 = vmatprep.subr.mxu0 0.0
        %1241 = vmatpush2.msra.mxu0 0.0
        %1242 = vmatprep.subr.mxu0 0.0
        %1243 = vmatpush2.msra.mxu0 0.0
        %1244 = vmatprep.subr.mxu0 0.0
        %1245 = vmatpush2.msra.mxu0 0.0
        %1246 = vmatprep.subr.mxu0 0.0
        %1247 = vmatpush2.msra.mxu0 0.0
        %1248 = vmatprep.subr.mxu0 0.0
        %1249 = vmatpush2.msra.mxu0 0.0
        %1250 = vmatprep.subr.mxu0 0.0
        %1251 = vmatpush2.msra.mxu0 0.0
        %1252 = vmatprep.subr.mxu0 0.0
        %1253 = vmatpush2.msra.mxu0 0.0
        %1254 = vmatprep.subr.mxu0 0.0
        %1255 = vmatpush2.msra.mxu0 0.0
        %1256 = vmatprep.subr.mxu0 0.0
        %1257 = vmatpush2.msra.mxu0 0.0
        %1258 = vmatprep.subr.mxu0 0.0
        %1259 = vmatpush2.msra.mxu0 0.0
        %1260 = vmatprep.subr.mxu0 0.0
        %1261 = vmatpush2.msra.mxu0 0.0
        %1262 = vmatprep.subr.mxu0 0.0
        %1263 = vmatpush2.msra.mxu0 0.0
        %1264 = vmatprep.subr.mxu0 0.0
        %1265 = vmatpush2.msra.mxu0 0.0
        %1266 = vmatprep.mubr.f32.mxu0 0.0
        %1267 = vmatmul.mubr.f32.gmra.mxu0 %v1179
        %v1268 = vpop.f32.mrf.mxu0
        %v1269 = vadd.f32 0.0, %v1268
        %v1270 = vpop.f32.mrf.mxu0
        %1271 = vmatprep.mubr.f32.mxu0 0.0
        %1272 = vmatmul.mubr.f32.gmra.mxu0 %v1182
        %v1273 = vpop.f32.mrf.mxu0
        %v1274 = vadd.f32 0.0, %v1273
        %v1275 = vpop.f32.mrf.mxu0
        %1276 = vmatprep.mubr.f32.mxu0 0.0
        %1277 = vmatmul.mubr.f32.gmra.mxu0 %v1185
        %v1278 = vpop.f32.mrf.mxu0
        %v1279 = vadd.f32 0.0, %v1278
        %v1280 = vpop.f32.mrf.mxu0
        %1281 = vmatprep.mubr.f32.mxu0 0.0
        %1282 = vmatmul.mubr.f32.gmra.mxu0 %v1188
        %v1283 = vpop.f32.mrf.mxu0
        %v1284 = vadd.f32 0.0, %v1283
        %v1285 = vpop.f32.mrf.mxu0
        %1286 = vmatprep.mubr.f32.mxu0 0.0
        %1287 = vmatmul.mubr.f32.gmra.mxu0 %v1191
        %v1288 = vpop.f32.mrf.mxu0
        %v1289 = vadd.f32 0.0, %v1288
        %v1290 = vpop.f32.mrf.mxu0
        %1291 = vmatprep.mubr.f32.mxu0 0.0
        %1292 = vmatmul.mubr.f32.gmra.mxu0 %v1194
        %v1293 = vpop.f32.mrf.mxu0
        %v1294 = vadd.f32 0.0, %v1293
        %v1295 = vpop.f32.mrf.mxu0
        %1296 = vmatprep.mubr.f32.mxu0 0.0
        %1297 = vmatmul.mubr.f32.gmra.mxu0 %v1197
        %v1298 = vpop.f32.mrf.mxu0
        %v1299 = vadd.f32 0.0, %v1298
        %v1300 = vpop.f32.mrf.mxu0
        %1301 = vmatprep.mubr.f32.mxu0 0.0
        %1302 = vmatmul.mubr.f32.gmra.mxu0 %v1200
        %v1303 = vpop.f32.mrf.mxu0
        %v1304 = vadd.f32 0.0, %v1303
        %v1305 = vpop.f32.mrf.mxu0
        %1306 = vdwg.mxu0
        %v1308 = vsel %vm410, %v1027, 0
        %v1311 = vsel %vm410, %v1032, 0
        %v1314 = vsel %vm410, %v1037, 0
        %v1317 = vsel %vm410, %v1042, 0
        %v1320 = vsel %vm410, %v1047, 0
        %v1323 = vsel %vm410, %v1052, 0
        %v1326 = vsel %vm410, %v1057, 0
        %v1329 = vsel %vm410, %v1062, 0
        %1331 = vmatprep.subr.mxu0 0.0
        %1332 = vmatpush1.msra.mxu0 0.0
        %1333 = vmatprep.subr.mxu0 0.0
        %1334 = vmatpush1.msra.mxu0 0.0
        %1335 = vmatprep.subr.mxu0 0.0
        %1336 = vmatpush1.msra.mxu0 0.0
        %1337 = vmatprep.subr.mxu0 0.0
        %1338 = vmatpush1.msra.mxu0 0.0
        %1339 = vmatprep.subr.mxu0 0.0
        %1340 = vmatpush1.msra.mxu0 0.0
        %1341 = vmatprep.subr.mxu0 0.0
        %1342 = vmatpush1.msra.mxu0 0.0
        %1343 = vmatprep.subr.mxu0 0.0
        %1344 = vmatpush1.msra.mxu0 0.0
        %1345 = vmatprep.subr.mxu0 0.0
        %1346 = vmatpush1.msra.mxu0 0.0
        %1347 = vmatprep.subr.mxu0 0.0
        %1348 = vmatpush1.msra.mxu0 0.0
        %1349 = vmatprep.subr.mxu0 0.0
        %1350 = vmatpush1.msra.mxu0 0.0
        %1351 = vmatprep.subr.mxu0 0.0
        %1352 = vmatpush1.msra.mxu0 0.0
        %1353 = vmatprep.subr.mxu0 0.0
        %1354 = vmatpush1.msra.mxu0 0.0
        %1355 = vmatprep.subr.mxu0 0.0
        %1356 = vmatpush1.msra.mxu0 %v1173
        %1357 = vmatprep.subr.mxu0 0.0
        %1358 = vmatpush1.msra.mxu0 %v1172
        %1359 = vmatprep.subr.mxu0 0.0
        %1360 = vmatpush1.msra.mxu0 %v1171
        %1361 = vmatprep.subr.mxu0 0.0
        %1362 = vmatpush1.msra.mxu0 %v1170
        %1363 = vmatprep.subr.mxu0 0.0
        %1364 = vmatpush2.msra.mxu0 0.0
        %1365 = vmatprep.subr.mxu0 0.0
        %1366 = vmatpush2.msra.mxu0 0.0
        %1367 = vmatprep.subr.mxu0 0.0
        %1368 = vmatpush2.msra.mxu0 0.0
        %1369 = vmatprep.subr.mxu0 0.0
        %1370 = vmatpush2.msra.mxu0 0.0
        %1371 = vmatprep.subr.mxu0 0.0
        %1372 = vmatpush2.msra.mxu0 0.0
        %1373 = vmatprep.subr.mxu0 0.0
        %1374 = vmatpush2.msra.mxu0 0.0
        %1375 = vmatprep.subr.mxu0 0.0
        %1376 = vmatpush2.msra.mxu0 0.0
        %1377 = vmatprep.subr.mxu0 0.0
        %1378 = vmatpush2.msra.mxu0 0.0
        %1379 = vmatprep.subr.mxu0 0.0
        %1380 = vmatpush2.msra.mxu0 0.0
        %1381 = vmatprep.subr.mxu0 0.0
        %1382 = vmatpush2.msra.mxu0 0.0
        %1383 = vmatprep.subr.mxu0 0.0
        %1384 = vmatpush2.msra.mxu0 0.0
        %1385 = vmatprep.subr.mxu0 0.0
        %1386 = vmatpush2.msra.mxu0 0.0
        %1387 = vmatprep.subr.mxu0 0.0
        %1388 = vmatpush2.msra.mxu0 0.0
        %1389 = vmatprep.subr.mxu0 0.0
        %1390 = vmatpush2.msra.mxu0 0.0
        %1391 = vmatprep.subr.mxu0 0.0
        %1392 = vmatpush2.msra.mxu0 0.0
        %1393 = vmatprep.subr.mxu0 0.0
        %1394 = vmatpush2.msra.mxu0 0.0
        %1395 = vmatprep.mubr.f32.mxu0 0.0
        %1396 = vmatmul.mubr.f32.gmra.mxu0 %v1308
        %v1397 = vpop.f32.mrf.mxu0
        %v1398 = vadd.f32 %v1269, %v1397
        %v1399 = vpop.f32.mrf.mxu0
        %1400 = vmatprep.mubr.f32.mxu0 0.0
        %1401 = vmatmul.mubr.f32.gmra.mxu0 %v1311
        %v1402 = vpop.f32.mrf.mxu0
        %v1403 = vadd.f32 %v1274, %v1402
        %v1404 = vpop.f32.mrf.mxu0
        %1405 = vmatprep.mubr.f32.mxu0 0.0
        %1406 = vmatmul.mubr.f32.gmra.mxu0 %v1314
        %v1407 = vpop.f32.mrf.mxu0
        %v1408 = vadd.f32 %v1279, %v1407
        %v1409 = vpop.f32.mrf.mxu0
        %1410 = vmatprep.mubr.f32.mxu0 0.0
        %1411 = vmatmul.mubr.f32.gmra.mxu0 %v1317
        %v1412 = vpop.f32.mrf.mxu0
        %v1413 = vadd.f32 %v1284, %v1412
        %v1414 = vpop.f32.mrf.mxu0
        %1415 = vmatprep.mubr.f32.mxu0 0.0
        %1416 = vmatmul.mubr.f32.gmra.mxu0 %v1320
        %v1417 = vpop.f32.mrf.mxu0
        %v1418 = vadd.f32 %v1289, %v1417
        %v1419 = vpop.f32.mrf.mxu0
        %1420 = vmatprep.mubr.f32.mxu0 0.0
        %1421 = vmatmul.mubr.f32.gmra.mxu0 %v1323
        %v1422 = vpop.f32.mrf.mxu0
        %v1423 = vadd.f32 %v1294, %v1422
        %v1424 = vpop.f32.mrf.mxu0
        %1425 = vmatprep.mubr.f32.mxu0 0.0
        %1426 = vmatmul.mubr.f32.gmra.mxu0 %v1326
        %v1427 = vpop.f32.mrf.mxu0
        %v1428 = vadd.f32 %v1299, %v1427
        %v1429 = vpop.f32.mrf.mxu0
        %1430 = vmatprep.mubr.f32.mxu0 0.0
        %1431 = vmatmul.mubr.f32.gmra.mxu0 %v1329
        %v1432 = vpop.f32.mrf.mxu0
        %v1433 = vadd.f32 %v1304, %v1432
        %v1434 = vpop.f32.mrf.mxu0
        %1435 = vdwg.mxu0
        %v1436 = vld [vmem:[%s4 + $0xe0] sm:$0xff]
        %v1437 = vld [vmem:[%s4 + $0xe8] sm:$0xff]
        %v1438 = vld [vmem:[%s4 + $0xf0] sm:$0xff]
        %v1439 = vld [vmem:[%s4 + $0xf8] sm:$0xff]
        %v1440 = vld [vmem:[%s4 + $0x100] sm:$0xff]
        %v1441 = vld [vmem:[%s4 + $0x108] sm:$0xff]
        %v1442 = vld [vmem:[%s4 + $0x110] sm:$0xff]
        %v1443 = vld [vmem:[%s4 + $0x118] sm:$0xff]
        %v1444 = vadd.f32 %v1398, %v1436
        %v1445 = vadd.f32 %v1403, %v1437
        %v1446 = vadd.f32 %v1408, %v1438
        %v1447 = vadd.f32 %v1413, %v1439
        %v1448 = vadd.f32 %v1418, %v1440
        %v1449 = vadd.f32 %v1423, %v1441
        %v1450 = vadd.f32 %v1428, %v1442
        %v1451 = vadd.f32 %v1433, %v1443
        %v1452 = vld [vmem:[%s4 + $0xa0] sm:$0xff]
        %v1453 = vld [vmem:[%s4 + $0xa8] sm:$0xff]
        %v1454 = vld [vmem:[%s4 + $0xb0] sm:$0xff]
        %v1455 = vld [vmem:[%s4 + $0xb8] sm:$0xff]
        %v1456 = vld [vmem:[%s4 + $0xc0] sm:$0xff]
        %v1457 = vld [vmem:[%s4 + $0xc8] sm:$0xff]
        %v1458 = vld [vmem:[%s4 + $0xd0] sm:$0xff]
        %v1459 = vld [vmem:[%s4 + $0xd8] sm:$0xff]
        %v1461 = vsel %vm410, %v1444, 0
        %v1464 = vsel %vm410, %v1445, 0
        %v1467 = vsel %vm410, %v1446, 0
        %v1470 = vsel %vm410, %v1447, 0
        %v1473 = vsel %vm410, %v1448, 0
        %v1476 = vsel %vm410, %v1449, 0
        %v1479 = vsel %vm410, %v1450, 0
        %v1482 = vsel %vm410, %v1451, 0
        %1484 = vmatprep.subr.mxu0 0.0
        %1485 = vmatpush1.msra.mxu0 0.0
        %1486 = vmatprep.subr.mxu0 0.0
        %1487 = vmatpush1.msra.mxu0 0.0
        %1488 = vmatprep.subr.mxu0 0.0
        %1489 = vmatpush1.msra.mxu0 0.0
        %1490 = vmatprep.subr.mxu0 0.0
        %1491 = vmatpush1.msra.mxu0 0.0
        %1492 = vmatprep.subr.mxu0 0.0
        %1493 = vmatpush1.msra.mxu0 0.0
        %1494 = vmatprep.subr.mxu0 0.0
        %1495 = vmatpush1.msra.mxu0 0.0
        %1496 = vmatprep.subr.mxu0 0.0
        %1497 = vmatpush1.msra.mxu0 0.0
        %1498 = vmatprep.subr.mxu0 0.0
        %1499 = vmatpush1.msra.mxu0 0.0
        %1500 = vmatprep.subr.mxu0 0.0
        %1501 = vmatpush1.msra.mxu0 0.0
        %1502 = vmatprep.subr.mxu0 0.0
        %1503 = vmatpush1.msra.mxu0 0.0
        %1504 = vmatprep.subr.mxu0 0.0
        %1505 = vmatpush1.msra.mxu0 0.0
        %1506 = vmatprep.subr.mxu0 0.0
        %1507 = vmatpush1.msra.mxu0 0.0
        %1508 = vmatprep.subr.mxu0 0.0
        %1509 = vmatpush1.msra.mxu0 %v1459
        %1510 = vmatprep.subr.mxu0 0.0
        %1511 = vmatpush1.msra.mxu0 %v1458
        %1512 = vmatprep.subr.mxu0 0.0
        %1513 = vmatpush1.msra.mxu0 %v1457
        %1514 = vmatprep.subr.mxu0 0.0
        %1515 = vmatpush1.msra.mxu0 %v1456
        %1516 = vmatprep.subr.mxu0 0.0
        %1517 = vmatpush2.msra.mxu0 0.0
        %1518 = vmatprep.subr.mxu0 0.0
        %1519 = vmatpush2.msra.mxu0 0.0
        %1520 = vmatprep.subr.mxu0 0.0
        %1521 = vmatpush2.msra.mxu0 0.0
        %1522 = vmatprep.subr.mxu0 0.0
        %1523 = vmatpush2.msra.mxu0 0.0
        %1524 = vmatprep.subr.mxu0 0.0
        %1525 = vmatpush2.msra.mxu0 0.0
        %1526 = vmatprep.subr.mxu0 0.0
        %1527 = vmatpush2.msra.mxu0 0.0
        %1528 = vmatprep.subr.mxu0 0.0
        %1529 = vmatpush2.msra.mxu0 0.0
        %1530 = vmatprep.subr.mxu0 0.0
        %1531 = vmatpush2.msra.mxu0 0.0
        %1532 = vmatprep.subr.mxu0 0.0
        %1533 = vmatpush2.msra.mxu0 0.0
        %1534 = vmatprep.subr.mxu0 0.0
        %1535 = vmatpush2.msra.mxu0 0.0
        %1536 = vmatprep.subr.mxu0 0.0
        %1537 = vmatpush2.msra.mxu0 0.0
        %1538 = vmatprep.subr.mxu0 0.0
        %1539 = vmatpush2.msra.mxu0 0.0
        %1540 = vmatprep.subr.mxu0 0.0
        %1541 = vmatpush2.msra.mxu0 0.0
        %1542 = vmatprep.subr.mxu0 0.0
        %1543 = vmatpush2.msra.mxu0 0.0
        %1544 = vmatprep.subr.mxu0 0.0
        %1545 = vmatpush2.msra.mxu0 0.0
        %1546 = vmatprep.subr.mxu0 0.0
        %1547 = vmatpush2.msra.mxu0 0.0
        %1548 = vmatprep.mubr.f32.mxu0 0.0
        %1549 = vmatmul.mubr.f32.gmra.mxu0 %v1461
        %v1550 = vpop.f32.mrf.mxu0
        %v1551 = vadd.f32 0.0, %v1550
        %v1552 = vpop.f32.mrf.mxu0
        %1553 = vmatprep.mubr.f32.mxu0 0.0
        %1554 = vmatmul.mubr.f32.gmra.mxu0 %v1464
        %v1555 = vpop.f32.mrf.mxu0
        %v1556 = vadd.f32 0.0, %v1555
        %v1557 = vpop.f32.mrf.mxu0
        %1558 = vmatprep.mubr.f32.mxu0 0.0
        %1559 = vmatmul.mubr.f32.gmra.mxu0 %v1467
        %v1560 = vpop.f32.mrf.mxu0
        %v1561 = vadd.f32 0.0, %v1560
        %v1562 = vpop.f32.mrf.mxu0
        %1563 = vmatprep.mubr.f32.mxu0 0.0
        %1564 = vmatmul.mubr.f32.gmra.mxu0 %v1470
        %v1565 = vpop.f32.mrf.mxu0
        %v1566 = vadd.f32 0.0, %v1565
        %v1567 = vpop.f32.mrf.mxu0
        %1568 = vmatprep.mubr.f32.mxu0 0.0
        %1569 = vmatmul.mubr.f32.gmra.mxu0 %v1473
        %v1570 = vpop.f32.mrf.mxu0
        %v1571 = vadd.f32 0.0, %v1570
        %v1572 = vpop.f32.mrf.mxu0
        %1573 = vmatprep.mubr.f32.mxu0 0.0
        %1574 = vmatmul.mubr.f32.gmra.mxu0 %v1476
        %v1575 = vpop.f32.mrf.mxu0
        %v1576 = vadd.f32 0.0, %v1575
        %v1577 = vpop.f32.mrf.mxu0
        %1578 = vmatprep.mubr.f32.mxu0 0.0
        %1579 = vmatmul.mubr.f32.gmra.mxu0 %v1479
        %v1580 = vpop.f32.mrf.mxu0
        %v1581 = vadd.f32 0.0, %v1580
        %v1582 = vpop.f32.mrf.mxu0
        %1583 = vmatprep.mubr.f32.mxu0 0.0
        %1584 = vmatmul.mubr.f32.gmra.mxu0 %v1482
        %v1585 = vpop.f32.mrf.mxu0
        %v1586 = vadd.f32 0.0, %v1585
        %v1587 = vpop.f32.mrf.mxu0
        %1588 = vdwg.mxu0
        %v1590 = vsel %vm410, %v920, 0
        %v1593 = vsel %vm410, %v921, 0
        %v1596 = vsel %vm410, %v922, 0
        %v1599 = vsel %vm410, %v923, 0
        %v1602 = vsel %vm410, %v924, 0
        %v1605 = vsel %vm410, %v925, 0
        %v1608 = vsel %vm410, %v926, 0
        %v1611 = vsel %vm410, %v927, 0
        %1613 = vmatprep.subr.mxu0 0.0
        %1614 = vmatpush1.msra.mxu0 0.0
        %1615 = vmatprep.subr.mxu0 0.0
        %1616 = vmatpush1.msra.mxu0 0.0
        %1617 = vmatprep.subr.mxu0 0.0
        %1618 = vmatpush1.msra.mxu0 0.0
        %1619 = vmatprep.subr.mxu0 0.0
        %1620 = vmatpush1.msra.mxu0 0.0
        %1621 = vmatprep.subr.mxu0 0.0
        %1622 = vmatpush1.msra.mxu0 0.0
        %1623 = vmatprep.subr.mxu0 0.0
        %1624 = vmatpush1.msra.mxu0 0.0
        %1625 = vmatprep.subr.mxu0 0.0
        %1626 = vmatpush1.msra.mxu0 0.0
        %1627 = vmatprep.subr.mxu0 0.0
        %1628 = vmatpush1.msra.mxu0 0.0
        %1629 = vmatprep.subr.mxu0 0.0
        %1630 = vmatpush1.msra.mxu0 0.0
        %1631 = vmatprep.subr.mxu0 0.0
        %1632 = vmatpush1.msra.mxu0 0.0
        %1633 = vmatprep.subr.mxu0 0.0
        %1634 = vmatpush1.msra.mxu0 0.0
        %1635 = vmatprep.subr.mxu0 0.0
        %1636 = vmatpush1.msra.mxu0 0.0
        %1637 = vmatprep.subr.mxu0 0.0
        %1638 = vmatpush1.msra.mxu0 %v1455
        %1639 = vmatprep.subr.mxu0 0.0
        %1640 = vmatpush1.msra.mxu0 %v1454
        %1641 = vmatprep.subr.mxu0 0.0
        %1642 = vmatpush1.msra.mxu0 %v1453
        %1643 = vmatprep.subr.mxu0 0.0
        %1644 = vmatpush1.msra.mxu0 %v1452
        %1645 = vmatprep.subr.mxu0 0.0
        %1646 = vmatpush2.msra.mxu0 0.0
        %1647 = vmatprep.subr.mxu0 0.0
        %1648 = vmatpush2.msra.mxu0 0.0
        %1649 = vmatprep.subr.mxu0 0.0
        %1650 = vmatpush2.msra.mxu0 0.0
        %1651 = vmatprep.subr.mxu0 0.0
        %1652 = vmatpush2.msra.mxu0 0.0
        %1653 = vmatprep.subr.mxu0 0.0
        %1654 = vmatpush2.msra.mxu0 0.0
        %1655 = vmatprep.subr.mxu0 0.0
        %1656 = vmatpush2.msra.mxu0 0.0
        %1657 = vmatprep.subr.mxu0 0.0
        %1658 = vmatpush2.msra.mxu0 0.0
        %1659 = vmatprep.subr.mxu0 0.0
        %1660 = vmatpush2.msra.mxu0 0.0
        %1661 = vmatprep.subr.mxu0 0.0
        %1662 = vmatpush2.msra.mxu0 0.0
        %1663 = vmatprep.subr.mxu0 0.0
        %1664 = vmatpush2.msra.mxu0 0.0
        %1665 = vmatprep.subr.mxu0 0.0
        %1666 = vmatpush2.msra.mxu0 0.0
        %1667 = vmatprep.subr.mxu0 0.0
        %1668 = vmatpush2.msra.mxu0 0.0
        %1669 = vmatprep.subr.mxu0 0.0
        %1670 = vmatpush2.msra.mxu0 0.0
        %1671 = vmatprep.subr.mxu0 0.0
        %1672 = vmatpush2.msra.mxu0 0.0
        %1673 = vmatprep.subr.mxu0 0.0
        %1674 = vmatpush2.msra.mxu0 0.0
        %1675 = vmatprep.subr.mxu0 0.0
        %1676 = vmatpush2.msra.mxu0 0.0
        %1677 = vmatprep.mubr.f32.mxu0 0.0
        %1678 = vmatmul.mubr.f32.gmra.mxu0 %v1590
        %v1679 = vpop.f32.mrf.mxu0
        %v1680 = vadd.f32 %v1551, %v1679
        %v1681 = vpop.f32.mrf.mxu0
        %1682 = vmatprep.mubr.f32.mxu0 0.0
        %1683 = vmatmul.mubr.f32.gmra.mxu0 %v1593
        %v1684 = vpop.f32.mrf.mxu0
        %v1685 = vadd.f32 %v1556, %v1684
        %v1686 = vpop.f32.mrf.mxu0
        %1687 = vmatprep.mubr.f32.mxu0 0.0
        %1688 = vmatmul.mubr.f32.gmra.mxu0 %v1596
        %v1689 = vpop.f32.mrf.mxu0
        %v1690 = vadd.f32 %v1561, %v1689
        %v1691 = vpop.f32.mrf.mxu0
        %1692 = vmatprep.mubr.f32.mxu0 0.0
        %1693 = vmatmul.mubr.f32.gmra.mxu0 %v1599
        %v1694 = vpop.f32.mrf.mxu0
        %v1695 = vadd.f32 %v1566, %v1694
        %v1696 = vpop.f32.mrf.mxu0
        %1697 = vmatprep.mubr.f32.mxu0 0.0
        %1698 = vmatmul.mubr.f32.gmra.mxu0 %v1602
        %v1699 = vpop.f32.mrf.mxu0
        %v1700 = vadd.f32 %v1571, %v1699
        %v1701 = vpop.f32.mrf.mxu0
        %1702 = vmatprep.mubr.f32.mxu0 0.0
        %1703 = vmatmul.mubr.f32.gmra.mxu0 %v1605
        %v1704 = vpop.f32.mrf.mxu0
        %v1705 = vadd.f32 %v1576, %v1704
        %v1706 = vpop.f32.mrf.mxu0
        %1707 = vmatprep.mubr.f32.mxu0 0.0
        %1708 = vmatmul.mubr.f32.gmra.mxu0 %v1608
        %v1709 = vpop.f32.mrf.mxu0
        %v1710 = vadd.f32 %v1581, %v1709
        %v1711 = vpop.f32.mrf.mxu0
        %1712 = vmatprep.mubr.f32.mxu0 0.0
        %1713 = vmatmul.mubr.f32.gmra.mxu0 %v1611
        %v1714 = vpop.f32.mrf.mxu0
        %v1715 = vadd.f32 %v1586, %v1714
        %v1716 = vpop.f32.mrf.mxu0
        %1717 = vdwg.mxu0
        %v1718 = vld [vmem:[%s4 + $0x128] sm:$0x1]
        %v1719 = vlaneseq
        %v1720 = vshrl.u32 %v1719, 7
        %v1721 = vsub.s32 0, %v1720
        %v1722 = vrot.slane %v1718, %v1721
        %v1723 = vadd.f32 %v1680, %v1722
        %v1724 = vadd.f32 %v1685, %v1722
        %v1725 = vadd.f32 %v1690, %v1722
        %v1726 = vadd.f32 %v1695, %v1722
        %v1727 = vadd.f32 %v1700, %v1722
        %v1728 = vadd.f32 %v1705, %v1722
        %v1729 = vadd.f32 %v1710, %v1722
        %v1730 = vadd.f32 %v1715, %v1722
        %v1731 = vxor.u32 %v1723, 2147483648
        %v1732 = vxor.u32 %v1724, 2147483648
        %v1733 = vxor.u32 %v1725, 2147483648
        %v1734 = vxor.u32 %v1726, 2147483648
        %v1735 = vxor.u32 %v1727, 2147483648
        %v1736 = vxor.u32 %v1728, 2147483648
        %v1737 = vxor.u32 %v1729, 2147483648
        %v1738 = vxor.u32 %v1730, 2147483648
        %v1739 = vmul.f32 %v1731, 1.442695
        %v1740 = vpow.pop %v1739
        %v1741 = vmul.f32 %v1732, 1.442695
        %v1742 = vpow.pop %v1741
        %v1743 = vmul.f32 %v1733, 1.442695
        %v1744 = vpow.pop %v1743
        %v1745 = vmul.f32 %v1734, 1.442695
        %v1746 = vpow.pop %v1745
        %v1747 = vmul.f32 %v1735, 1.442695
        %v1748 = vpow.pop %v1747
        %v1749 = vmul.f32 %v1736, 1.442695
        %v1750 = vpow.pop %v1749
        %v1751 = vmul.f32 %v1737, 1.442695
        %v1752 = vpow.pop %v1751
        %v1753 = vmul.f32 %v1738, 1.442695
        %v1754 = vpow.pop %v1753
        %v1755 = vadd.f32 %v1740, 1.0
        %v1756 = vadd.f32 %v1742, 1.0
        %v1757 = vadd.f32 %v1744, 1.0
        %v1758 = vadd.f32 %v1746, 1.0
        %v1759 = vadd.f32 %v1748, 1.0
        %v1760 = vadd.f32 %v1750, 1.0
        %v1761 = vadd.f32 %v1752, 1.0
        %v1762 = vadd.f32 %v1754, 1.0
        %v1763 = vrcp.pop %v1755
        %v1764 = vmul.f32 1.0, %v1763
        %v1765 = vrcp.pop %v1756
        %v1766 = vmul.f32 1.0, %v1765
        %v1767 = vrcp.pop %v1757
        %v1768 = vmul.f32 1.0, %v1767
        %v1769 = vrcp.pop %v1758
        %v1770 = vmul.f32 1.0, %v1769
        %v1771 = vrcp.pop %v1759
        %v1772 = vmul.f32 1.0, %v1771
        %v1773 = vrcp.pop %v1760
        %v1774 = vmul.f32 1.0, %v1773
        %v1775 = vrcp.pop %v1761
        %v1776 = vmul.f32 1.0, %v1775
        %v1777 = vrcp.pop %v1762
        %v1778 = vmul.f32 1.0, %v1777
        %v1779 = vmul.f32 %v1764, %v920
        %v1780 = vmul.f32 %v1766, %v921
        %v1781 = vmul.f32 %v1768, %v922
        %v1782 = vmul.f32 %v1770, %v923
        %v1783 = vmul.f32 %v1772, %v924
        %v1784 = vmul.f32 %v1774, %v925
        %v1785 = vmul.f32 %v1776, %v926
        %v1786 = vmul.f32 %v1778, %v927
        %v1787 = vsub.f32 1.0, %v1764
        %v1788 = vsub.f32 1.0, %v1766
        %v1789 = vsub.f32 1.0, %v1768
        %v1790 = vsub.f32 1.0, %v1770
        %v1791 = vsub.f32 1.0, %v1772
        %v1792 = vsub.f32 1.0, %v1774
        %v1793 = vsub.f32 1.0, %v1776
        %v1794 = vsub.f32 1.0, %v1778
        %v1795 = vmul.f32 %v1787, %v1444
        %v1796 = vmul.f32 %v1788, %v1445
        %v1797 = vmul.f32 %v1789, %v1446
        %v1798 = vmul.f32 %v1790, %v1447
        %v1799 = vmul.f32 %v1791, %v1448
        %v1800 = vmul.f32 %v1792, %v1449
        %v1801 = vmul.f32 %v1793, %v1450
        %v1802 = vmul.f32 %v1794, %v1451
        %v1803 = vadd.f32 %v1779, %v1795
        %v1804 = vadd.f32 %v1780, %v1796
        %v1805 = vadd.f32 %v1781, %v1797
        %v1806 = vadd.f32 %v1782, %v1798
        %v1807 = vadd.f32 %v1783, %v1799
        %v1808 = vadd.f32 %v1784, %v1800
        %v1809 = vadd.f32 %v1785, %v1801
        %v1810 = vadd.f32 %v1786, %v1802
        %v1811 = vadd.f32 %v1803, %v264
        %v1812 = vadd.f32 %v1804, %v265
        %v1813 = vadd.f32 %v1805, %v266
        %v1814 = vadd.f32 %v1806, %v267
        %v1815 = vadd.f32 %v1807, %v268
        %v1816 = vadd.f32 %v1808, %v269
        %v1817 = vadd.f32 %v1809, %v270
        %v1818 = vadd.f32 %v1810, %v271
        %v1819 = vadd.f32 %v264, %v1811
        %v1820 = vadd.f32 %v265, %v1812
        %v1821 = vadd.f32 %v266, %v1813
        %v1822 = vadd.f32 %v267, %v1814
        %v1823 = vadd.f32 %v268, %v1815
        %v1824 = vadd.f32 %v269, %v1816
        %v1825 = vadd.f32 %v270, %v1817
        %v1826 = vadd.f32 %v271, %v1818
        %v1827 = vld [vmem:[%s4 + $0x130] sm:$0xff]
        %v1828 = vld [vmem:[%s4 + $0x138] sm:$0xff]
        %v1829 = vld [vmem:[%s4 + $0x140] sm:$0xff]
        %v1830 = vld [vmem:[%s4 + $0x148] sm:$0xff]
        %1831 = vmatprep.subr.mxu0 0.0
        %1832 = vmatpush1.msra.mxu0 0.0
        %1833 = vmatprep.subr.mxu0 0.0
        %1834 = vmatpush1.msra.mxu0 0.0
        %1835 = vmatprep.subr.mxu0 0.0
        %1836 = vmatpush1.msra.mxu0 0.0
        %1837 = vmatprep.subr.mxu0 0.0
        %1838 = vmatpush1.msra.mxu0 0.0
        %1839 = vmatprep.subr.mxu0 0.0
        %1840 = vmatpush1.msra.mxu0 0.0
        %1841 = vmatprep.subr.mxu0 0.0
        %1842 = vmatpush1.msra.mxu0 0.0
        %1843 = vmatprep.subr.mxu0 0.0
        %1844 = vmatpush1.msra.mxu0 0.0
        %1845 = vmatprep.subr.mxu0 0.0
        %1846 = vmatpush1.msra.mxu0 0.0
        %1847 = vmatprep.subr.mxu0 0.0
        %1848 = vmatpush1.msra.mxu0 %v1818
        %1849 = vmatprep.subr.mxu0 0.0
        %1850 = vmatpush1.msra.mxu0 %v1817
        %1851 = vmatprep.subr.mxu0 0.0
        %1852 = vmatpush1.msra.mxu0 %v1816
        %1853 = vmatprep.subr.mxu0 0.0
        %1854 = vmatpush1.msra.mxu0 %v1815
        %1855 = vmatprep.subr.mxu0 0.0
        %1856 = vmatpush1.msra.mxu0 %v1814
        %1857 = vmatprep.subr.mxu0 0.0
        %1858 = vmatpush1.msra.mxu0 %v1813
        %1859 = vmatprep.subr.mxu0 0.0
        %1860 = vmatpush1.msra.mxu0 %v1812
        %1861 = vmatprep.subr.mxu0 0.0
        %1862 = vmatpush1.msra.mxu0 %v1811
        %1863 = vmatprep.subr.mxu0 0.0
        %1864 = vmatpush2.msra.mxu0 0.0
        %1865 = vmatprep.subr.mxu0 0.0
        %1866 = vmatpush2.msra.mxu0 0.0
        %1867 = vmatprep.subr.mxu0 0.0
        %1868 = vmatpush2.msra.mxu0 0.0
        %1869 = vmatprep.subr.mxu0 0.0
        %1870 = vmatpush2.msra.mxu0 0.0
        %1871 = vmatprep.subr.mxu0 0.0
        %1872 = vmatpush2.msra.mxu0 0.0
        %1873 = vmatprep.subr.mxu0 0.0
        %1874 = vmatpush2.msra.mxu0 0.0
        %1875 = vmatprep.subr.mxu0 0.0
        %1876 = vmatpush2.msra.mxu0 0.0
        %1877 = vmatprep.subr.mxu0 0.0
        %1878 = vmatpush2.msra.mxu0 0.0
        %1879 = vmatprep.subr.mxu0 0.0
        %1880 = vmatpush2.msra.mxu0 0.0
        %1881 = vmatprep.subr.mxu0 0.0
        %1882 = vmatpush2.msra.mxu0 0.0
        %1883 = vmatprep.subr.mxu0 0.0
        %1884 = vmatpush2.msra.mxu0 0.0
        %1885 = vmatprep.subr.mxu0 0.0
        %1886 = vmatpush2.msra.mxu0 0.0
        %1887 = vmatprep.subr.mxu0 0.0
        %1888 = vmatpush2.msra.mxu0 0.0
        %1889 = vmatprep.subr.mxu0 0.0
        %1890 = vmatpush2.msra.mxu0 0.0
        %1891 = vmatprep.subr.mxu0 0.0
        %1892 = vmatpush2.msra.mxu0 0.0
        %1893 = vmatprep.subr.mxu0 0.0
        %1894 = vmatpush2.msra.mxu0 0.0
        %1895 = vmatprep.mubr.f32.mxu0 0.0
        %1896 = vmatmul.mubr.f32.gmra.mxu0 %v278
        %v1897 = vpop.f32.mrf.mxu0
        %v1898 = vadd.f32 0.0, %v1897
        %v1899 = vpop.f32.mrf.mxu0
        %1900 = vmatprep.mubr.f32.mxu0 0.0
        %1901 = vmatmul.mubr.f32.gmra.mxu0 %v281
        %v1902 = vpop.f32.mrf.mxu0
        %v1903 = vadd.f32 0.0, %v1902
        %v1904 = vpop.f32.mrf.mxu0
        %1905 = vmatprep.mubr.f32.mxu0 0.0
        %1906 = vmatmul.mubr.f32.gmra.mxu0 %v284
        %v1907 = vpop.f32.mrf.mxu0
        %v1908 = vadd.f32 0.0, %v1907
        %v1909 = vpop.f32.mrf.mxu0
        %1910 = vmatprep.mubr.f32.mxu0 0.0
        %1911 = vmatmul.mubr.f32.gmra.mxu0 %v287
        %v1912 = vpop.f32.mrf.mxu0
        %v1913 = vadd.f32 0.0, %v1912
        %v1914 = vpop.f32.mrf.mxu0
        %1915 = vmatprep.mubr.f32.mxu0 0.0
        %1916 = vmatmul.mubr.f32.gmra.mxu0 %v290
        %v1917 = vpop.f32.mrf.mxu0
        %v1918 = vadd.f32 0.0, %v1917
        %v1919 = vpop.f32.mrf.mxu0
        %1920 = vmatprep.mubr.f32.mxu0 0.0
        %1921 = vmatmul.mubr.f32.gmra.mxu0 %v293
        %v1922 = vpop.f32.mrf.mxu0
        %v1923 = vadd.f32 0.0, %v1922
        %v1924 = vpop.f32.mrf.mxu0
        %1925 = vmatprep.mubr.f32.mxu0 0.0
        %1926 = vmatmul.mubr.f32.gmra.mxu0 %v296
        %v1927 = vpop.f32.mrf.mxu0
        %v1928 = vadd.f32 0.0, %v1927
        %v1929 = vpop.f32.mrf.mxu0
        %1930 = vmatprep.mubr.f32.mxu0 0.0
        %1931 = vmatmul.mubr.f32.gmra.mxu0 %v299
        %v1932 = vpop.f32.mrf.mxu0
        %v1933 = vadd.f32 0.0, %v1932
        %v1934 = vpop.f32.mrf.mxu0
        %1935 = vdwg.mxu0
        %v1936 = vld [vmem:[%s4 + $0x150] sm:$0xff]
        %v1937 = vld [vmem:[%s4 + $0x158] sm:$0xff]
        %v1938 = vld [vmem:[%s4 + $0x160] sm:$0xff]
        %v1939 = vld [vmem:[%s4 + $0x168] sm:$0xff]
        %v1941 = vsel %vm410, %v1898, 0
        %v1944 = vsel %vm410, %v1903, 0
        %v1947 = vsel %vm410, %v1908, 0
        %v1950 = vsel %vm410, %v1913, 0
        %v1953 = vsel %vm410, %v1918, 0
        %v1956 = vsel %vm410, %v1923, 0
        %v1959 = vsel %vm410, %v1928, 0
        %v1962 = vsel %vm410, %v1933, 0
        %1964 = vmatprep.subr.mxu0 0.0
        %1965 = vmatpush1.msra.mxu0 0.0
        %1966 = vmatprep.subr.mxu0 0.0
        %1967 = vmatpush1.msra.mxu0 0.0
        %1968 = vmatprep.subr.mxu0 0.0
        %1969 = vmatpush1.msra.mxu0 0.0
        %1970 = vmatprep.subr.mxu0 0.0
        %1971 = vmatpush1.msra.mxu0 0.0
        %1972 = vmatprep.subr.mxu0 0.0
        %1973 = vmatpush1.msra.mxu0 0.0
        %1974 = vmatprep.subr.mxu0 0.0
        %1975 = vmatpush1.msra.mxu0 0.0
        %1976 = vmatprep.subr.mxu0 0.0
        %1977 = vmatpush1.msra.mxu0 0.0
        %1978 = vmatprep.subr.mxu0 0.0
        %1979 = vmatpush1.msra.mxu0 0.0
        %1980 = vmatprep.subr.mxu0 0.0
        %1981 = vmatpush1.msra.mxu0 0.0
        %1982 = vmatprep.subr.mxu0 0.0
        %1983 = vmatpush1.msra.mxu0 0.0
        %1984 = vmatprep.subr.mxu0 0.0
        %1985 = vmatpush1.msra.mxu0 0.0
        %1986 = vmatprep.subr.mxu0 0.0
        %1987 = vmatpush1.msra.mxu0 0.0
        %1988 = vmatprep.subr.mxu0 0.0
        %1989 = vmatpush1.msra.mxu0 %v1939
        %1990 = vmatprep.subr.mxu0 0.0
        %1991 = vmatpush1.msra.mxu0 %v1938
        %1992 = vmatprep.subr.mxu0 0.0
        %1993 = vmatpush1.msra.mxu0 %v1937
        %1994 = vmatprep.subr.mxu0 0.0
        %1995 = vmatpush1.msra.mxu0 %v1936
        %1996 = vmatprep.subr.mxu0 0.0
        %1997 = vmatpush2.msra.mxu0 0.0
        %1998 = vmatprep.subr.mxu0 0.0
        %1999 = vmatpush2.msra.mxu0 0.0
        %2000 = vmatprep.subr.mxu0 0.0
        %2001 = vmatpush2.msra.mxu0 0.0
        %2002 = vmatprep.subr.mxu0 0.0
        %2003 = vmatpush2.msra.mxu0 0.0
        %2004 = vmatprep.subr.mxu0 0.0
        %2005 = vmatpush2.msra.mxu0 0.0
        %2006 = vmatprep.subr.mxu0 0.0
        %2007 = vmatpush2.msra.mxu0 0.0
        %2008 = vmatprep.subr.mxu0 0.0
        %2009 = vmatpush2.msra.mxu0 0.0
        %2010 = vmatprep.subr.mxu0 0.0
        %2011 = vmatpush2.msra.mxu0 0.0
        %2012 = vmatprep.subr.mxu0 0.0
        %2013 = vmatpush2.msra.mxu0 0.0
        %2014 = vmatprep.subr.mxu0 0.0
        %2015 = vmatpush2.msra.mxu0 0.0
        %2016 = vmatprep.subr.mxu0 0.0
        %2017 = vmatpush2.msra.mxu0 0.0
        %2018 = vmatprep.subr.mxu0 0.0
        %2019 = vmatpush2.msra.mxu0 0.0
        %2020 = vmatprep.subr.mxu0 0.0
        %2021 = vmatpush2.msra.mxu0 0.0
        %2022 = vmatprep.subr.mxu0 0.0
        %2023 = vmatpush2.msra.mxu0 0.0
        %2024 = vmatprep.subr.mxu0 0.0
        %2025 = vmatpush2.msra.mxu0 0.0
        %2026 = vmatprep.subr.mxu0 0.0
        %2027 = vmatpush2.msra.mxu0 0.0
        %2028 = vmatprep.mubr.f32.mxu0 0.0
        %2029 = vmatmul.mubr.f32.gmra.mxu0 %v1941
        %v2030 = vpop.f32.mrf.mxu0
        %v2031 = vadd.f32 0.0, %v2030
        %v2032 = vpop.f32.mrf.mxu0
        %2033 = vmatprep.mubr.f32.mxu0 0.0
        %2034 = vmatmul.mubr.f32.gmra.mxu0 %v1944
        %v2035 = vpop.f32.mrf.mxu0
        %v2036 = vadd.f32 0.0, %v2035
        %v2037 = vpop.f32.mrf.mxu0
        %2038 = vmatprep.mubr.f32.mxu0 0.0
        %2039 = vmatmul.mubr.f32.gmra.mxu0 %v1947
        %v2040 = vpop.f32.mrf.mxu0
        %v2041 = vadd.f32 0.0, %v2040
        %v2042 = vpop.f32.mrf.mxu0
        %2043 = vmatprep.mubr.f32.mxu0 0.0
        %2044 = vmatmul.mubr.f32.gmra.mxu0 %v1950
        %v2045 = vpop.f32.mrf.mxu0
        %v2046 = vadd.f32 0.0, %v2045
        %v2047 = vpop.f32.mrf.mxu0
        %2048 = vmatprep.mubr.f32.mxu0 0.0
        %2049 = vmatmul.mubr.f32.gmra.mxu0 %v1953
        %v2050 = vpop.f32.mrf.mxu0
        %v2051 = vadd.f32 0.0, %v2050
        %v2052 = vpop.f32.mrf.mxu0
        %2053 = vmatprep.mubr.f32.mxu0 0.0
        %2054 = vmatmul.mubr.f32.gmra.mxu0 %v1956
        %v2055 = vpop.f32.mrf.mxu0
        %v2056 = vadd.f32 0.0, %v2055
        %v2057 = vpop.f32.mrf.mxu0
        %2058 = vmatprep.mubr.f32.mxu0 0.0
        %2059 = vmatmul.mubr.f32.gmra.mxu0 %v1959
        %v2060 = vpop.f32.mrf.mxu0
        %v2061 = vadd.f32 0.0, %v2060
        %v2062 = vpop.f32.mrf.mxu0
        %2063 = vmatprep.mubr.f32.mxu0 0.0
        %2064 = vmatmul.mubr.f32.gmra.mxu0 %v1962
        %v2065 = vpop.f32.mrf.mxu0
        %v2066 = vadd.f32 0.0, %v2065
        %v2067 = vpop.f32.mrf.mxu0
        %2068 = vdwg.mxu0
        %v2070 = vsel %vm410, %v1811, 0
        %v2073 = vsel %vm410, %v1812, 0
        %v2076 = vsel %vm410, %v1813, 0
        %v2079 = vsel %vm410, %v1814, 0
        %v2082 = vsel %vm410, %v1815, 0
        %v2085 = vsel %vm410, %v1816, 0
        %v2088 = vsel %vm410, %v1817, 0
        %v2091 = vsel %vm410, %v1818, 0
        %2093 = vmatprep.subr.mxu0 0.0
        %2094 = vmatpush1.msra.mxu0 0.0
        %2095 = vmatprep.subr.mxu0 0.0
        %2096 = vmatpush1.msra.mxu0 0.0
        %2097 = vmatprep.subr.mxu0 0.0
        %2098 = vmatpush1.msra.mxu0 0.0
        %2099 = vmatprep.subr.mxu0 0.0
        %2100 = vmatpush1.msra.mxu0 0.0
        %2101 = vmatprep.subr.mxu0 0.0
        %2102 = vmatpush1.msra.mxu0 0.0
        %2103 = vmatprep.subr.mxu0 0.0
        %2104 = vmatpush1.msra.mxu0 0.0
        %2105 = vmatprep.subr.mxu0 0.0
        %2106 = vmatpush1.msra.mxu0 0.0
        %2107 = vmatprep.subr.mxu0 0.0
        %2108 = vmatpush1.msra.mxu0 0.0
        %2109 = vmatprep.subr.mxu0 0.0
        %2110 = vmatpush1.msra.mxu0 0.0
        %2111 = vmatprep.subr.mxu0 0.0
        %2112 = vmatpush1.msra.mxu0 0.0
        %2113 = vmatprep.subr.mxu0 0.0
        %2114 = vmatpush1.msra.mxu0 0.0
        %2115 = vmatprep.subr.mxu0 0.0
        %2116 = vmatpush1.msra.mxu0 0.0
        %2117 = vmatprep.subr.mxu0 0.0
        %2118 = vmatpush1.msra.mxu0 %v1830
        %2119 = vmatprep.subr.mxu0 0.0
        %2120 = vmatpush1.msra.mxu0 %v1829
        %2121 = vmatprep.subr.mxu0 0.0
        %2122 = vmatpush1.msra.mxu0 %v1828
        %2123 = vmatprep.subr.mxu0 0.0
        %2124 = vmatpush1.msra.mxu0 %v1827
        %2125 = vmatprep.subr.mxu0 0.0
        %2126 = vmatpush2.msra.mxu0 0.0
        %2127 = vmatprep.subr.mxu0 0.0
        %2128 = vmatpush2.msra.mxu0 0.0
        %2129 = vmatprep.subr.mxu0 0.0
        %2130 = vmatpush2.msra.mxu0 0.0
        %2131 = vmatprep.subr.mxu0 0.0
        %2132 = vmatpush2.msra.mxu0 0.0
        %2133 = vmatprep.subr.mxu0 0.0
        %2134 = vmatpush2.msra.mxu0 0.0
        %2135 = vmatprep.subr.mxu0 0.0
        %2136 = vmatpush2.msra.mxu0 0.0
        %2137 = vmatprep.subr.mxu0 0.0
        %2138 = vmatpush2.msra.mxu0 0.0
        %2139 = vmatprep.subr.mxu0 0.0
        %2140 = vmatpush2.msra.mxu0 0.0
        %2141 = vmatprep.subr.mxu0 0.0
        %2142 = vmatpush2.msra.mxu0 0.0
        %2143 = vmatprep.subr.mxu0 0.0
        %2144 = vmatpush2.msra.mxu0 0.0
        %2145 = vmatprep.subr.mxu0 0.0
        %2146 = vmatpush2.msra.mxu0 0.0
        %2147 = vmatprep.subr.mxu0 0.0
        %2148 = vmatpush2.msra.mxu0 0.0
        %2149 = vmatprep.subr.mxu0 0.0
        %2150 = vmatpush2.msra.mxu0 0.0
        %2151 = vmatprep.subr.mxu0 0.0
        %2152 = vmatpush2.msra.mxu0 0.0
        %2153 = vmatprep.subr.mxu0 0.0
        %2154 = vmatpush2.msra.mxu0 0.0
        %2155 = vmatprep.subr.mxu0 0.0
        %2156 = vmatpush2.msra.mxu0 0.0
        %2157 = vmatprep.mubr.f32.mxu0 0.0
        %2158 = vmatmul.mubr.f32.gmra.mxu0 %v2070
        %v2159 = vpop.f32.mrf.mxu0
        %v2160 = vadd.f32 %v2031, %v2159
        %v2161 = vpop.f32.mrf.mxu0
        %2162 = vmatprep.mubr.f32.mxu0 0.0
        %2163 = vmatmul.mubr.f32.gmra.mxu0 %v2073
        %v2164 = vpop.f32.mrf.mxu0
        %v2165 = vadd.f32 %v2036, %v2164
        %v2166 = vpop.f32.mrf.mxu0
        %2167 = vmatprep.mubr.f32.mxu0 0.0
        %2168 = vmatmul.mubr.f32.gmra.mxu0 %v2076
        %v2169 = vpop.f32.mrf.mxu0
        %v2170 = vadd.f32 %v2041, %v2169
        %v2171 = vpop.f32.mrf.mxu0
        %2172 = vmatprep.mubr.f32.mxu0 0.0
        %2173 = vmatmul.mubr.f32.gmra.mxu0 %v2079
        %v2174 = vpop.f32.mrf.mxu0
        %v2175 = vadd.f32 %v2046, %v2174
        %v2176 = vpop.f32.mrf.mxu0
        %2177 = vmatprep.mubr.f32.mxu0 0.0
        %2178 = vmatmul.mubr.f32.gmra.mxu0 %v2082
        %v2179 = vpop.f32.mrf.mxu0
        %v2180 = vadd.f32 %v2051, %v2179
        %v2181 = vpop.f32.mrf.mxu0
        %2182 = vmatprep.mubr.f32.mxu0 0.0
        %2183 = vmatmul.mubr.f32.gmra.mxu0 %v2085
        %v2184 = vpop.f32.mrf.mxu0
        %v2185 = vadd.f32 %v2056, %v2184
        %v2186 = vpop.f32.mrf.mxu0
        %2187 = vmatprep.mubr.f32.mxu0 0.0
        %2188 = vmatmul.mubr.f32.gmra.mxu0 %v2088
        %v2189 = vpop.f32.mrf.mxu0
        %v2190 = vadd.f32 %v2061, %v2189
        %v2191 = vpop.f32.mrf.mxu0
        %2192 = vmatprep.mubr.f32.mxu0 0.0
        %2193 = vmatmul.mubr.f32.gmra.mxu0 %v2091
        %v2194 = vpop.f32.mrf.mxu0
        %v2195 = vadd.f32 %v2066, %v2194
        %v2196 = vpop.f32.mrf.mxu0
        %2197 = vdwg.mxu0
        %2198 = vmatprep.subr.mxu0 0.0
        %2199 = vmatpush1.msra.mxu0 0.0
        %2200 = vmatprep.subr.mxu0 0.0
        %2201 = vmatpush1.msra.mxu0 0.0
        %2202 = vmatprep.subr.mxu0 0.0
        %2203 = vmatpush1.msra.mxu0 0.0
        %2204 = vmatprep.subr.mxu0 0.0
        %2205 = vmatpush1.msra.mxu0 0.0
        %2206 = vmatprep.subr.mxu0 0.0
        %2207 = vmatpush1.msra.mxu0 0.0
        %2208 = vmatprep.subr.mxu0 0.0
        %2209 = vmatpush1.msra.mxu0 0.0
        %2210 = vmatprep.subr.mxu0 0.0
        %2211 = vmatpush1.msra.mxu0 0.0
        %2212 = vmatprep.subr.mxu0 0.0
        %2213 = vmatpush1.msra.mxu0 0.0
        %2214 = vmatprep.subr.mxu0 0.0
        %2215 = vmatpush1.msra.mxu0 %v1933
        %2216 = vmatprep.subr.mxu0 0.0
        %2217 = vmatpush1.msra.mxu0 %v1928
        %2218 = vmatprep.subr.mxu0 0.0
        %2219 = vmatpush1.msra.mxu0 %v1923
        %2220 = vmatprep.subr.mxu0 0.0
        %2221 = vmatpush1.msra.mxu0 %v1918
        %2222 = vmatprep.subr.mxu0 0.0
        %2223 = vmatpush1.msra.mxu0 %v1913
        %2224 = vmatprep.subr.mxu0 0.0
        %2225 = vmatpush1.msra.mxu0 %v1908
        %2226 = vmatprep.subr.mxu0 0.0
        %2227 = vmatpush1.msra.mxu0 %v1903
        %2228 = vmatprep.subr.mxu0 0.0
        %2229 = vmatpush1.msra.mxu0 %v1898
        %2230 = vmatprep.subr.mxu0 0.0
        %2231 = vmatpush2.msra.mxu0 0.0
        %2232 = vmatprep.subr.mxu0 0.0
        %2233 = vmatpush2.msra.mxu0 0.0
        %2234 = vmatprep.subr.mxu0 0.0
        %2235 = vmatpush2.msra.mxu0 0.0
        %2236 = vmatprep.subr.mxu0 0.0
        %2237 = vmatpush2.msra.mxu0 0.0
        %2238 = vmatprep.subr.mxu0 0.0
        %2239 = vmatpush2.msra.mxu0 0.0
        %2240 = vmatprep.subr.mxu0 0.0
        %2241 = vmatpush2.msra.mxu0 0.0
        %2242 = vmatprep.subr.mxu0 0.0
        %2243 = vmatpush2.msra.mxu0 0.0
        %2244 = vmatprep.subr.mxu0 0.0
        %2245 = vmatpush2.msra.mxu0 0.0
        %2246 = vmatprep.subr.mxu0 0.0
        %2247 = vmatpush2.msra.mxu0 0.0
        %2248 = vmatprep.subr.mxu0 0.0
        %2249 = vmatpush2.msra.mxu0 0.0
        %2250 = vmatprep.subr.mxu0 0.0
        %2251 = vmatpush2.msra.mxu0 0.0
        %2252 = vmatprep.subr.mxu0 0.0
        %2253 = vmatpush2.msra.mxu0 0.0
        %2254 = vmatprep.subr.mxu0 0.0
        %2255 = vmatpush2.msra.mxu0 0.0
        %2256 = vmatprep.subr.mxu0 0.0
        %2257 = vmatpush2.msra.mxu0 0.0
        %2258 = vmatprep.subr.mxu0 0.0
        %2259 = vmatpush2.msra.mxu0 0.0
        %2260 = vmatprep.subr.mxu0 0.0
        %2261 = vmatpush2.msra.mxu0 0.0
        %2262 = vmatprep.mubr.f32.mxu0 0.0
        %2263 = vmatmul.mubr.f32.gmra.mxu0 %v278
        %v2264 = vpop.f32.mrf.mxu0
        %v2265 = vadd.f32 0.0, %v2264
        %v2266 = vpop.f32.mrf.mxu0
        %2267 = vmatprep.mubr.f32.mxu0 0.0
        %2268 = vmatmul.mubr.f32.gmra.mxu0 %v281
        %v2269 = vpop.f32.mrf.mxu0
        %v2270 = vadd.f32 0.0, %v2269
        %v2271 = vpop.f32.mrf.mxu0
        %2272 = vmatprep.mubr.f32.mxu0 0.0
        %2273 = vmatmul.mubr.f32.gmra.mxu0 %v284
        %v2274 = vpop.f32.mrf.mxu0
        %v2275 = vadd.f32 0.0, %v2274
        %v2276 = vpop.f32.mrf.mxu0
        %2277 = vmatprep.mubr.f32.mxu0 0.0
        %2278 = vmatmul.mubr.f32.gmra.mxu0 %v287
        %v2279 = vpop.f32.mrf.mxu0
        %v2280 = vadd.f32 0.0, %v2279
        %v2281 = vpop.f32.mrf.mxu0
        %2282 = vmatprep.mubr.f32.mxu0 0.0
        %2283 = vmatmul.mubr.f32.gmra.mxu0 %v290
        %v2284 = vpop.f32.mrf.mxu0
        %v2285 = vadd.f32 0.0, %v2284
        %v2286 = vpop.f32.mrf.mxu0
        %2287 = vmatprep.mubr.f32.mxu0 0.0
        %2288 = vmatmul.mubr.f32.gmra.mxu0 %v293
        %v2289 = vpop.f32.mrf.mxu0
        %v2290 = vadd.f32 0.0, %v2289
        %v2291 = vpop.f32.mrf.mxu0
        %2292 = vmatprep.mubr.f32.mxu0 0.0
        %2293 = vmatmul.mubr.f32.gmra.mxu0 %v296
        %v2294 = vpop.f32.mrf.mxu0
        %v2295 = vadd.f32 0.0, %v2294
        %v2296 = vpop.f32.mrf.mxu0
        %2297 = vmatprep.mubr.f32.mxu0 0.0
        %2298 = vmatmul.mubr.f32.gmra.mxu0 %v299
        %v2299 = vpop.f32.mrf.mxu0
        %v2300 = vadd.f32 0.0, %v2299
        %v2301 = vpop.f32.mrf.mxu0
        %2302 = vdwg.mxu0
        %v2303 = vld [vmem:[%s4 + $0x170] sm:$0xff]
        %v2304 = vld [vmem:[%s4 + $0x178] sm:$0xff]
        %v2305 = vld [vmem:[%s4 + $0x180] sm:$0xff]
        %v2306 = vld [vmem:[%s4 + $0x188] sm:$0xff]
        %v2308 = vsel %vm410, %v2265, 0
        %v2311 = vsel %vm410, %v2270, 0
        %v2314 = vsel %vm410, %v2275, 0
        %v2317 = vsel %vm410, %v2280, 0
        %v2320 = vsel %vm410, %v2285, 0
        %v2323 = vsel %vm410, %v2290, 0
        %v2326 = vsel %vm410, %v2295, 0
        %v2329 = vsel %vm410, %v2300, 0
        %2331 = vmatprep.subr.mxu0 0.0
        %2332 = vmatpush1.msra.mxu0 0.0
        %2333 = vmatprep.subr.mxu0 0.0
        %2334 = vmatpush1.msra.mxu0 0.0
        %2335 = vmatprep.subr.mxu0 0.0
        %2336 = vmatpush1.msra.mxu0 0.0
        %2337 = vmatprep.subr.mxu0 0.0
        %2338 = vmatpush1.msra.mxu0 0.0
        %2339 = vmatprep.subr.mxu0 0.0
        %2340 = vmatpush1.msra.mxu0 0.0
        %2341 = vmatprep.subr.mxu0 0.0
        %2342 = vmatpush1.msra.mxu0 0.0
        %2343 = vmatprep.subr.mxu0 0.0
        %2344 = vmatpush1.msra.mxu0 0.0
        %2345 = vmatprep.subr.mxu0 0.0
        %2346 = vmatpush1.msra.mxu0 0.0
        %2347 = vmatprep.subr.mxu0 0.0
        %2348 = vmatpush1.msra.mxu0 0.0
        %2349 = vmatprep.subr.mxu0 0.0
        %2350 = vmatpush1.msra.mxu0 0.0
        %2351 = vmatprep.subr.mxu0 0.0
        %2352 = vmatpush1.msra.mxu0 0.0
        %2353 = vmatprep.subr.mxu0 0.0
        %2354 = vmatpush1.msra.mxu0 0.0
        %2355 = vmatprep.subr.mxu0 0.0
        %2356 = vmatpush1.msra.mxu0 %v2306
        %2357 = vmatprep.subr.mxu0 0.0
        %2358 = vmatpush1.msra.mxu0 %v2305
        %2359 = vmatprep.subr.mxu0 0.0
        %2360 = vmatpush1.msra.mxu0 %v2304
        %2361 = vmatprep.subr.mxu0 0.0
        %2362 = vmatpush1.msra.mxu0 %v2303
        %2363 = vmatprep.subr.mxu0 0.0
        %2364 = vmatpush2.msra.mxu0 0.0
        %2365 = vmatprep.subr.mxu0 0.0
        %2366 = vmatpush2.msra.mxu0 0.0
        %2367 = vmatprep.subr.mxu0 0.0
        %2368 = vmatpush2.msra.mxu0 0.0
        %2369 = vmatprep.subr.mxu0 0.0
        %2370 = vmatpush2.msra.mxu0 0.0
        %2371 = vmatprep.subr.mxu0 0.0
        %2372 = vmatpush2.msra.mxu0 0.0
        %2373 = vmatprep.subr.mxu0 0.0
        %2374 = vmatpush2.msra.mxu0 0.0
        %2375 = vmatprep.subr.mxu0 0.0
        %2376 = vmatpush2.msra.mxu0 0.0
        %2377 = vmatprep.subr.mxu0 0.0
        %2378 = vmatpush2.msra.mxu0 0.0
        %2379 = vmatprep.subr.mxu0 0.0
        %2380 = vmatpush2.msra.mxu0 0.0
        %2381 = vmatprep.subr.mxu0 0.0
        %2382 = vmatpush2.msra.mxu0 0.0
        %2383 = vmatprep.subr.mxu0 0.0
        %2384 = vmatpush2.msra.mxu0 0.0
        %2385 = vmatprep.subr.mxu0 0.0
        %2386 = vmatpush2.msra.mxu0 0.0
        %2387 = vmatprep.subr.mxu0 0.0
        %2388 = vmatpush2.msra.mxu0 0.0
        %2389 = vmatprep.subr.mxu0 0.0
        %2390 = vmatpush2.msra.mxu0 0.0
        %2391 = vmatprep.subr.mxu0 0.0
        %2392 = vmatpush2.msra.mxu0 0.0
        %2393 = vmatprep.subr.mxu0 0.0
        %2394 = vmatpush2.msra.mxu0 0.0
        %2395 = vmatprep.mubr.f32.mxu0 0.0
        %2396 = vmatmul.mubr.f32.gmra.mxu0 %v2308
        %v2397 = vpop.f32.mrf.mxu0
        %v2398 = vadd.f32 0.0, %v2397
        %v2399 = vpop.f32.mrf.mxu0
        %2400 = vmatprep.mubr.f32.mxu0 0.0
        %2401 = vmatmul.mubr.f32.gmra.mxu0 %v2311
        %v2402 = vpop.f32.mrf.mxu0
        %v2403 = vadd.f32 0.0, %v2402
        %v2404 = vpop.f32.mrf.mxu0
        %2405 = vmatprep.mubr.f32.mxu0 0.0
        %2406 = vmatmul.mubr.f32.gmra.mxu0 %v2314
        %v2407 = vpop.f32.mrf.mxu0
        %v2408 = vadd.f32 0.0, %v2407
        %v2409 = vpop.f32.mrf.mxu0
        %2410 = vmatprep.mubr.f32.mxu0 0.0
        %2411 = vmatmul.mubr.f32.gmra.mxu0 %v2317
        %v2412 = vpop.f32.mrf.mxu0
        %v2413 = vadd.f32 0.0, %v2412
        %v2414 = vpop.f32.mrf.mxu0
        %2415 = vmatprep.mubr.f32.mxu0 0.0
        %2416 = vmatmul.mubr.f32.gmra.mxu0 %v2320
        %v2417 = vpop.f32.mrf.mxu0
        %v2418 = vadd.f32 0.0, %v2417
        %v2419 = vpop.f32.mrf.mxu0
        %2420 = vmatprep.mubr.f32.mxu0 0.0
        %2421 = vmatmul.mubr.f32.gmra.mxu0 %v2323
        %v2422 = vpop.f32.mrf.mxu0
        %v2423 = vadd.f32 0.0, %v2422
        %v2424 = vpop.f32.mrf.mxu0
        %2425 = vmatprep.mubr.f32.mxu0 0.0
        %2426 = vmatmul.mubr.f32.gmra.mxu0 %v2326
        %v2427 = vpop.f32.mrf.mxu0
        %v2428 = vadd.f32 0.0, %v2427
        %v2429 = vpop.f32.mrf.mxu0
        %2430 = vmatprep.mubr.f32.mxu0 0.0
        %2431 = vmatmul.mubr.f32.gmra.mxu0 %v2329
        %v2432 = vpop.f32.mrf.mxu0
        %v2433 = vadd.f32 0.0, %v2432
        %v2434 = vpop.f32.mrf.mxu0
        %2435 = vdwg.mxu0
        %v2436 = vadd.f32 %v2160, %v2398
        %v2437 = vadd.f32 %v2165, %v2403
        %v2438 = vadd.f32 %v2170, %v2408
        %v2439 = vadd.f32 %v2175, %v2413
        %v2440 = vadd.f32 %v2180, %v2418
        %v2441 = vadd.f32 %v2185, %v2423
        %v2442 = vadd.f32 %v2190, %v2428
        %v2443 = vadd.f32 %v2195, %v2433
        %v2444 = vld [vmem:[%s4 + $0x250] sm:$0x1]
        %v2445 = vlaneseq
        %v2446 = vshrl.u32 %v2445, 7
        %v2447 = vsub.s32 0, %v2446
        %v2448 = vrot.slane %v2444, %v2447
        %v2449 = vadd.f32 %v2436, %v2448
        %v2450 = vadd.f32 %v2437, %v2448
        %v2451 = vadd.f32 %v2438, %v2448
        %v2452 = vadd.f32 %v2439, %v2448
        %v2453 = vadd.f32 %v2440, %v2448
        %v2454 = vadd.f32 %v2441, %v2448
        %v2455 = vadd.f32 %v2442, %v2448
        %v2456 = vadd.f32 %v2443, %v2448
        %v2457 = vld [vmem:[%s3 + $0x40] sm:$0xff]
        %v2458 = vld [vmem:[%s3 + $0x48] sm:$0xff]
        %v2459 = vld [vmem:[%s3 + $0x50] sm:$0xff]
        %v2460 = vld [vmem:[%s3 + $0x58] sm:$0xff]
        %v2461 = vld [vmem:[%s3 + $0x60] sm:$0xff]
        %v2462 = vld [vmem:[%s3 + $0x68] sm:$0xff]
        %v2463 = vld [vmem:[%s3 + $0x70] sm:$0xff]
        %v2464 = vld [vmem:[%s3 + $0x78] sm:$0xff]
        %v2466 = vsel %vm276, %v2457, 0
        %v2469 = vsel %vm276, %v2458, 0
        %v2472 = vsel %vm276, %v2459, 0
        %v2475 = vsel %vm276, %v2460, 0
        %v2478 = vsel %vm276, %v2461, 0
        %v2481 = vsel %vm276, %v2462, 0
        %v2484 = vsel %vm276, %v2463, 0
        %v2487 = vsel %vm276, %v2464, 0
        %2489 = vmatprep.subr.mxu0 0.0
        %2490 = vmatpush1.msra.mxu0 0.0
        %2491 = vmatprep.subr.mxu0 0.0
        %2492 = vmatpush1.msra.mxu0 0.0
        %2493 = vmatprep.subr.mxu0 0.0
        %2494 = vmatpush1.msra.mxu0 0.0
        %2495 = vmatprep.subr.mxu0 0.0
        %2496 = vmatpush1.msra.mxu0 0.0
        %2497 = vmatprep.subr.mxu0 0.0
        %2498 = vmatpush1.msra.mxu0 0.0
        %2499 = vmatprep.subr.mxu0 0.0
        %2500 = vmatpush1.msra.mxu0 0.0
        %2501 = vmatprep.subr.mxu0 0.0
        %2502 = vmatpush1.msra.mxu0 0.0
        %2503 = vmatprep.subr.mxu0 0.0
        %2504 = vmatpush1.msra.mxu0 0.0
        %2505 = vmatprep.subr.mxu0 0.0
        %2506 = vmatpush1.msra.mxu0 %v1818
        %2507 = vmatprep.subr.mxu0 0.0
        %2508 = vmatpush1.msra.mxu0 %v1817
        %2509 = vmatprep.subr.mxu0 0.0
        %2510 = vmatpush1.msra.mxu0 %v1816
        %2511 = vmatprep.subr.mxu0 0.0
        %2512 = vmatpush1.msra.mxu0 %v1815
        %2513 = vmatprep.subr.mxu0 0.0
        %2514 = vmatpush1.msra.mxu0 %v1814
        %2515 = vmatprep.subr.mxu0 0.0
        %2516 = vmatpush1.msra.mxu0 %v1813
        %2517 = vmatprep.subr.mxu0 0.0
        %2518 = vmatpush1.msra.mxu0 %v1812
        %2519 = vmatprep.subr.mxu0 0.0
        %2520 = vmatpush1.msra.mxu0 %v1811
        %2521 = vmatprep.subr.mxu0 0.0
        %2522 = vmatpush2.msra.mxu0 0.0
        %2523 = vmatprep.subr.mxu0 0.0
        %2524 = vmatpush2.msra.mxu0 0.0
        %2525 = vmatprep.subr.mxu0 0.0
        %2526 = vmatpush2.msra.mxu0 0.0
        %2527 = vmatprep.subr.mxu0 0.0
        %2528 = vmatpush2.msra.mxu0 0.0
        %2529 = vmatprep.subr.mxu0 0.0
        %2530 = vmatpush2.msra.mxu0 0.0
        %2531 = vmatprep.subr.mxu0 0.0
        %2532 = vmatpush2.msra.mxu0 0.0
        %2533 = vmatprep.subr.mxu0 0.0
        %2534 = vmatpush2.msra.mxu0 0.0
        %2535 = vmatprep.subr.mxu0 0.0
        %2536 = vmatpush2.msra.mxu0 0.0
        %2537 = vmatprep.subr.mxu0 0.0
        %2538 = vmatpush2.msra.mxu0 0.0
        %2539 = vmatprep.subr.mxu0 0.0
        %2540 = vmatpush2.msra.mxu0 0.0
        %2541 = vmatprep.subr.mxu0 0.0
        %2542 = vmatpush2.msra.mxu0 0.0
        %2543 = vmatprep.subr.mxu0 0.0
        %2544 = vmatpush2.msra.mxu0 0.0
        %2545 = vmatprep.subr.mxu0 0.0
        %2546 = vmatpush2.msra.mxu0 0.0
        %2547 = vmatprep.subr.mxu0 0.0
        %2548 = vmatpush2.msra.mxu0 0.0
        %2549 = vmatprep.subr.mxu0 0.0
        %2550 = vmatpush2.msra.mxu0 0.0
        %2551 = vmatprep.subr.mxu0 0.0
        %2552 = vmatpush2.msra.mxu0 0.0
        %2553 = vmatprep.mubr.f32.mxu0 0.0
        %2554 = vmatmul.mubr.f32.gmra.mxu0 %v2466
        %v2555 = vpop.f32.mrf.mxu0
        %v2556 = vadd.f32 0.0, %v2555
        %v2557 = vpop.f32.mrf.mxu0
        %2558 = vmatprep.mubr.f32.mxu0 0.0
        %2559 = vmatmul.mubr.f32.gmra.mxu0 %v2469
        %v2560 = vpop.f32.mrf.mxu0
        %v2561 = vadd.f32 0.0, %v2560
        %v2562 = vpop.f32.mrf.mxu0
        %2563 = vmatprep.mubr.f32.mxu0 0.0
        %2564 = vmatmul.mubr.f32.gmra.mxu0 %v2472
        %v2565 = vpop.f32.mrf.mxu0
        %v2566 = vadd.f32 0.0, %v2565
        %v2567 = vpop.f32.mrf.mxu0
        %2568 = vmatprep.mubr.f32.mxu0 0.0
        %2569 = vmatmul.mubr.f32.gmra.mxu0 %v2475
        %v2570 = vpop.f32.mrf.mxu0
        %v2571 = vadd.f32 0.0, %v2570
        %v2572 = vpop.f32.mrf.mxu0
        %2573 = vmatprep.mubr.f32.mxu0 0.0
        %2574 = vmatmul.mubr.f32.gmra.mxu0 %v2478
        %v2575 = vpop.f32.mrf.mxu0
        %v2576 = vadd.f32 0.0, %v2575
        %v2577 = vpop.f32.mrf.mxu0
        %2578 = vmatprep.mubr.f32.mxu0 0.0
        %2579 = vmatmul.mubr.f32.gmra.mxu0 %v2481
        %v2580 = vpop.f32.mrf.mxu0
        %v2581 = vadd.f32 0.0, %v2580
        %v2582 = vpop.f32.mrf.mxu0
        %2583 = vmatprep.mubr.f32.mxu0 0.0
        %2584 = vmatmul.mubr.f32.gmra.mxu0 %v2484
        %v2585 = vpop.f32.mrf.mxu0
        %v2586 = vadd.f32 0.0, %v2585
        %v2587 = vpop.f32.mrf.mxu0
        %2588 = vmatprep.mubr.f32.mxu0 0.0
        %2589 = vmatmul.mubr.f32.gmra.mxu0 %v2487
        %v2590 = vpop.f32.mrf.mxu0
        %v2591 = vadd.f32 0.0, %v2590
        %v2592 = vpop.f32.mrf.mxu0
        %2593 = vdwg.mxu0
        %2594 = vmatprep.subr.mxu0 0.0
        %2595 = vmatpush1.msra.mxu0 0.0
        %2596 = vmatprep.subr.mxu0 0.0
        %2597 = vmatpush1.msra.mxu0 0.0
        %2598 = vmatprep.subr.mxu0 0.0
        %2599 = vmatpush1.msra.mxu0 0.0
        %2600 = vmatprep.subr.mxu0 0.0
        %2601 = vmatpush1.msra.mxu0 0.0
        %2602 = vmatprep.subr.mxu0 0.0
        %2603 = vmatpush1.msra.mxu0 0.0
        %2604 = vmatprep.subr.mxu0 0.0
        %2605 = vmatpush1.msra.mxu0 0.0
        %2606 = vmatprep.subr.mxu0 0.0
        %2607 = vmatpush1.msra.mxu0 0.0
        %2608 = vmatprep.subr.mxu0 0.0
        %2609 = vmatpush1.msra.mxu0 0.0
        %2610 = vmatprep.subr.mxu0 0.0
        %2611 = vmatpush1.msra.mxu0 %v263
        %2612 = vmatprep.subr.mxu0 0.0
        %2613 = vmatpush1.msra.mxu0 %v262
        %2614 = vmatprep.subr.mxu0 0.0
        %2615 = vmatpush1.msra.mxu0 %v261
        %2616 = vmatprep.subr.mxu0 0.0
        %2617 = vmatpush1.msra.mxu0 %v260
        %2618 = vmatprep.subr.mxu0 0.0
        %2619 = vmatpush1.msra.mxu0 %v259
        %2620 = vmatprep.subr.mxu0 0.0
        %2621 = vmatpush1.msra.mxu0 %v258
        %2622 = vmatprep.subr.mxu0 0.0
        %2623 = vmatpush1.msra.mxu0 %v257
        %2624 = vmatprep.subr.mxu0 0.0
        %2625 = vmatpush1.msra.mxu0 %v256
        %2626 = vmatprep.subr.mxu0 0.0
        %2627 = vmatpush2.msra.mxu0 0.0
        %2628 = vmatprep.subr.mxu0 0.0
        %2629 = vmatpush2.msra.mxu0 0.0
        %2630 = vmatprep.subr.mxu0 0.0
        %2631 = vmatpush2.msra.mxu0 0.0
        %2632 = vmatprep.subr.mxu0 0.0
        %2633 = vmatpush2.msra.mxu0 0.0
        %2634 = vmatprep.subr.mxu0 0.0
        %2635 = vmatpush2.msra.mxu0 0.0
        %2636 = vmatprep.subr.mxu0 0.0
        %2637 = vmatpush2.msra.mxu0 0.0
        %2638 = vmatprep.subr.mxu0 0.0
        %2639 = vmatpush2.msra.mxu0 0.0
        %2640 = vmatprep.subr.mxu0 0.0
        %2641 = vmatpush2.msra.mxu0 0.0
        %2642 = vmatprep.subr.mxu0 0.0
        %2643 = vmatpush2.msra.mxu0 0.0
        %2644 = vmatprep.subr.mxu0 0.0
        %2645 = vmatpush2.msra.mxu0 0.0
        %2646 = vmatprep.subr.mxu0 0.0
        %2647 = vmatpush2.msra.mxu0 0.0
        %2648 = vmatprep.subr.mxu0 0.0
        %2649 = vmatpush2.msra.mxu0 0.0
        %2650 = vmatprep.subr.mxu0 0.0
        %2651 = vmatpush2.msra.mxu0 0.0
        %2652 = vmatprep.subr.mxu0 0.0
        %2653 = vmatpush2.msra.mxu0 0.0
        %2654 = vmatprep.subr.mxu0 0.0
        %2655 = vmatpush2.msra.mxu0 0.0
        %2656 = vmatprep.subr.mxu0 0.0
        %2657 = vmatpush2.msra.mxu0 0.0
        %2658 = vmatprep.mubr.f32.mxu0 0.0
        %2659 = vmatmul.mubr.f32.gmra.mxu0 %v2466
        %v2660 = vpop.f32.mrf.mxu0
        %v2661 = vadd.f32 0.0, %v2660
        %v2662 = vpop.f32.mrf.mxu0
        %2663 = vmatprep.mubr.f32.mxu0 0.0
        %2664 = vmatmul.mubr.f32.gmra.mxu0 %v2469
        %v2665 = vpop.f32.mrf.mxu0
        %v2666 = vadd.f32 0.0, %v2665
        %v2667 = vpop.f32.mrf.mxu0
        %2668 = vmatprep.mubr.f32.mxu0 0.0
        %2669 = vmatmul.mubr.f32.gmra.mxu0 %v2472
        %v2670 = vpop.f32.mrf.mxu0
        %v2671 = vadd.f32 0.0, %v2670
        %v2672 = vpop.f32.mrf.mxu0
        %2673 = vmatprep.mubr.f32.mxu0 0.0
        %2674 = vmatmul.mubr.f32.gmra.mxu0 %v2475
        %v2675 = vpop.f32.mrf.mxu0
        %v2676 = vadd.f32 0.0, %v2675
        %v2677 = vpop.f32.mrf.mxu0
        %2678 = vmatprep.mubr.f32.mxu0 0.0
        %2679 = vmatmul.mubr.f32.gmra.mxu0 %v2478
        %v2680 = vpop.f32.mrf.mxu0
        %v2681 = vadd.f32 0.0, %v2680
        %v2682 = vpop.f32.mrf.mxu0
        %2683 = vmatprep.mubr.f32.mxu0 0.0
        %2684 = vmatmul.mubr.f32.gmra.mxu0 %v2481
        %v2685 = vpop.f32.mrf.mxu0
        %v2686 = vadd.f32 0.0, %v2685
        %v2687 = vpop.f32.mrf.mxu0
        %2688 = vmatprep.mubr.f32.mxu0 0.0
        %2689 = vmatmul.mubr.f32.gmra.mxu0 %v2484
        %v2690 = vpop.f32.mrf.mxu0
        %v2691 = vadd.f32 0.0, %v2690
        %v2692 = vpop.f32.mrf.mxu0
        %2693 = vmatprep.mubr.f32.mxu0 0.0
        %2694 = vmatmul.mubr.f32.gmra.mxu0 %v2487
        %v2695 = vpop.f32.mrf.mxu0
        %v2696 = vadd.f32 0.0, %v2695
        %v2697 = vpop.f32.mrf.mxu0
        %2698 = vdwg.mxu0
        %v2699 = vld [vmem:[%s4 + $0x190] sm:$0xff]
        %v2700 = vld [vmem:[%s4 + $0x198] sm:$0xff]
        %v2701 = vld [vmem:[%s4 + $0x1a0] sm:$0xff]
        %v2702 = vld [vmem:[%s4 + $0x1a8] sm:$0xff]
        %v2703 = vld [vmem:[%s4 + $0x1b0] sm:$0xff]
        %v2704 = vld [vmem:[%s4 + $0x1b8] sm:$0xff]
        %v2705 = vld [vmem:[%s4 + $0x1c0] sm:$0xff]
        %v2706 = vld [vmem:[%s4 + $0x1c8] sm:$0xff]
        %v2708 = vsel %vm410, %v2661, 0
        %v2711 = vsel %vm410, %v2666, 0
        %v2714 = vsel %vm410, %v2671, 0
        %v2717 = vsel %vm410, %v2676, 0
        %v2720 = vsel %vm410, %v2681, 0
        %v2723 = vsel %vm410, %v2686, 0
        %v2726 = vsel %vm410, %v2691, 0
        %v2729 = vsel %vm410, %v2696, 0
        %2731 = vmatprep.subr.mxu0 0.0
        %2732 = vmatpush1.msra.mxu0 0.0
        %2733 = vmatprep.subr.mxu0 0.0
        %2734 = vmatpush1.msra.mxu0 0.0
        %2735 = vmatprep.subr.mxu0 0.0
        %2736 = vmatpush1.msra.mxu0 0.0
        %2737 = vmatprep.subr.mxu0 0.0
        %2738 = vmatpush1.msra.mxu0 0.0
        %2739 = vmatprep.subr.mxu0 0.0
        %2740 = vmatpush1.msra.mxu0 0.0
        %2741 = vmatprep.subr.mxu0 0.0
        %2742 = vmatpush1.msra.mxu0 0.0
        %2743 = vmatprep.subr.mxu0 0.0
        %2744 = vmatpush1.msra.mxu0 0.0
        %2745 = vmatprep.subr.mxu0 0.0
        %2746 = vmatpush1.msra.mxu0 0.0
        %2747 = vmatprep.subr.mxu0 0.0
        %2748 = vmatpush1.msra.mxu0 0.0
        %2749 = vmatprep.subr.mxu0 0.0
        %2750 = vmatpush1.msra.mxu0 0.0
        %2751 = vmatprep.subr.mxu0 0.0
        %2752 = vmatpush1.msra.mxu0 0.0
        %2753 = vmatprep.subr.mxu0 0.0
        %2754 = vmatpush1.msra.mxu0 0.0
        %2755 = vmatprep.subr.mxu0 0.0
        %2756 = vmatpush1.msra.mxu0 %v2706
        %2757 = vmatprep.subr.mxu0 0.0
        %2758 = vmatpush1.msra.mxu0 %v2705
        %2759 = vmatprep.subr.mxu0 0.0
        %2760 = vmatpush1.msra.mxu0 %v2704
        %2761 = vmatprep.subr.mxu0 0.0
        %2762 = vmatpush1.msra.mxu0 %v2703
        %2763 = vmatprep.subr.mxu0 0.0
        %2764 = vmatpush2.msra.mxu0 0.0
        %2765 = vmatprep.subr.mxu0 0.0
        %2766 = vmatpush2.msra.mxu0 0.0
        %2767 = vmatprep.subr.mxu0 0.0
        %2768 = vmatpush2.msra.mxu0 0.0
        %2769 = vmatprep.subr.mxu0 0.0
        %2770 = vmatpush2.msra.mxu0 0.0
        %2771 = vmatprep.subr.mxu0 0.0
        %2772 = vmatpush2.msra.mxu0 0.0
        %2773 = vmatprep.subr.mxu0 0.0
        %2774 = vmatpush2.msra.mxu0 0.0
        %2775 = vmatprep.subr.mxu0 0.0
        %2776 = vmatpush2.msra.mxu0 0.0
        %2777 = vmatprep.subr.mxu0 0.0
        %2778 = vmatpush2.msra.mxu0 0.0
        %2779 = vmatprep.subr.mxu0 0.0
        %2780 = vmatpush2.msra.mxu0 0.0
        %2781 = vmatprep.subr.mxu0 0.0
        %2782 = vmatpush2.msra.mxu0 0.0
        %2783 = vmatprep.subr.mxu0 0.0
        %2784 = vmatpush2.msra.mxu0 0.0
        %2785 = vmatprep.subr.mxu0 0.0
        %2786 = vmatpush2.msra.mxu0 0.0
        %2787 = vmatprep.subr.mxu0 0.0
        %2788 = vmatpush2.msra.mxu0 0.0
        %2789 = vmatprep.subr.mxu0 0.0
        %2790 = vmatpush2.msra.mxu0 0.0
        %2791 = vmatprep.subr.mxu0 0.0
        %2792 = vmatpush2.msra.mxu0 0.0
        %2793 = vmatprep.subr.mxu0 0.0
        %2794 = vmatpush2.msra.mxu0 0.0
        %2795 = vmatprep.mubr.f32.mxu0 0.0
        %2796 = vmatmul.mubr.f32.gmra.mxu0 %v2708
        %v2797 = vpop.f32.mrf.mxu0
        %v2798 = vadd.f32 0.0, %v2797
        %v2799 = vpop.f32.mrf.mxu0
        %2800 = vmatprep.mubr.f32.mxu0 0.0
        %2801 = vmatmul.mubr.f32.gmra.mxu0 %v2711
        %v2802 = vpop.f32.mrf.mxu0
        %v2803 = vadd.f32 0.0, %v2802
        %v2804 = vpop.f32.mrf.mxu0
        %2805 = vmatprep.mubr.f32.mxu0 0.0
        %2806 = vmatmul.mubr.f32.gmra.mxu0 %v2714
        %v2807 = vpop.f32.mrf.mxu0
        %v2808 = vadd.f32 0.0, %v2807
        %v2809 = vpop.f32.mrf.mxu0
        %2810 = vmatprep.mubr.f32.mxu0 0.0
        %2811 = vmatmul.mubr.f32.gmra.mxu0 %v2717
        %v2812 = vpop.f32.mrf.mxu0
        %v2813 = vadd.f32 0.0, %v2812
        %v2814 = vpop.f32.mrf.mxu0
        %2815 = vmatprep.mubr.f32.mxu0 0.0
        %2816 = vmatmul.mubr.f32.gmra.mxu0 %v2720
        %v2817 = vpop.f32.mrf.mxu0
        %v2818 = vadd.f32 0.0, %v2817
        %v2819 = vpop.f32.mrf.mxu0
        %2820 = vmatprep.mubr.f32.mxu0 0.0
        %2821 = vmatmul.mubr.f32.gmra.mxu0 %v2723
        %v2822 = vpop.f32.mrf.mxu0
        %v2823 = vadd.f32 0.0, %v2822
        %v2824 = vpop.f32.mrf.mxu0
        %2825 = vmatprep.mubr.f32.mxu0 0.0
        %2826 = vmatmul.mubr.f32.gmra.mxu0 %v2726
        %v2827 = vpop.f32.mrf.mxu0
        %v2828 = vadd.f32 0.0, %v2827
        %v2829 = vpop.f32.mrf.mxu0
        %2830 = vmatprep.mubr.f32.mxu0 0.0
        %2831 = vmatmul.mubr.f32.gmra.mxu0 %v2729
        %v2832 = vpop.f32.mrf.mxu0
        %v2833 = vadd.f32 0.0, %v2832
        %v2834 = vpop.f32.mrf.mxu0
        %2835 = vdwg.mxu0
        %v2837 = vsel %vm410, %v2556, 0
        %v2840 = vsel %vm410, %v2561, 0
        %v2843 = vsel %vm410, %v2566, 0
        %v2846 = vsel %vm410, %v2571, 0
        %v2849 = vsel %vm410, %v2576, 0
        %v2852 = vsel %vm410, %v2581, 0
        %v2855 = vsel %vm410, %v2586, 0
        %v2858 = vsel %vm410, %v2591, 0
        %2860 = vmatprep.subr.mxu0 0.0
        %2861 = vmatpush1.msra.mxu0 0.0
        %2862 = vmatprep.subr.mxu0 0.0
        %2863 = vmatpush1.msra.mxu0 0.0
        %2864 = vmatprep.subr.mxu0 0.0
        %2865 = vmatpush1.msra.mxu0 0.0
        %2866 = vmatprep.subr.mxu0 0.0
        %2867 = vmatpush1.msra.mxu0 0.0
        %2868 = vmatprep.subr.mxu0 0.0
        %2869 = vmatpush1.msra.mxu0 0.0
        %2870 = vmatprep.subr.mxu0 0.0
        %2871 = vmatpush1.msra.mxu0 0.0
        %2872 = vmatprep.subr.mxu0 0.0
        %2873 = vmatpush1.msra.mxu0 0.0
        %2874 = vmatprep.subr.mxu0 0.0
        %2875 = vmatpush1.msra.mxu0 0.0
        %2876 = vmatprep.subr.mxu0 0.0
        %2877 = vmatpush1.msra.mxu0 0.0
        %2878 = vmatprep.subr.mxu0 0.0
        %2879 = vmatpush1.msra.mxu0 0.0
        %2880 = vmatprep.subr.mxu0 0.0
        %2881 = vmatpush1.msra.mxu0 0.0
        %2882 = vmatprep.subr.mxu0 0.0
        %2883 = vmatpush1.msra.mxu0 0.0
        %2884 = vmatprep.subr.mxu0 0.0
        %2885 = vmatpush1.msra.mxu0 %v2702
        %2886 = vmatprep.subr.mxu0 0.0
        %2887 = vmatpush1.msra.mxu0 %v2701
        %2888 = vmatprep.subr.mxu0 0.0
        %2889 = vmatpush1.msra.mxu0 %v2700
        %2890 = vmatprep.subr.mxu0 0.0
        %2891 = vmatpush1.msra.mxu0 %v2699
        %2892 = vmatprep.subr.mxu0 0.0
        %2893 = vmatpush2.msra.mxu0 0.0
        %2894 = vmatprep.subr.mxu0 0.0
        %2895 = vmatpush2.msra.mxu0 0.0
        %2896 = vmatprep.subr.mxu0 0.0
        %2897 = vmatpush2.msra.mxu0 0.0
        %2898 = vmatprep.subr.mxu0 0.0
        %2899 = vmatpush2.msra.mxu0 0.0
        %2900 = vmatprep.subr.mxu0 0.0
        %2901 = vmatpush2.msra.mxu0 0.0
        %2902 = vmatprep.subr.mxu0 0.0
        %2903 = vmatpush2.msra.mxu0 0.0
        %2904 = vmatprep.subr.mxu0 0.0
        %2905 = vmatpush2.msra.mxu0 0.0
        %2906 = vmatprep.subr.mxu0 0.0
        %2907 = vmatpush2.msra.mxu0 0.0
        %2908 = vmatprep.subr.mxu0 0.0
        %2909 = vmatpush2.msra.mxu0 0.0
        %2910 = vmatprep.subr.mxu0 0.0
        %2911 = vmatpush2.msra.mxu0 0.0
        %2912 = vmatprep.subr.mxu0 0.0
        %2913 = vmatpush2.msra.mxu0 0.0
        %2914 = vmatprep.subr.mxu0 0.0
        %2915 = vmatpush2.msra.mxu0 0.0
        %2916 = vmatprep.subr.mxu0 0.0
        %2917 = vmatpush2.msra.mxu0 0.0
        %2918 = vmatprep.subr.mxu0 0.0
        %2919 = vmatpush2.msra.mxu0 0.0
        %2920 = vmatprep.subr.mxu0 0.0
        %2921 = vmatpush2.msra.mxu0 0.0
        %2922 = vmatprep.subr.mxu0 0.0
        %2923 = vmatpush2.msra.mxu0 0.0
        %2924 = vmatprep.mubr.f32.mxu0 0.0
        %2925 = vmatmul.mubr.f32.gmra.mxu0 %v2837
        %v2926 = vpop.f32.mrf.mxu0
        %v2927 = vadd.f32 %v2798, %v2926
        %v2928 = vpop.f32.mrf.mxu0
        %2929 = vmatprep.mubr.f32.mxu0 0.0
        %2930 = vmatmul.mubr.f32.gmra.mxu0 %v2840
        %v2931 = vpop.f32.mrf.mxu0
        %v2932 = vadd.f32 %v2803, %v2931
        %v2933 = vpop.f32.mrf.mxu0
        %2934 = vmatprep.mubr.f32.mxu0 0.0
        %2935 = vmatmul.mubr.f32.gmra.mxu0 %v2843
        %v2936 = vpop.f32.mrf.mxu0
        %v2937 = vadd.f32 %v2808, %v2936
        %v2938 = vpop.f32.mrf.mxu0
        %2939 = vmatprep.mubr.f32.mxu0 0.0
        %2940 = vmatmul.mubr.f32.gmra.mxu0 %v2846
        %v2941 = vpop.f32.mrf.mxu0
        %v2942 = vadd.f32 %v2813, %v2941
        %v2943 = vpop.f32.mrf.mxu0
        %2944 = vmatprep.mubr.f32.mxu0 0.0
        %2945 = vmatmul.mubr.f32.gmra.mxu0 %v2849
        %v2946 = vpop.f32.mrf.mxu0
        %v2947 = vadd.f32 %v2818, %v2946
        %v2948 = vpop.f32.mrf.mxu0
        %2949 = vmatprep.mubr.f32.mxu0 0.0
        %2950 = vmatmul.mubr.f32.gmra.mxu0 %v2852
        %v2951 = vpop.f32.mrf.mxu0
        %v2952 = vadd.f32 %v2823, %v2951
        %v2953 = vpop.f32.mrf.mxu0
        %2954 = vmatprep.mubr.f32.mxu0 0.0
        %2955 = vmatmul.mubr.f32.gmra.mxu0 %v2855
        %v2956 = vpop.f32.mrf.mxu0
        %v2957 = vadd.f32 %v2828, %v2956
        %v2958 = vpop.f32.mrf.mxu0
        %2959 = vmatprep.mubr.f32.mxu0 0.0
        %2960 = vmatmul.mubr.f32.gmra.mxu0 %v2858
        %v2961 = vpop.f32.mrf.mxu0
        %v2962 = vadd.f32 %v2833, %v2961
        %v2963 = vpop.f32.mrf.mxu0
        %2964 = vdwg.mxu0
        %v2965 = vld [vmem:[%s4 + $0x210] sm:$0xff]
        %v2966 = vld [vmem:[%s4 + $0x218] sm:$0xff]
        %v2967 = vld [vmem:[%s4 + $0x220] sm:$0xff]
        %v2968 = vld [vmem:[%s4 + $0x228] sm:$0xff]
        %v2969 = vld [vmem:[%s4 + $0x230] sm:$0xff]
        %v2970 = vld [vmem:[%s4 + $0x238] sm:$0xff]
        %v2971 = vld [vmem:[%s4 + $0x240] sm:$0xff]
        %v2972 = vld [vmem:[%s4 + $0x248] sm:$0xff]
        %v2973 = vadd.f32 %v2927, %v2965
        %v2974 = vadd.f32 %v2932, %v2966
        %v2975 = vadd.f32 %v2937, %v2967
        %v2976 = vadd.f32 %v2942, %v2968
        %v2977 = vadd.f32 %v2947, %v2969
        %v2978 = vadd.f32 %v2952, %v2970
        %v2979 = vadd.f32 %v2957, %v2971
        %v2980 = vadd.f32 %v2962, %v2972
        %v2981 = vld [vmem:[%s4 + $0x1d0] sm:$0xff]
        %v2982 = vld [vmem:[%s4 + $0x1d8] sm:$0xff]
        %v2983 = vld [vmem:[%s4 + $0x1e0] sm:$0xff]
        %v2984 = vld [vmem:[%s4 + $0x1e8] sm:$0xff]
        %v2985 = vld [vmem:[%s4 + $0x1f0] sm:$0xff]
        %v2986 = vld [vmem:[%s4 + $0x1f8] sm:$0xff]
        %v2987 = vld [vmem:[%s4 + $0x200] sm:$0xff]
        %v2988 = vld [vmem:[%s4 + $0x208] sm:$0xff]
        %v2990 = vsel %vm410, %v2973, 0
        %v2993 = vsel %vm410, %v2974, 0
        %v2996 = vsel %vm410, %v2975, 0
        %v2999 = vsel %vm410, %v2976, 0
        %v3002 = vsel %vm410, %v2977, 0
        %v3005 = vsel %vm410, %v2978, 0
        %v3008 = vsel %vm410, %v2979, 0
        %v3011 = vsel %vm410, %v2980, 0
        %3013 = vmatprep.subr.mxu0 0.0
        %3014 = vmatpush1.msra.mxu0 0.0
        %3015 = vmatprep.subr.mxu0 0.0
        %3016 = vmatpush1.msra.mxu0 0.0
        %3017 = vmatprep.subr.mxu0 0.0
        %3018 = vmatpush1.msra.mxu0 0.0
        %3019 = vmatprep.subr.mxu0 0.0
        %3020 = vmatpush1.msra.mxu0 0.0
        %3021 = vmatprep.subr.mxu0 0.0
        %3022 = vmatpush1.msra.mxu0 0.0
        %3023 = vmatprep.subr.mxu0 0.0
        %3024 = vmatpush1.msra.mxu0 0.0
        %3025 = vmatprep.subr.mxu0 0.0
        %3026 = vmatpush1.msra.mxu0 0.0
        %3027 = vmatprep.subr.mxu0 0.0
        %3028 = vmatpush1.msra.mxu0 0.0
        %3029 = vmatprep.subr.mxu0 0.0
        %3030 = vmatpush1.msra.mxu0 0.0
        %3031 = vmatprep.subr.mxu0 0.0
        %3032 = vmatpush1.msra.mxu0 0.0
        %3033 = vmatprep.subr.mxu0 0.0
        %3034 = vmatpush1.msra.mxu0 0.0
        %3035 = vmatprep.subr.mxu0 0.0
        %3036 = vmatpush1.msra.mxu0 0.0
        %3037 = vmatprep.subr.mxu0 0.0
        %3038 = vmatpush1.msra.mxu0 %v2988
        %3039 = vmatprep.subr.mxu0 0.0
        %3040 = vmatpush1.msra.mxu0 %v2987
        %3041 = vmatprep.subr.mxu0 0.0
        %3042 = vmatpush1.msra.mxu0 %v2986
        %3043 = vmatprep.subr.mxu0 0.0
        %3044 = vmatpush1.msra.mxu0 %v2985
        %3045 = vmatprep.subr.mxu0 0.0
        %3046 = vmatpush2.msra.mxu0 0.0
        %3047 = vmatprep.subr.mxu0 0.0
        %3048 = vmatpush2.msra.mxu0 0.0
        %3049 = vmatprep.subr.mxu0 0.0
        %3050 = vmatpush2.msra.mxu0 0.0
        %3051 = vmatprep.subr.mxu0 0.0
        %3052 = vmatpush2.msra.mxu0 0.0
        %3053 = vmatprep.subr.mxu0 0.0
        %3054 = vmatpush2.msra.mxu0 0.0
        %3055 = vmatprep.subr.mxu0 0.0
        %3056 = vmatpush2.msra.mxu0 0.0
        %3057 = vmatprep.subr.mxu0 0.0
        %3058 = vmatpush2.msra.mxu0 0.0
        %3059 = vmatprep.subr.mxu0 0.0
        %3060 = vmatpush2.msra.mxu0 0.0
        %3061 = vmatprep.subr.mxu0 0.0
        %3062 = vmatpush2.msra.mxu0 0.0
        %3063 = vmatprep.subr.mxu0 0.0
        %3064 = vmatpush2.msra.mxu0 0.0
        %3065 = vmatprep.subr.mxu0 0.0
        %3066 = vmatpush2.msra.mxu0 0.0
        %3067 = vmatprep.subr.mxu0 0.0
        %3068 = vmatpush2.msra.mxu0 0.0
        %3069 = vmatprep.subr.mxu0 0.0
        %3070 = vmatpush2.msra.mxu0 0.0
        %3071 = vmatprep.subr.mxu0 0.0
        %3072 = vmatpush2.msra.mxu0 0.0
        %3073 = vmatprep.subr.mxu0 0.0
        %3074 = vmatpush2.msra.mxu0 0.0
        %3075 = vmatprep.subr.mxu0 0.0
        %3076 = vmatpush2.msra.mxu0 0.0
        %3077 = vmatprep.mubr.f32.mxu0 0.0
        %3078 = vmatmul.mubr.f32.gmra.mxu0 %v2990
        %v3079 = vpop.f32.mrf.mxu0
        %v3080 = vadd.f32 0.0, %v3079
        %v3081 = vpop.f32.mrf.mxu0
        %3082 = vmatprep.mubr.f32.mxu0 0.0
        %3083 = vmatmul.mubr.f32.gmra.mxu0 %v2993
        %v3084 = vpop.f32.mrf.mxu0
        %v3085 = vadd.f32 0.0, %v3084
        %v3086 = vpop.f32.mrf.mxu0
        %3087 = vmatprep.mubr.f32.mxu0 0.0
        %3088 = vmatmul.mubr.f32.gmra.mxu0 %v2996
        %v3089 = vpop.f32.mrf.mxu0
        %v3090 = vadd.f32 0.0, %v3089
        %v3091 = vpop.f32.mrf.mxu0
        %3092 = vmatprep.mubr.f32.mxu0 0.0
        %3093 = vmatmul.mubr.f32.gmra.mxu0 %v2999
        %v3094 = vpop.f32.mrf.mxu0
        %v3095 = vadd.f32 0.0, %v3094
        %v3096 = vpop.f32.mrf.mxu0
        %3097 = vmatprep.mubr.f32.mxu0 0.0
        %3098 = vmatmul.mubr.f32.gmra.mxu0 %v3002
        %v3099 = vpop.f32.mrf.mxu0
        %v3100 = vadd.f32 0.0, %v3099
        %v3101 = vpop.f32.mrf.mxu0
        %3102 = vmatprep.mubr.f32.mxu0 0.0
        %3103 = vmatmul.mubr.f32.gmra.mxu0 %v3005
        %v3104 = vpop.f32.mrf.mxu0
        %v3105 = vadd.f32 0.0, %v3104
        %v3106 = vpop.f32.mrf.mxu0
        %3107 = vmatprep.mubr.f32.mxu0 0.0
        %3108 = vmatmul.mubr.f32.gmra.mxu0 %v3008
        %v3109 = vpop.f32.mrf.mxu0
        %v3110 = vadd.f32 0.0, %v3109
        %v3111 = vpop.f32.mrf.mxu0
        %3112 = vmatprep.mubr.f32.mxu0 0.0
        %3113 = vmatmul.mubr.f32.gmra.mxu0 %v3011
        %v3114 = vpop.f32.mrf.mxu0
        %v3115 = vadd.f32 0.0, %v3114
        %v3116 = vpop.f32.mrf.mxu0
        %3117 = vdwg.mxu0
        %v3119 = vsel %vm410, %v2449, 0
        %v3122 = vsel %vm410, %v2450, 0
        %v3125 = vsel %vm410, %v2451, 0
        %v3128 = vsel %vm410, %v2452, 0
        %v3131 = vsel %vm410, %v2453, 0
        %v3134 = vsel %vm410, %v2454, 0
        %v3137 = vsel %vm410, %v2455, 0
        %v3140 = vsel %vm410, %v2456, 0
        %3142 = vmatprep.subr.mxu0 0.0
        %3143 = vmatpush1.msra.mxu0 0.0
        %3144 = vmatprep.subr.mxu0 0.0
        %3145 = vmatpush1.msra.mxu0 0.0
        %3146 = vmatprep.subr.mxu0 0.0
        %3147 = vmatpush1.msra.mxu0 0.0
        %3148 = vmatprep.subr.mxu0 0.0
        %3149 = vmatpush1.msra.mxu0 0.0
        %3150 = vmatprep.subr.mxu0 0.0
        %3151 = vmatpush1.msra.mxu0 0.0
        %3152 = vmatprep.subr.mxu0 0.0
        %3153 = vmatpush1.msra.mxu0 0.0
        %3154 = vmatprep.subr.mxu0 0.0
        %3155 = vmatpush1.msra.mxu0 0.0
        %3156 = vmatprep.subr.mxu0 0.0
        %3157 = vmatpush1.msra.mxu0 0.0
        %3158 = vmatprep.subr.mxu0 0.0
        %3159 = vmatpush1.msra.mxu0 0.0
        %3160 = vmatprep.subr.mxu0 0.0
        %3161 = vmatpush1.msra.mxu0 0.0
        %3162 = vmatprep.subr.mxu0 0.0
        %3163 = vmatpush1.msra.mxu0 0.0
        %3164 = vmatprep.subr.mxu0 0.0
        %3165 = vmatpush1.msra.mxu0 0.0
        %3166 = vmatprep.subr.mxu0 0.0
        %3167 = vmatpush1.msra.mxu0 %v2984
        %3168 = vmatprep.subr.mxu0 0.0
        %3169 = vmatpush1.msra.mxu0 %v2983
        %3170 = vmatprep.subr.mxu0 0.0
        %3171 = vmatpush1.msra.mxu0 %v2982
        %3172 = vmatprep.subr.mxu0 0.0
        %3173 = vmatpush1.msra.mxu0 %v2981
        %3174 = vmatprep.subr.mxu0 0.0
        %3175 = vmatpush2.msra.mxu0 0.0
        %3176 = vmatprep.subr.mxu0 0.0
        %3177 = vmatpush2.msra.mxu0 0.0
        %3178 = vmatprep.subr.mxu0 0.0
        %3179 = vmatpush2.msra.mxu0 0.0
        %3180 = vmatprep.subr.mxu0 0.0
        %3181 = vmatpush2.msra.mxu0 0.0
        %3182 = vmatprep.subr.mxu0 0.0
        %3183 = vmatpush2.msra.mxu0 0.0
        %3184 = vmatprep.subr.mxu0 0.0
        %3185 = vmatpush2.msra.mxu0 0.0
        %3186 = vmatprep.subr.mxu0 0.0
        %3187 = vmatpush2.msra.mxu0 0.0
        %3188 = vmatprep.subr.mxu0 0.0
        %3189 = vmatpush2.msra.mxu0 0.0
        %3190 = vmatprep.subr.mxu0 0.0
        %3191 = vmatpush2.msra.mxu0 0.0
        %3192 = vmatprep.subr.mxu0 0.0
        %3193 = vmatpush2.msra.mxu0 0.0
        %3194 = vmatprep.subr.mxu0 0.0
        %3195 = vmatpush2.msra.mxu0 0.0
        %3196 = vmatprep.subr.mxu0 0.0
        %3197 = vmatpush2.msra.mxu0 0.0
        %3198 = vmatprep.subr.mxu0 0.0
        %3199 = vmatpush2.msra.mxu0 0.0
        %3200 = vmatprep.subr.mxu0 0.0
        %3201 = vmatpush2.msra.mxu0 0.0
        %3202 = vmatprep.subr.mxu0 0.0
        %3203 = vmatpush2.msra.mxu0 0.0
        %3204 = vmatprep.subr.mxu0 0.0
        %3205 = vmatpush2.msra.mxu0 0.0
        %3206 = vmatprep.mubr.f32.mxu0 0.0
        %3207 = vmatmul.mubr.f32.gmra.mxu0 %v3119
        %v3208 = vpop.f32.mrf.mxu0
        %v3209 = vadd.f32 %v3080, %v3208
        %v3210 = vpop.f32.mrf.mxu0
        %3211 = vmatprep.mubr.f32.mxu0 0.0
        %3212 = vmatmul.mubr.f32.gmra.mxu0 %v3122
        %v3213 = vpop.f32.mrf.mxu0
        %v3214 = vadd.f32 %v3085, %v3213
        %v3215 = vpop.f32.mrf.mxu0
        %3216 = vmatprep.mubr.f32.mxu0 0.0
        %3217 = vmatmul.mubr.f32.gmra.mxu0 %v3125
        %v3218 = vpop.f32.mrf.mxu0
        %v3219 = vadd.f32 %v3090, %v3218
        %v3220 = vpop.f32.mrf.mxu0
        %3221 = vmatprep.mubr.f32.mxu0 0.0
        %3222 = vmatmul.mubr.f32.gmra.mxu0 %v3128
        %v3223 = vpop.f32.mrf.mxu0
        %v3224 = vadd.f32 %v3095, %v3223
        %v3225 = vpop.f32.mrf.mxu0
        %3226 = vmatprep.mubr.f32.mxu0 0.0
        %3227 = vmatmul.mubr.f32.gmra.mxu0 %v3131
        %v3228 = vpop.f32.mrf.mxu0
        %v3229 = vadd.f32 %v3100, %v3228
        %v3230 = vpop.f32.mrf.mxu0
        %3231 = vmatprep.mubr.f32.mxu0 0.0
        %3232 = vmatmul.mubr.f32.gmra.mxu0 %v3134
        %v3233 = vpop.f32.mrf.mxu0
        %v3234 = vadd.f32 %v3105, %v3233
        %v3235 = vpop.f32.mrf.mxu0
        %3236 = vmatprep.mubr.f32.mxu0 0.0
        %3237 = vmatmul.mubr.f32.gmra.mxu0 %v3137
        %v3238 = vpop.f32.mrf.mxu0
        %v3239 = vadd.f32 %v3110, %v3238
        %v3240 = vpop.f32.mrf.mxu0
        %3241 = vmatprep.mubr.f32.mxu0 0.0
        %3242 = vmatmul.mubr.f32.gmra.mxu0 %v3140
        %v3243 = vpop.f32.mrf.mxu0
        %v3244 = vadd.f32 %v3115, %v3243
        %v3245 = vpop.f32.mrf.mxu0
        %3246 = vdwg.mxu0
        %v3247 = vld [vmem:[%s4 + $0x258] sm:$0x1]
        %v3248 = vlaneseq
        %v3249 = vshrl.u32 %v3248, 7
        %v3250 = vsub.s32 0, %v3249
        %v3251 = vrot.slane %v3247, %v3250
        %v3252 = vadd.f32 %v3209, %v3251
        %v3253 = vadd.f32 %v3214, %v3251
        %v3254 = vadd.f32 %v3219, %v3251
        %v3255 = vadd.f32 %v3224, %v3251
        %v3256 = vadd.f32 %v3229, %v3251
        %v3257 = vadd.f32 %v3234, %v3251
        %v3258 = vadd.f32 %v3239, %v3251
        %v3259 = vadd.f32 %v3244, %v3251
        %v3260 = vxor.u32 %v3252, 2147483648
        %v3261 = vxor.u32 %v3253, 2147483648
        %v3262 = vxor.u32 %v3254, 2147483648
        %v3263 = vxor.u32 %v3255, 2147483648
        %v3264 = vxor.u32 %v3256, 2147483648
        %v3265 = vxor.u32 %v3257, 2147483648
        %v3266 = vxor.u32 %v3258, 2147483648
        %v3267 = vxor.u32 %v3259, 2147483648
        %v3268 = vmul.f32 %v3260, 1.442695
        %v3269 = vpow.pop %v3268
        %v3270 = vmul.f32 %v3261, 1.442695
        %v3271 = vpow.pop %v3270
        %v3272 = vmul.f32 %v3262, 1.442695
        %v3273 = vpow.pop %v3272
        %v3274 = vmul.f32 %v3263, 1.442695
        %v3275 = vpow.pop %v3274
        %v3276 = vmul.f32 %v3264, 1.442695
        %v3277 = vpow.pop %v3276
        %v3278 = vmul.f32 %v3265, 1.442695
        %v3279 = vpow.pop %v3278
        %v3280 = vmul.f32 %v3266, 1.442695
        %v3281 = vpow.pop %v3280
        %v3282 = vmul.f32 %v3267, 1.442695
        %v3283 = vpow.pop %v3282
        %v3284 = vadd.f32 %v3269, 1.0
        %v3285 = vadd.f32 %v3271, 1.0
        %v3286 = vadd.f32 %v3273, 1.0
        %v3287 = vadd.f32 %v3275, 1.0
        %v3288 = vadd.f32 %v3277, 1.0
        %v3289 = vadd.f32 %v3279, 1.0
        %v3290 = vadd.f32 %v3281, 1.0
        %v3291 = vadd.f32 %v3283, 1.0
        %v3292 = vrcp.pop %v3284
        %v3293 = vmul.f32 1.0, %v3292
        %v3294 = vrcp.pop %v3285
        %v3295 = vmul.f32 1.0, %v3294
        %v3296 = vrcp.pop %v3286
        %v3297 = vmul.f32 1.0, %v3296
        %v3298 = vrcp.pop %v3287
        %v3299 = vmul.f32 1.0, %v3298
        %v3300 = vrcp.pop %v3288
        %v3301 = vmul.f32 1.0, %v3300
        %v3302 = vrcp.pop %v3289
        %v3303 = vmul.f32 1.0, %v3302
        %v3304 = vrcp.pop %v3290
        %v3305 = vmul.f32 1.0, %v3304
        %v3306 = vrcp.pop %v3291
        %v3307 = vmul.f32 1.0, %v3306
        %v3308 = vmul.f32 %v3293, %v2449
        %v3309 = vmul.f32 %v3295, %v2450
        %v3310 = vmul.f32 %v3297, %v2451
        %v3311 = vmul.f32 %v3299, %v2452
        %v3312 = vmul.f32 %v3301, %v2453
        %v3313 = vmul.f32 %v3303, %v2454
        %v3314 = vmul.f32 %v3305, %v2455
        %v3315 = vmul.f32 %v3307, %v2456
        %v3316 = vsub.f32 1.0, %v3293
        %v3317 = vsub.f32 1.0, %v3295
        %v3318 = vsub.f32 1.0, %v3297
        %v3319 = vsub.f32 1.0, %v3299
        %v3320 = vsub.f32 1.0, %v3301
        %v3321 = vsub.f32 1.0, %v3303
        %v3322 = vsub.f32 1.0, %v3305
        %v3323 = vsub.f32 1.0, %v3307
        %v3324 = vmul.f32 %v3316, %v2973
        %v3325 = vmul.f32 %v3317, %v2974
        %v3326 = vmul.f32 %v3318, %v2975
        %v3327 = vmul.f32 %v3319, %v2976
        %v3328 = vmul.f32 %v3320, %v2977
        %v3329 = vmul.f32 %v3321, %v2978
        %v3330 = vmul.f32 %v3322, %v2979
        %v3331 = vmul.f32 %v3323, %v2980
        %v3332 = vadd.f32 %v3308, %v3324
        %v3333 = vadd.f32 %v3309, %v3325
        %v3334 = vadd.f32 %v3310, %v3326
        %v3335 = vadd.f32 %v3311, %v3327
        %v3336 = vadd.f32 %v3312, %v3328
        %v3337 = vadd.f32 %v3313, %v3329
        %v3338 = vadd.f32 %v3314, %v3330
        %v3339 = vadd.f32 %v3315, %v3331
        %v3340 = vadd.f32 %v3332, %v1811
        %v3341 = vadd.f32 %v3333, %v1812
        %v3342 = vadd.f32 %v3334, %v1813
        %v3343 = vadd.f32 %v3335, %v1814
        %v3344 = vadd.f32 %v3336, %v1815
        %v3345 = vadd.f32 %v3337, %v1816
        %v3346 = vadd.f32 %v3338, %v1817
        %v3347 = vadd.f32 %v3339, %v1818
        %v3348 = vadd.f32 %v1819, %v3340
        %v3349 = vadd.f32 %v1820, %v3341
        %v3350 = vadd.f32 %v1821, %v3342
        %v3351 = vadd.f32 %v1822, %v3343
        %v3352 = vadd.f32 %v1823, %v3344
        %v3353 = vadd.f32 %v1824, %v3345
        %v3354 = vadd.f32 %v1825, %v3346
        %v3355 = vadd.f32 %v1826, %v3347
        %3356 = vst.msk [vmem:[%s234] sm:$0xff] %vm410, %v3348
        %3357 = vst.msk [vmem:[%s234 + $0x8] sm:$0xff] %vm410, %v3349
        %3358 = vst.msk [vmem:[%s234 + $0x10] sm:$0xff] %vm410, %v3350
        %3359 = vst.msk [vmem:[%s234 + $0x18] sm:$0xff] %vm410, %v3351
        %3360 = vst.msk [vmem:[%s234 + $0x20] sm:$0xff] %vm410, %v3352
        %3361 = vst.msk [vmem:[%s234 + $0x28] sm:$0xff] %vm410, %v3353
        %3362 = vst.msk [vmem:[%s234 + $0x30] sm:$0xff] %vm410, %v3354
        %3363 = vst.msk [vmem:[%s234 + $0x38] sm:$0xff] %vm410, %v3355
        %s3364 = sand.u32 %s142, 1
        %s3365 = scalar_lea.sflag [#allocation3], %s3364
        %s3366 = sand.u32 %s142, 1
        %s3367 = smul.addr %s3366, 64
        %s3368 = scalar_lea.vmem [#allocation2], %s3367
        // Predicated region
        $region41: #{gcn_encoder_forward.1} parent=39 // pred_check
          %p3369 = pneg %p152
        $region42: #{gcn_encoder_forward.1} parent=39 // pred_check_branch
          %3371 = sbr.rel (%p3369) target = $region44
        $region43: #{gcn_encoder_forward.1} parent=39 // pred_region
          %s3372 = smul.u32 8, %s19
          %s3374 = ssub.s32 1024, 1024
          %3375 = vsyncadd %s3365, %s3374
          %s3376 = smul.addr %s3372, 128
          %s3377 = scalar_lea.hbm %s5, %s3376
          %s3378 = sshll.u32 %s3368, 4
          %s3379 = int_to_ptr.vmem [resolvable:$true] %s3378
          %3384 = dma.vmem_to_hbm [thread:$0]  %s3379, 1024, %s3377, %s3365, 128, 128, 8
        $region44: #{gcn_encoder_forward.1} parent=39 // pred_fallthru
          _
      $region40: #{gcn_encoder_forward.1} parent=5 // pred_fallthru
        _
      %p3385 = scmp.le.s32.totalorder 2, %s14
      // Predicated region
      $region45: #{gcn_encoder_forward.1} parent=5 // pred_check
        %p3386 = pneg %p3385
      $region46: #{gcn_encoder_forward.1} parent=5 // pred_check_branch
        %3388 = sbr.rel (%p3386) target = $region48
      $region47: #{gcn_encoder_forward.1} parent=5 // pred_region
        %s3389 = ssub.s32 %s14, 2
        // Predicated region
        $region49: #{gcn_encoder_forward.1} parent=47 // pred_check
          %p3390 = pneg %p158
        $region50: #{gcn_encoder_forward.1} parent=47 // pred_check_branch
          %3392 = sbr.rel (%p3390) target = $region52
        $region51: #{gcn_encoder_forward.1} parent=47 // pred_region
          %s3393 = sand.u32 %s143, 1
          %s3394 = scalar_lea.sflag [#allocation3], %s3393
          %s3395 = sand.u32 %s143, 1
          %s3396 = smul.addr %s3395, 64
          %s3397 = scalar_lea.vmem [#allocation2], %s3396
          %3398 = dma.done %s3394, 1024
        $region52: #{gcn_encoder_forward.1} parent=47 // pred_fallthru
          _
      $region48: #{gcn_encoder_forward.1} parent=5 // pred_fallthru
        _
    $region6: #{gcn_encoder_forward.1} parent=1 // loop_footer
      %s18 = sadd.s32 1, %s14
    $region7: #{gcn_encoder_forward.1} parent=1 // loop_footer_branch
      %13 = sbr.rel target = $region3
    $region8: #{gcn_encoder_forward.1} parent=1 // loop_exit
      _
    %3399 = vsyncpa [#allocation3], 1
    %s3400 = scalar_lea.sflag [#allocation3], 1
    %3401 = vsyncpa %s3400, 1

</llo_original>
